<compile_context>
chip_gen: v5e
topology: v5e:2x2
jax: 0.10.0
libtpu: 0.0.40
codegen_flags: <defaults>
</compile_context>

<pallas_src>
import jax
import jax.numpy as jnp
from jax.experimental import pallas as pl
from jax.experimental.pallas import tpu as pltpu

LRELU_SLOPE = 0.01  # nn.LeakyReLU() default negative_slope


def _write_reflect_pad(dst_ref, v):
    """Write v (H, W, C) into dst_ref (H+2, W+2, C) with 1-px reflection pad.

    Matches torch.nn.ReflectionPad2d(1) (requires H, W >= 2).  Every store is
    sourced from the value `v` (never from dst_ref), so there is no RAW on the
    scratch and the pad can overlap with the following matmuls.
    """
    H, W = v.shape[0], v.shape[1]
    # Interior rows.
    dst_ref[1:H + 1, 1:W + 1, :] = v
    dst_ref[1:H + 1, 0:1, :] = v[:, 1:2, :]
    dst_ref[1:H + 1, W + 1:W + 2, :] = v[:, W - 2:W - 1, :]
    # Top padded row (reflect interior row 1, corners included).
    dst_ref[0:1, 1:W + 1, :] = v[1:2, :, :]
    dst_ref[0:1, 0:1, :] = v[1:2, 1:2, :]
    dst_ref[0:1, W + 1:W + 2, :] = v[1:2, W - 2:W - 1, :]
    # Bottom padded row (reflect interior row H-2).
    dst_ref[H + 1:H + 2, 1:W + 1, :] = v[H - 2:H - 1, :, :]
    dst_ref[H + 1:H + 2, 0:1, :] = v[H - 2:H - 1, 1:2, :]
    dst_ref[H + 1:H + 2, W + 1:W + 2, :] = v[H - 2:H - 1, W - 2:W - 1, :]


def _localnet_kernel(x_ref, w1_ref, b1_ref, w2_ref, b2_ref, o_ref,
                     xp1_ref, xp2_ref):
    """Full LocalNet forward for one block of batch elements, all in VMEM.

    x_ref  : (NB, H, W, Cin)       f32 input tile
    w1_ref : (9*Cin, Cout)         bf16, rows ordered (dy, dx, cin)
    b1_ref : (1, Cout)             f32
    w2_ref : (3, Cout, 3*Cout)     bf16, [dy, cout, dx*Cmid + c]
    b2_ref : (Cout, 1)             f32
    o_ref  : (NB, Cout, H*W)       f32 output tile (lane-dense, NCHW-flat)
    xp1_ref: (H+2, W+2, Cin)       f32 VMEM scratch (padded input)
    xp2_ref: (H+2, W+2, Cout)      f32 VMEM scratch (padded conv1 activation)
    """
    nb, H, W, Cin = x_ref.shape
    Cout = o_ref.shape[1]
    Cmid = xp2_ref.shape[2]          # == Cout
    HW = H * W

    for b in range(nb):              # static unroll (nb is 1 or B)
        # ---- reflection-pad the input ------------------------------------
        _write_reflect_pad(xp1_ref, x_ref[b])

        # ---- conv1: single im2col matmul, K = 9*Cin ----------------------
        slab1 = jnp.concatenate(
            [xp1_ref[dy:dy + H, dx:dx + W, :]
             for dy in range(3) for dx in range(3)],
            axis=-1).reshape(HW, 9 * Cin).astype(w1_ref.dtype)
        a1 = jnp.broadcast_to(b1_ref[...], (HW, Cout))         # bias-init acc
        a1 = a1 + jax.lax.dot_general(
            slab1, w1_ref[...], (((1,), (0,)), ((), ())),
            preferred_element_type=jnp.float32)                 # (HW, Cout) f32
        a1 = jnp.where(a1 >= 0, a1, LRELU_SLOPE * a1)

        # ---- reflection-pad the conv1 activation -------------------------
        _write_reflect_pad(xp2_ref, a1.reshape(H, W, Cout))

        # ---- conv2: 3 per-dy K-tiles (K = 3*Cout), transposed output -----
        acc = jnp.broadcast_to(b2_ref[...], (Cout, HW))         # bias-init acc
        for dy in range(3):
            chunk = jnp.concatenate(
                [xp2_ref[dy:dy + H, dx:dx + W, :] for dx in range(3)],
                axis=-1).reshape(HW, 3 * Cmid).astype(w2_ref.dtype)
            # (Cout, K) x (HW, K) contracted on both minors -> (Cout, HW).
            acc = acc + jax.lax.dot_general(
                w2_ref[dy], chunk, (((1,), (1,)), ((), ())),
                preferred_element_type=jnp.float32)
        acc = jnp.where(acc >= 0, acc, LRELU_SLOPE * acc)

        # Fully lane-dense (256-lane) store, already channel-major (NCHW-flat).
        o_ref[b] = acc.astype(o_ref.dtype)


def _is_single_tensorcore_chip():
    """True for v5e / v6e (1 TC per chip); False for v7x / v4 / v5p / unknown."""
    try:
        kind = jax.devices()[0].device_kind.lower().replace(" ", "")
    except Exception:
        return False
    return any(tag in kind for tag in ("v5e", "v5lite", "v6e", "v6lite"))


def localnet_apply(kparams, x_nhwc):
    """Fused LocalNet forward. Input NHWC, output (B, Cout, H*W) channel-major."""
    B, H, W, Cin = x_nhwc.shape
    if H < 2 or W < 2:
        raise ValueError("ReflectionPad2d(1) requires H >= 2 and W >= 2")
    Cout = kparams["w1f"].shape[1]
    HW = H * W

    # Single grid step (whole batch in one block) on 1-TC chips; one batch
    # element per step, split across TensorCores, on multi-TC chips (v7x).
    nb = B if _is_single_tensorcore_chip() else 1
    grid = (B // nb,)

    return pl.pallas_call(
        _localnet_kernel,
        out_shape=jax.ShapeDtypeStruct((B, Cout, HW), x_nhwc.dtype),
        grid=grid,
        in_specs=[
            pl.BlockSpec((nb, H, W, Cin), lambda i: (i, 0, 0, 0)),
            pl.BlockSpec((9 * Cin, Cout), lambda i: (0, 0)),
            pl.BlockSpec((1, Cout), lambda i: (0, 0)),
            pl.BlockSpec((3, Cout, 3 * Cout), lambda i: (0, 0, 0)),
            pl.BlockSpec((Cout, 1), lambda i: (0, 0)),
        ],
        out_specs=pl.BlockSpec((nb, Cout, HW), lambda i: (i, 0, 0)),
        scratch_shapes=[
            pltpu.VMEM((H + 2, W + 2, Cin), jnp.float32),
            pltpu.VMEM((H + 2, W + 2, Cout), jnp.float32),
        ],
        compiler_params=pltpu.CompilerParams(
            dimension_semantics=("parallel",)),
    )(x_nhwc, kparams["w1f"], kparams["b1"], kparams["w2t3"], kparams["b2"])


def prepare_kernel_params(params, weight_dtype=jnp.bfloat16):
    """Convert canonical HWIO f32 params to the kernel's matmul layouts."""
    w1, b1, w2, b2 = params["w1"], params["b1"], params["w2"], params["b2"]
    cin, cout = w1.shape[2], w1.shape[3]
    cmid = w2.shape[2]
    # conv1: (3,3,Cin,Cout) -> (9*Cin, Cout), K rows ordered (dy, dx, cin).
    w1f = w1.reshape(9 * cin, cout).astype(weight_dtype)
    # conv2: (3,3,Cmid,Cout) -> (3, Cout, 3*Cmid): [dy, cout, dx*Cmid + c].
    w2t3 = jnp.transpose(w2, (0, 3, 1, 2)).reshape(
        3, cout, 3 * cmid).astype(weight_dtype)
    return {
        "w1f": w1f,
        "b1": b1.reshape(1, cout).astype(jnp.float32),
        "w2t3": w2t3,
        "b2": b2.reshape(cout, 1).astype(jnp.float32),
    }


@jax.jit
def localnet_forward(params, x_nchw):
    """LocalNet.forward with PyTorch NCHW input/output convention.

    Only the (small) input needs an HBM transpose; the kernel's output is
    already channel-major, so NCHW output is a free reshape.
    """
    B, _, H, W = x_nchw.shape
    kparams = prepare_kernel_params(params)
    x_nhwc = jnp.transpose(x_nchw, (0, 2, 3, 1))     # NCHW -> NHWC (32 KB)
    y = localnet_apply(kparams, x_nhwc)              # (B, Cout, H*W)
    return y.reshape(B, -1, H, W)                    # free: already NCHW-flat


def init_localnet_params(key, in_channels=16, out_channels=64):
    """Deterministic init matching nn.Conv2d(3x3) default init, HWIO f32."""
    k1, k2, k3, k4 = jax.random.split(key, 4)

    def conv_init(kw, kb, cin, cout):
        fan_in = cin * 9
        bound = float(1.0 / (fan_in ** 0.5))
        w = jax.random.uniform(kw, (3, 3, cin, cout), jnp.float32,
                               minval=-bound, maxval=bound)
        b = jax.random.uniform(kb, (cout,), jnp.float32,
                               minval=-bound, maxval=bound)
        return w, b

    w1, b1 = conv_init(k1, k2, in_channels, out_channels)
    w2, b2 = conv_init(k3, k4, out_channels, out_channels)
    return {"w1": w1, "b1": b1, "w2": w2, "b2": b2}


def _reference_forward(params, x_nchw):
    """Pure-JAX reference with the same bf16-input / f32-accumulate recipe."""
    def layer(x, w, b):
        xp = jnp.pad(x.astype(jnp.bfloat16),
                     ((0, 0), (1, 1), (1, 1), (0, 0)), mode="reflect")
        y = jax.lax.conv_general_dilated(
            xp, w.astype(jnp.bfloat16), window_strides=(1, 1), padding="VALID",
            dimension_numbers=("NHWC", "HWIO", "NHWC"),
            preferred_element_type=jnp.float32)
        y = y + b.reshape(1, 1, 1, -1)
        return jnp.where(y >= 0, y, LRELU_SLOPE * y)

    x = jnp.transpose(x_nchw, (0, 2, 3, 1))
    y = layer(x, params["w1"], params["b1"])
    y = layer(y, params["w2"], params["b2"])
    return jnp.transpose(y, (0, 3, 1, 2))


if __name__ == "__main__":
    key = jax.random.PRNGKey(0)
    k_param, k_x = jax.random.split(key)

    in_channels, out_channels = 16, 64
    B, H, W = 2, 16, 16

    params = init_localnet_params(k_param, in_channels, out_channels)
    x = jax.random.normal(k_x, (B, in_channels, H, W), dtype=jnp.float32)

    y = jax.block_until_ready(localnet_forward(params, x))

    assert y.shape == (B, out_channels, H, W), y.shape
    assert bool(jnp.all(jnp.isfinite(y)))

    y_ref = jax.block_until_ready(_reference_forward(params, x))
    assert bool(jnp.allclose(y, y_ref, rtol=2e-2, atol=2e-2)), (
        float(jnp.max(jnp.abs(y - y_ref))))

    print("KERNEL_OK")
</pallas_src>

<mosaic_0001>
module attributes {stable_mosaic.version = 11 : i64} {
  func.func @_localnet_kernel(%arg0: i32, %arg1: memref<1x16x16x16xf32, #tpu.memory_space<vmem>>, %arg2: memref<144x64xbf16, #tpu.memory_space<vmem>>, %arg3: memref<1x64xf32, #tpu.memory_space<vmem>>, %arg4: memref<3x64x192xbf16, #tpu.memory_space<vmem>>, %arg5: memref<64x1xf32, #tpu.memory_space<vmem>>, %arg6: memref<1x64x256xf32, #tpu.memory_space<vmem>>, %arg7: memref<18x18x16xf32, #tpu.memory_space<vmem>>, %arg8: memref<18x18x64xf32, #tpu.memory_space<vmem>>) attributes {dimension_semantics = [#tpu.dimension_semantics<parallel>], iteration_bounds = array<i64: 2>, scalar_prefetch = 0 : i64, scratch_operands = 2 : i64, tpu.core_type = #tpu.core_type<tc>, window_params = [{transform_indices = @transform_0, window_bounds = array<i64: 1, 16, 16, 16>}, {pipeline_mode = #tpu.pipeline_mode<synchronous>, transform_indices = @transform_1, window_bounds = array<i64: 144, 64>}, {pipeline_mode = #tpu.pipeline_mode<synchronous>, transform_indices = @transform_2, window_bounds = array<i64: 1, 64>}, {pipeline_mode = #tpu.pipeline_mode<synchronous>, transform_indices = @transform_3, window_bounds = array<i64: 3, 64, 192>}, {pipeline_mode = #tpu.pipeline_mode<synchronous>, transform_indices = @transform_4, window_bounds = array<i64: 64, 1>}, {transform_indices = @transform_5, window_bounds = array<i64: 1, 64, 256>}]} {
    %c0 = arith.constant 0 : index
    %c0_0 = arith.constant 0 : index
    %c0_1 = arith.constant 0 : index
    %c0_2 = arith.constant 0 : index
    %0 = vector.load %arg1[%c0, %c0_0, %c0_1, %c0_2] : memref<1x16x16x16xf32, #tpu.memory_space<vmem>>, vector<1x16x16x16xf32>
    %1 = vector.shape_cast %0 : vector<1x16x16x16xf32> to vector<16x16x16xf32>
    %c1 = arith.constant 1 : index
    %c1_3 = arith.constant 1 : index
    %c0_4 = arith.constant 0 : index
    %2 = vector.load %arg7[%c1, %c1_3, %c0_4] : memref<18x18x16xf32, #tpu.memory_space<vmem>>, vector<16x16x16xf32>
    tpu.vector_store %arg7[%c1, %c1_3, %c0_4], %1 {strides = array<i32>} : memref<18x18x16xf32, #tpu.memory_space<vmem>>, vector<16x16x16xf32>,
    %3 = vector.extract_strided_slice %1 {offsets = [0, 1, 0], sizes = [16, 1, 16], strides = [1, 1, 1]} : vector<16x16x16xf32> to vector<16x1x16xf32>
    %c1_5 = arith.constant 1 : index
    %c0_6 = arith.constant 0 : index
    %c0_7 = arith.constant 0 : index
    %4 = vector.load %arg7[%c1_5, %c0_6, %c0_7] : memref<18x18x16xf32, #tpu.memory_space<vmem>>, vector<16x1x16xf32>
    tpu.vector_store %arg7[%c1_5, %c0_6, %c0_7], %3 {strides = array<i32>} : memref<18x18x16xf32, #tpu.memory_space<vmem>>, vector<16x1x16xf32>,
    %5 = vector.extract_strided_slice %1 {offsets = [0, 14, 0], sizes = [16, 1, 16], strides = [1, 1, 1]} : vector<16x16x16xf32> to vector<16x1x16xf32>
    %c1_8 = arith.constant 1 : index
    %c17 = arith.constant 17 : index
    %c0_9 = arith.constant 0 : index
    %6 = vector.load %arg7[%c1_8, %c17, %c0_9] : memref<18x18x16xf32, #tpu.memory_space<vmem>>, vector<16x1x16xf32>
    tpu.vector_store %arg7[%c1_8, %c17, %c0_9], %5 {strides = array<i32>} : memref<18x18x16xf32, #tpu.memory_space<vmem>>, vector<16x1x16xf32>,
    %7 = vector.extract_strided_slice %1 {offsets = [1, 0, 0], sizes = [1, 16, 16], strides = [1, 1, 1]} : vector<16x16x16xf32> to vector<1x16x16xf32>
    %c0_10 = arith.constant 0 : index
    %c1_11 = arith.constant 1 : index
    %c0_12 = arith.constant 0 : index
    %8 = vector.load %arg7[%c0_10, %c1_11, %c0_12] : memref<18x18x16xf32, #tpu.memory_space<vmem>>, vector<1x16x16xf32>
    tpu.vector_store %arg7[%c0_10, %c1_11, %c0_12], %7 {strides = array<i32>} : memref<18x18x16xf32, #tpu.memory_space<vmem>>, vector<1x16x16xf32>,
    %9 = vector.extract_strided_slice %1 {offsets = [1, 1, 0], sizes = [1, 1, 16], strides = [1, 1, 1]} : vector<16x16x16xf32> to vector<1x1x16xf32>
    %c0_13 = arith.constant 0 : index
    %c0_14 = arith.constant 0 : index
    %c0_15 = arith.constant 0 : index
    %10 = vector.load %arg7[%c0_13, %c0_14, %c0_15] : memref<18x18x16xf32, #tpu.memory_space<vmem>>, vector<1x1x16xf32>
    tpu.vector_store %arg7[%c0_13, %c0_14, %c0_15], %9 {strides = array<i32>} : memref<18x18x16xf32, #tpu.memory_space<vmem>>, vector<1x1x16xf32>,
    %11 = vector.extract_strided_slice %1 {offsets = [1, 14, 0], sizes = [1, 1, 16], strides = [1, 1, 1]} : vector<16x16x16xf32> to vector<1x1x16xf32>
    %c0_16 = arith.constant 0 : index
    %c17_17 = arith.constant 17 : index
    %c0_18 = arith.constant 0 : index
    %12 = vector.load %arg7[%c0_16, %c17_17, %c0_18] : memref<18x18x16xf32, #tpu.memory_space<vmem>>, vector<1x1x16xf32>
    tpu.vector_store %arg7[%c0_16, %c17_17, %c0_18], %11 {strides = array<i32>} : memref<18x18x16xf32, #tpu.memory_space<vmem>>, vector<1x1x16xf32>,
    %13 = vector.extract_strided_slice %1 {offsets = [14, 0, 0], sizes = [1, 16, 16], strides = [1, 1, 1]} : vector<16x16x16xf32> to vector<1x16x16xf32>
    %c17_19 = arith.constant 17 : index
    %c1_20 = arith.constant 1 : index
    %c0_21 = arith.constant 0 : index
    %14 = vector.load %arg7[%c17_19, %c1_20, %c0_21] : memref<18x18x16xf32, #tpu.memory_space<vmem>>, vector<1x16x16xf32>
    tpu.vector_store %arg7[%c17_19, %c1_20, %c0_21], %13 {strides = array<i32>} : memref<18x18x16xf32, #tpu.memory_space<vmem>>, vector<1x16x16xf32>,
    %15 = vector.extract_strided_slice %1 {offsets = [14, 1, 0], sizes = [1, 1, 16], strides = [1, 1, 1]} : vector<16x16x16xf32> to vector<1x1x16xf32>
    %c17_22 = arith.constant 17 : index
    %c0_23 = arith.constant 0 : index
    %c0_24 = arith.constant 0 : index
    %16 = vector.load %arg7[%c17_22, %c0_23, %c0_24] : memref<18x18x16xf32, #tpu.memory_space<vmem>>, vector<1x1x16xf32>
    tpu.vector_store %arg7[%c17_22, %c0_23, %c0_24], %15 {strides = array<i32>} : memref<18x18x16xf32, #tpu.memory_space<vmem>>, vector<1x1x16xf32>,
    %17 = vector.extract_strided_slice %1 {offsets = [14, 14, 0], sizes = [1, 1, 16], strides = [1, 1, 1]} : vector<16x16x16xf32> to vector<1x1x16xf32>
    %c17_25 = arith.constant 17 : index
    %c17_26 = arith.constant 17 : index
    %c0_27 = arith.constant 0 : index
    %18 = vector.load %arg7[%c17_25, %c17_26, %c0_27] : memref<18x18x16xf32, #tpu.memory_space<vmem>>, vector<1x1x16xf32>
    tpu.vector_store %arg7[%c17_25, %c17_26, %c0_27], %17 {strides = array<i32>} : memref<18x18x16xf32, #tpu.memory_space<vmem>>, vector<1x1x16xf32>,
    %c0_28 = arith.constant 0 : index
    %c0_29 = arith.constant 0 : index
    %c0_30 = arith.constant 0 : index
    %19 = vector.load %arg7[%c0_28, %c0_29, %c0_30] : memref<18x18x16xf32, #tpu.memory_space<vmem>>, vector<16x16x16xf32>
    %c0_31 = arith.constant 0 : index
    %c1_32 = arith.constant 1 : index
    %c0_33 = arith.constant 0 : index
    %20 = vector.load %arg7[%c0_31, %c1_32, %c0_33] : memref<18x18x16xf32, #tpu.memory_space<vmem>>, vector<16x16x16xf32>
    %c0_34 = arith.constant 0 : index
    %c2 = arith.constant 2 : index
    %c0_35 = arith.constant 0 : index
    %21 = vector.load %arg7[%c0_34, %c2, %c0_35] : memref<18x18x16xf32, #tpu.memory_space<vmem>>, vector<16x16x16xf32>
    %c1_36 = arith.constant 1 : index
    %c0_37 = arith.constant 0 : index
    %c0_38 = arith.constant 0 : index
    %22 = vector.load %arg7[%c1_36, %c0_37, %c0_38] : memref<18x18x16xf32, #tpu.memory_space<vmem>>, vector<16x16x16xf32>
    %c1_39 = arith.constant 1 : index
    %c1_40 = arith.constant 1 : index
    %c0_41 = arith.constant 0 : index
    %23 = vector.load %arg7[%c1_39, %c1_40, %c0_41] : memref<18x18x16xf32, #tpu.memory_space<vmem>>, vector<16x16x16xf32>
    %c1_42 = arith.constant 1 : index
    %c2_43 = arith.constant 2 : index
    %c0_44 = arith.constant 0 : index
    %24 = vector.load %arg7[%c1_42, %c2_43, %c0_44] : memref<18x18x16xf32, #tpu.memory_space<vmem>>, vector<16x16x16xf32>
    %c2_45 = arith.constant 2 : index
    %c0_46 = arith.constant 0 : index
    %c0_47 = arith.constant 0 : index
    %25 = vector.load %arg7[%c2_45, %c0_46, %c0_47] : memref<18x18x16xf32, #tpu.memory_space<vmem>>, vector<16x16x16xf32>
    %c2_48 = arith.constant 2 : index
    %c1_49 = arith.constant 1 : index
    %c0_50 = arith.constant 0 : index
    %26 = vector.load %arg7[%c2_48, %c1_49, %c0_50] : memref<18x18x16xf32, #tpu.memory_space<vmem>>, vector<16x16x16xf32>
    %c2_51 = arith.constant 2 : index
    %c2_52 = arith.constant 2 : index
    %c0_53 = arith.constant 0 : index
    %27 = vector.load %arg7[%c2_51, %c2_52, %c0_53] : memref<18x18x16xf32, #tpu.memory_space<vmem>>, vector<16x16x16xf32>
    %28 = tpu.concatenate %19, %20, %21, %22, %23, %24, %25, %26, %27 in 2 : vector<16x16x16xf32>, vector<16x16x16xf32>, vector<16x16x16xf32>, vector<16x16x16xf32>, vector<16x16x16xf32>, vector<16x16x16xf32>, vector<16x16x16xf32>, vector<16x16x16xf32>, vector<16x16x16xf32> -> vector<16x16x144xf32>
    %29 = vector.shape_cast %28 : vector<16x16x144xf32> to vector<256x144xf32>
    %30 = arith.truncf %29 : vector<256x144xf32> to vector<256x144xbf16>
    %c0_54 = arith.constant 0 : index
    %c0_55 = arith.constant 0 : index
    %31 = vector.load %arg3[%c0_54, %c0_55] : memref<1x64xf32, #tpu.memory_space<vmem>>, vector<1x64xf32>
    %32 = vector.shape_cast %31 : vector<1x64xf32> to vector<1x64xf32>
    %33 = vector.broadcast %32 : vector<1x64xf32> to vector<256x64xf32>
    %c0_56 = arith.constant 0 : index
    %c0_57 = arith.constant 0 : index
    %34 = vector.load %arg2[%c0_56, %c0_57] : memref<144x64xbf16, #tpu.memory_space<vmem>>, vector<144x64xbf16>
    %cst = arith.constant dense<0.000000e+00> : vector<256x64xf32>
    %35 = tpu.matmul %30, %34, %cst {dimension_numbers = #tpu.dot_dimension_numbers<[1], [0], [0], [1], [0, 0, 1, 1], [], []>} : vector<256x144xbf16>, vector<144x64xbf16>, vector<256x64xf32> -> vector<256x64xf32>
    %36 = arith.addf %33, %35 : vector<256x64xf32>
    %cst_58 = arith.constant 0.000000e+00 : f32
    %37 = vector.broadcast %cst_58 : f32 to vector<256x64xf32>
    %38 = arith.cmpf oge, %36, %37 : vector<256x64xf32>
    %cst_59 = arith.constant 0.00999999977 : f32
    %39 = vector.broadcast %cst_59 : f32 to vector<256x64xf32>
    %40 = arith.mulf %39, %36 : vector<256x64xf32>
    %41 = arith.select %38, %36, %40 : vector<256x64xi1>, vector<256x64xf32>
    %42 = vector.shape_cast %41 : vector<256x64xf32> to vector<16x16x64xf32>
    %c1_60 = arith.constant 1 : index
    %c1_61 = arith.constant 1 : index
    %c0_62 = arith.constant 0 : index
    %43 = vector.load %arg8[%c1_60, %c1_61, %c0_62] : memref<18x18x64xf32, #tpu.memory_space<vmem>>, vector<16x16x64xf32>
    tpu.vector_store %arg8[%c1_60, %c1_61, %c0_62], %42 {strides = array<i32>} : memref<18x18x64xf32, #tpu.memory_space<vmem>>, vector<16x16x64xf32>,
    %44 = vector.extract_strided_slice %42 {offsets = [0, 1, 0], sizes = [16, 1, 64], strides = [1, 1, 1]} : vector<16x16x64xf32> to vector<16x1x64xf32>
    %c1_63 = arith.constant 1 : index
    %c0_64 = arith.constant 0 : index
    %c0_65 = arith.constant 0 : index
    %45 = vector.load %arg8[%c1_63, %c0_64, %c0_65] : memref<18x18x64xf32, #tpu.memory_space<vmem>>, vector<16x1x64xf32>
    tpu.vector_store %arg8[%c1_63, %c0_64, %c0_65], %44 {strides = array<i32>} : memref<18x18x64xf32, #tpu.memory_space<vmem>>, vector<16x1x64xf32>,
    %46 = vector.extract_strided_slice %42 {offsets = [0, 14, 0], sizes = [16, 1, 64], strides = [1, 1, 1]} : vector<16x16x64xf32> to vector<16x1x64xf32>
    %c1_66 = arith.constant 1 : index
    %c17_67 = arith.constant 17 : index
    %c0_68 = arith.constant 0 : index
    %47 = vector.load %arg8[%c1_66, %c17_67, %c0_68] : memref<18x18x64xf32, #tpu.memory_space<vmem>>, vector<16x1x64xf32>
    tpu.vector_store %arg8[%c1_66, %c17_67, %c0_68], %46 {strides = array<i32>} : memref<18x18x64xf32, #tpu.memory_space<vmem>>, vector<16x1x64xf32>,
    %48 = vector.extract_strided_slice %42 {offsets = [1, 0, 0], sizes = [1, 16, 64], strides = [1, 1, 1]} : vector<16x16x64xf32> to vector<1x16x64xf32>
    %c0_69 = arith.constant 0 : index
    %c1_70 = arith.constant 1 : index
    %c0_71 = arith.constant 0 : index
    %49 = vector.load %arg8[%c0_69, %c1_70, %c0_71] : memref<18x18x64xf32, #tpu.memory_space<vmem>>, vector<1x16x64xf32>
    tpu.vector_store %arg8[%c0_69, %c1_70, %c0_71], %48 {strides = array<i32>} : memref<18x18x64xf32, #tpu.memory_space<vmem>>, vector<1x16x64xf32>,
    %50 = vector.extract_strided_slice %42 {offsets = [1, 1, 0], sizes = [1, 1, 64], strides = [1, 1, 1]} : vector<16x16x64xf32> to vector<1x1x64xf32>
    %c0_72 = arith.constant 0 : index
    %c0_73 = arith.constant 0 : index
    %c0_74 = arith.constant 0 : index
    %51 = vector.load %arg8[%c0_72, %c0_73, %c0_74] : memref<18x18x64xf32, #tpu.memory_space<vmem>>, vector<1x1x64xf32>
    tpu.vector_store %arg8[%c0_72, %c0_73, %c0_74], %50 {strides = array<i32>} : memref<18x18x64xf32, #tpu.memory_space<vmem>>, vector<1x1x64xf32>,
    %52 = vector.extract_strided_slice %42 {offsets = [1, 14, 0], sizes = [1, 1, 64], strides = [1, 1, 1]} : vector<16x16x64xf32> to vector<1x1x64xf32>
    %c0_75 = arith.constant 0 : index
    %c17_76 = arith.constant 17 : index
    %c0_77 = arith.constant 0 : index
    %53 = vector.load %arg8[%c0_75, %c17_76, %c0_77] : memref<18x18x64xf32, #tpu.memory_space<vmem>>, vector<1x1x64xf32>
    tpu.vector_store %arg8[%c0_75, %c17_76, %c0_77], %52 {strides = array<i32>} : memref<18x18x64xf32, #tpu.memory_space<vmem>>, vector<1x1x64xf32>,
    %54 = vector.extract_strided_slice %42 {offsets = [14, 0, 0], sizes = [1, 16, 64], strides = [1, 1, 1]} : vector<16x16x64xf32> to vector<1x16x64xf32>
    %c17_78 = arith.constant 17 : index
    %c1_79 = arith.constant 1 : index
    %c0_80 = arith.constant 0 : index
    %55 = vector.load %arg8[%c17_78, %c1_79, %c0_80] : memref<18x18x64xf32, #tpu.memory_space<vmem>>, vector<1x16x64xf32>
    tpu.vector_store %arg8[%c17_78, %c1_79, %c0_80], %54 {strides = array<i32>} : memref<18x18x64xf32, #tpu.memory_space<vmem>>, vector<1x16x64xf32>,
    %56 = vector.extract_strided_slice %42 {offsets = [14, 1, 0], sizes = [1, 1, 64], strides = [1, 1, 1]} : vector<16x16x64xf32> to vector<1x1x64xf32>
    %c17_81 = arith.constant 17 : index
    %c0_82 = arith.constant 0 : index
    %c0_83 = arith.constant 0 : index
    %57 = vector.load %arg8[%c17_81, %c0_82, %c0_83] : memref<18x18x64xf32, #tpu.memory_space<vmem>>, vector<1x1x64xf32>
    tpu.vector_store %arg8[%c17_81, %c0_82, %c0_83], %56 {strides = array<i32>} : memref<18x18x64xf32, #tpu.memory_space<vmem>>, vector<1x1x64xf32>,
    %58 = vector.extract_strided_slice %42 {offsets = [14, 14, 0], sizes = [1, 1, 64], strides = [1, 1, 1]} : vector<16x16x64xf32> to vector<1x1x64xf32>
    %c17_84 = arith.constant 17 : index
    %c17_85 = arith.constant 17 : index
    %c0_86 = arith.constant 0 : index
    %59 = vector.load %arg8[%c17_84, %c17_85, %c0_86] : memref<18x18x64xf32, #tpu.memory_space<vmem>>, vector<1x1x64xf32>
    tpu.vector_store %arg8[%c17_84, %c17_85, %c0_86], %58 {strides = array<i32>} : memref<18x18x64xf32, #tpu.memory_space<vmem>>, vector<1x1x64xf32>,
    %c0_87 = arith.constant 0 : index
    %c0_88 = arith.constant 0 : index
    %60 = vector.load %arg5[%c0_87, %c0_88] : memref<64x1xf32, #tpu.memory_space<vmem>>, vector<64x1xf32>
    %61 = vector.shape_cast %60 : vector<64x1xf32> to vector<64x1xf32>
    %62 = vector.broadcast %61 : vector<64x1xf32> to vector<64x256xf32>
    %c0_89 = arith.constant 0 : index
    %c0_90 = arith.constant 0 : index
    %c0_91 = arith.constant 0 : index
    %63 = vector.load %arg8[%c0_89, %c0_90, %c0_91] : memref<18x18x64xf32, #tpu.memory_space<vmem>>, vector<16x16x64xf32>
    %c0_92 = arith.constant 0 : index
    %c1_93 = arith.constant 1 : index
    %c0_94 = arith.constant 0 : index
    %64 = vector.load %arg8[%c0_92, %c1_93, %c0_94] : memref<18x18x64xf32, #tpu.memory_space<vmem>>, vector<16x16x64xf32>
    %c0_95 = arith.constant 0 : index
    %c2_96 = arith.constant 2 : index
    %c0_97 = arith.constant 0 : index
    %65 = vector.load %arg8[%c0_95, %c2_96, %c0_97] : memref<18x18x64xf32, #tpu.memory_space<vmem>>, vector<16x16x64xf32>
    %66 = tpu.concatenate %63, %64, %65 in 2 : vector<16x16x64xf32>, vector<16x16x64xf32>, vector<16x16x64xf32> -> vector<16x16x192xf32>
    %67 = vector.shape_cast %66 : vector<16x16x192xf32> to vector<256x192xf32>
    %68 = arith.truncf %67 : vector<256x192xf32> to vector<256x192xbf16>
    %c0_98 = arith.constant 0 : index
    %c0_99 = arith.constant 0 : index
    %c0_100 = arith.constant 0 : index
    %69 = vector.load %arg4[%c0_98, %c0_99, %c0_100] : memref<3x64x192xbf16, #tpu.memory_space<vmem>>, vector<1x64x192xbf16>
    %70 = vector.shape_cast %69 : vector<1x64x192xbf16> to vector<64x192xbf16>
    %cst_101 = arith.constant dense<0.000000e+00> : vector<64x256xf32>
    %71 = tpu.matmul %70, %68, %cst_101 {dimension_numbers = #tpu.dot_dimension_numbers<[1], [1], [0], [0], [0, 0, 1, 0], [], []>} : vector<64x192xbf16>, vector<256x192xbf16>, vector<64x256xf32> -> vector<64x256xf32>
    %72 = arith.addf %62, %71 : vector<64x256xf32>
    %c1_102 = arith.constant 1 : index
    %c0_103 = arith.constant 0 : index
    %c0_104 = arith.constant 0 : index
    %73 = vector.load %arg8[%c1_102, %c0_103, %c0_104] : memref<18x18x64xf32, #tpu.memory_space<vmem>>, vector<16x16x64xf32>
    %c1_105 = arith.constant 1 : index
    %c1_106 = arith.constant 1 : index
    %c0_107 = arith.constant 0 : index
    %74 = vector.load %arg8[%c1_105, %c1_106, %c0_107] : memref<18x18x64xf32, #tpu.memory_space<vmem>>, vector<16x16x64xf32>
    %c1_108 = arith.constant 1 : index
    %c2_109 = arith.constant 2 : index
    %c0_110 = arith.constant 0 : index
    %75 = vector.load %arg8[%c1_108, %c2_109, %c0_110] : memref<18x18x64xf32, #tpu.memory_space<vmem>>, vector<16x16x64xf32>
    %76 = tpu.concatenate %73, %74, %75 in 2 : vector<16x16x64xf32>, vector<16x16x64xf32>, vector<16x16x64xf32> -> vector<16x16x192xf32>
    %77 = vector.shape_cast %76 : vector<16x16x192xf32> to vector<256x192xf32>
    %78 = arith.truncf %77 : vector<256x192xf32> to vector<256x192xbf16>
    %c1_111 = arith.constant 1 : index
    %c0_112 = arith.constant 0 : index
    %c0_113 = arith.constant 0 : index
    %79 = vector.load %arg4[%c1_111, %c0_112, %c0_113] : memref<3x64x192xbf16, #tpu.memory_space<vmem>>, vector<1x64x192xbf16>
    %80 = vector.shape_cast %79 : vector<1x64x192xbf16> to vector<64x192xbf16>
    %cst_114 = arith.constant dense<0.000000e+00> : vector<64x256xf32>
    %81 = tpu.matmul %80, %78, %cst_114 {dimension_numbers = #tpu.dot_dimension_numbers<[1], [1], [0], [0], [0, 0, 1, 0], [], []>} : vector<64x192xbf16>, vector<256x192xbf16>, vector<64x256xf32> -> vector<64x256xf32>
    %82 = arith.addf %72, %81 : vector<64x256xf32>
    %c2_115 = arith.constant 2 : index
    %c0_116 = arith.constant 0 : index
    %c0_117 = arith.constant 0 : index
    %83 = vector.load %arg8[%c2_115, %c0_116, %c0_117] : memref<18x18x64xf32, #tpu.memory_space<vmem>>, vector<16x16x64xf32>
    %c2_118 = arith.constant 2 : index
    %c1_119 = arith.constant 1 : index
    %c0_120 = arith.constant 0 : index
    %84 = vector.load %arg8[%c2_118, %c1_119, %c0_120] : memref<18x18x64xf32, #tpu.memory_space<vmem>>, vector<16x16x64xf32>
    %c2_121 = arith.constant 2 : index
    %c2_122 = arith.constant 2 : index
    %c0_123 = arith.constant 0 : index
    %85 = vector.load %arg8[%c2_121, %c2_122, %c0_123] : memref<18x18x64xf32, #tpu.memory_space<vmem>>, vector<16x16x64xf32>
    %86 = tpu.concatenate %83, %84, %85 in 2 : vector<16x16x64xf32>, vector<16x16x64xf32>, vector<16x16x64xf32> -> vector<16x16x192xf32>
    %87 = vector.shape_cast %86 : vector<16x16x192xf32> to vector<256x192xf32>
    %88 = arith.truncf %87 : vector<256x192xf32> to vector<256x192xbf16>
    %c2_124 = arith.constant 2 : index
    %c0_125 = arith.constant 0 : index
    %c0_126 = arith.constant 0 : index
    %89 = vector.load %arg4[%c2_124, %c0_125, %c0_126] : memref<3x64x192xbf16, #tpu.memory_space<vmem>>, vector<1x64x192xbf16>
    %90 = vector.shape_cast %89 : vector<1x64x192xbf16> to vector<64x192xbf16>
    %cst_127 = arith.constant dense<0.000000e+00> : vector<64x256xf32>
    %91 = tpu.matmul %90, %88, %cst_127 {dimension_numbers = #tpu.dot_dimension_numbers<[1], [1], [0], [0], [0, 0, 1, 0], [], []>} : vector<64x192xbf16>, vector<256x192xbf16>, vector<64x256xf32> -> vector<64x256xf32>
    %92 = arith.addf %82, %91 : vector<64x256xf32>
    %cst_128 = arith.constant 0.000000e+00 : f32
    %93 = vector.broadcast %cst_128 : f32 to vector<64x256xf32>
    %94 = arith.cmpf oge, %92, %93 : vector<64x256xf32>
    %cst_129 = arith.constant 0.00999999977 : f32
    %95 = vector.broadcast %cst_129 : f32 to vector<64x256xf32>
    %96 = arith.mulf %95, %92 : vector<64x256xf32>
    %97 = arith.select %94, %92, %96 : vector<64x256xi1>, vector<64x256xf32>
    %c0_130 = arith.constant 0 : index
    %c0_131 = arith.constant 0 : index
    %c0_132 = arith.constant 0 : index
    %98 = vector.load %arg6[%c0_130, %c0_131, %c0_132] : memref<1x64x256xf32, #tpu.memory_space<vmem>>, vector<1x64x256xf32>
    %99 = vector.shape_cast %98 : vector<1x64x256xf32> to vector<64x256xf32>
    %100 = vector.shape_cast %97 : vector<64x256xf32> to vector<1x64x256xf32>
    tpu.vector_store %arg6[%c0_130, %c0_131, %c0_132], %100 {strides = array<i32>} : memref<1x64x256xf32, #tpu.memory_space<vmem>>, vector<1x64x256xf32>,
    return
  }
  func.func @transform_0(%arg0: i32) -> (i32, i32, i32, i32) {
    %c0_i32 = arith.constant 0 : i32
    %c0_i32_0 = arith.constant 0 : i32
    %c0_i32_1 = arith.constant 0 : i32
    %c0_i32_2 = arith.constant 0 : i32
    return %arg0, %c0_i32, %c0_i32_0, %c0_i32_1 : i32, i32, i32, i32
  }
  func.func @transform_1(%arg0: i32) -> (i32, i32) {
    %c0_i32 = arith.constant 0 : i32
    %c0_i32_0 = arith.constant 0 : i32
    %c0_i32_1 = arith.constant 0 : i32
    return %c0_i32, %c0_i32_0 : i32, i32
  }
  func.func @transform_2(%arg0: i32) -> (i32, i32) {
    %c0_i32 = arith.constant 0 : i32
    %c0_i32_0 = arith.constant 0 : i32
    %c0_i32_1 = arith.constant 0 : i32
    return %c0_i32, %c0_i32_0 : i32, i32
  }
  func.func @transform_3(%arg0: i32) -> (i32, i32, i32) {
    %c0_i32 = arith.constant 0 : i32
    %c0_i32_0 = arith.constant 0 : i32
    %c0_i32_1 = arith.constant 0 : i32
    %c0_i32_2 = arith.constant 0 : i32
    return %c0_i32, %c0_i32_0, %c0_i32_1 : i32, i32, i32
  }
  func.func @transform_4(%arg0: i32) -> (i32, i32) {
    %c0_i32 = arith.constant 0 : i32
    %c0_i32_0 = arith.constant 0 : i32
    %c0_i32_1 = arith.constant 0 : i32
    return %c0_i32, %c0_i32_0 : i32, i32
  }
  func.func @transform_5(%arg0: i32) -> (i32, i32, i32) {
    %c0_i32 = arith.constant 0 : i32
    %c0_i32_0 = arith.constant 0 : i32
    %c0_i32_1 = arith.constant 0 : i32
    return %arg0, %c0_i32, %c0_i32_0 : i32, i32, i32
  }
}

</mosaic_0001>

<llo_original>
// kernel: localnet_forward.1
$region0: #{localnet_forward.1}
  #allocation0 [shape = 'u32[]', space=smem, size = 0x4, offset = 0x4, fixed_abs, tag = 'smem constant byte address 0x4 - core index']
  #allocation1 [shape = 'u32[72,128]{1,0:T(1,128)}', space=vmem, size = 0x9000, scoped, tag = 'internal scratch']
  #allocation2 [shape = 'f32[18,18,16]{2,1,0:T(8,128)}', space=vmem, size = 0x36000, scoped, tag = 'scratch operand']
  #allocation3 [shape = 'f32[18,18,64]{2,1,0:T(8,128)}', space=vmem, size = 0x36000, scoped, tag = 'scratch operand']
  %s0 = inlined_call_operand.vmem [shape: f32[2,16,16,16], index: 0, kind: input, shape index: {}]
  %s1 = inlined_call_operand.vmem [shape: bf16[144,64], index: 1, kind: input, shape index: {}]
  %s2 = inlined_call_operand.vmem [shape: f32[1,64], index: 2, kind: input, shape index: {}]
  %s3 = inlined_call_operand.vmem [shape: bf16[3,64,192], index: 3, kind: input, shape index: {}]
  %s4 = inlined_call_operand.vmem [shape: f32[64,1], index: 4, kind: input, shape index: {}]
  %s5 = inlined_call_operand.vmem [shape: f32[2,64,256], index: 5, kind: output, shape index: {}]
  %s6 = sld [smem:[#allocation0]]
  $region53: #{localnet_forward.1} parent=0
    _
  %s8 = ssub.s32 1, %s6
  %s9 = scalar_select 0, %s8, %s6
  loop: start=0, step=1, limit=4
  $region2: #{localnet_forward.1} parent=0 // loop_pre_header
    _
  $region3: #{localnet_forward.1} parent=0 // loop_header
    %s11 = sphi 0, %s15
    %p12 = scmp.ge.s32.totalorder %s11, 4
    %s21 = sphi 0, %s23
    %s24 = sphi 0, %s21
    %s25 = sphi 0, %s24
    %s41 = sphi 0, %s25
    %s45 = sphi 0, %s45
    %s47 = sphi 0, %s45
    %s48 = sphi 0, %s47
    %s62 = sphi 0, %s48
    %s66 = sphi 0, %s66
    %s68 = sphi 0, %s66
    %s69 = sphi 0, %s68
    %s83 = sphi 0, %s69
    %s87 = sphi 0, %s87
    %s89 = sphi 0, %s87
    %s90 = sphi 0, %s89
    %s104 = sphi 0, %s90
    %s108 = sphi 0, %s108
    %s110 = sphi 0, %s108
    %s111 = sphi 0, %s110
    %s125 = sphi 0, %s111
    %s131 = sphi 0, %s133
    %s134 = sphi 0, %s131
    %s135 = sphi 0, %s134
    %s151 = sphi 0, %s135
  $region4: #{localnet_forward.1} parent=0 // loop_header_branch
    %14 = sbr.rel (%p12) target = $region8
  $region5: #{localnet_forward.1} parent=0 // loop_body
    %s16 = ssub.s32 %s11, 1
    %s17 = ssub.s32 %s11, 2
    %s18 = sadd.s32 %s11, 1
    %s19 = ssub.s32 %s11, %s18
    %p20 = scmp.eq.s32.totalorder %s19, 0
    %s22 = sadd.s32 %s21, 1
    %s23 = scalar_select %p20, %s21, %s22
    %p26 = pneg %p20
    %p27 = scmp.eq.s32.totalorder %s11, 1
    %p28 = por %p26, %p27
    %p29 = scmp.ne.s32.totalorder %s21, %s24
    %p30 = scmp.eq.s32.totalorder %s11, 0
    %p31 = por %p29, %p30
    %p32 = scmp.ne.s32.totalorder %s21, %s24
    %p33 = scmp.eq.s32.totalorder %s16, 1
    %p34 = por %p32, %p33
    %p35 = scmp.ne.s32.totalorder %s24, %s25
    %p36 = scmp.eq.s32.totalorder %s16, 0
    %p37 = por %p35, %p36
    %p38 = scmp.ne.s32.totalorder %s24, %s25
    %p39 = scmp.eq.s32.totalorder %s17, 1
    %p40 = por %p38, %p39
    %p42 = scmp.ne.s32.totalorder %s25, %s41
    %p43 = scmp.eq.s32.totalorder %s17, 0
    %p44 = por %p42, %p43
    %s46 = sadd.s32 %s45, 1
    %p49 = scmp.eq.s32.totalorder %s11, 1
    %p50 = scmp.ne.s32.totalorder %s45, %s47
    %p51 = scmp.eq.s32.totalorder %s11, 0
    %p52 = por %p50, %p51
    %p53 = scmp.ne.s32.totalorder %s45, %s47
    %p54 = scmp.eq.s32.totalorder %s16, 1
    %p55 = por %p53, %p54
    %p56 = scmp.ne.s32.totalorder %s47, %s48
    %p57 = scmp.eq.s32.totalorder %s16, 0
    %p58 = por %p56, %p57
    %p59 = scmp.ne.s32.totalorder %s47, %s48
    %p60 = scmp.eq.s32.totalorder %s17, 1
    %p61 = por %p59, %p60
    %p63 = scmp.ne.s32.totalorder %s48, %s62
    %p64 = scmp.eq.s32.totalorder %s17, 0
    %p65 = por %p63, %p64
    %s67 = sadd.s32 %s66, 1
    %p70 = scmp.eq.s32.totalorder %s11, 1
    %p71 = scmp.ne.s32.totalorder %s66, %s68
    %p72 = scmp.eq.s32.totalorder %s11, 0
    %p73 = por %p71, %p72
    %p74 = scmp.ne.s32.totalorder %s66, %s68
    %p75 = scmp.eq.s32.totalorder %s16, 1
    %p76 = por %p74, %p75
    %p77 = scmp.ne.s32.totalorder %s68, %s69
    %p78 = scmp.eq.s32.totalorder %s16, 0
    %p79 = por %p77, %p78
    %p80 = scmp.ne.s32.totalorder %s68, %s69
    %p81 = scmp.eq.s32.totalorder %s17, 1
    %p82 = por %p80, %p81
    %p84 = scmp.ne.s32.totalorder %s69, %s83
    %p85 = scmp.eq.s32.totalorder %s17, 0
    %p86 = por %p84, %p85
    %s88 = sadd.s32 %s87, 1
    %p91 = scmp.eq.s32.totalorder %s11, 1
    %p92 = scmp.ne.s32.totalorder %s87, %s89
    %p93 = scmp.eq.s32.totalorder %s11, 0
    %p94 = por %p92, %p93
    %p95 = scmp.ne.s32.totalorder %s87, %s89
    %p96 = scmp.eq.s32.totalorder %s16, 1
    %p97 = por %p95, %p96
    %p98 = scmp.ne.s32.totalorder %s89, %s90
    %p99 = scmp.eq.s32.totalorder %s16, 0
    %p100 = por %p98, %p99
    %p101 = scmp.ne.s32.totalorder %s89, %s90
    %p102 = scmp.eq.s32.totalorder %s17, 1
    %p103 = por %p101, %p102
    %p105 = scmp.ne.s32.totalorder %s90, %s104
    %p106 = scmp.eq.s32.totalorder %s17, 0
    %p107 = por %p105, %p106
    %s109 = sadd.s32 %s108, 1
    %p112 = scmp.eq.s32.totalorder %s11, 1
    %p113 = scmp.ne.s32.totalorder %s108, %s110
    %p114 = scmp.eq.s32.totalorder %s11, 0
    %p115 = por %p113, %p114
    %p116 = scmp.ne.s32.totalorder %s108, %s110
    %p117 = scmp.eq.s32.totalorder %s16, 1
    %p118 = por %p116, %p117
    %p119 = scmp.ne.s32.totalorder %s110, %s111
    %p120 = scmp.eq.s32.totalorder %s16, 0
    %p121 = por %p119, %p120
    %p122 = scmp.ne.s32.totalorder %s110, %s111
    %p123 = scmp.eq.s32.totalorder %s17, 1
    %p124 = por %p122, %p123
    %p126 = scmp.ne.s32.totalorder %s111, %s125
    %p127 = scmp.eq.s32.totalorder %s17, 0
    %p128 = por %p126, %p127
    %s129 = ssub.s32 %s11, %s18
    %p130 = scmp.eq.s32.totalorder %s129, 0
    %s132 = sadd.s32 %s131, 1
    %s133 = scalar_select %p130, %s131, %s132
    %p136 = pneg %p130
    %p137 = scmp.eq.s32.totalorder %s11, 1
    %p138 = por %p136, %p137
    %p139 = scmp.ne.s32.totalorder %s131, %s134
    %p140 = scmp.eq.s32.totalorder %s11, 0
    %p141 = por %p139, %p140
    %p142 = scmp.ne.s32.totalorder %s131, %s134
    %p143 = scmp.eq.s32.totalorder %s16, 1
    %p144 = por %p142, %p143
    %p145 = scmp.ne.s32.totalorder %s134, %s135
    %p146 = scmp.eq.s32.totalorder %s16, 0
    %p147 = por %p145, %p146
    %p148 = scmp.ne.s32.totalorder %s134, %s135
    %p149 = scmp.eq.s32.totalorder %s17, 1
    %p150 = por %p148, %p149
    %p152 = scmp.ne.s32.totalorder %s135, %s151
    %p153 = scmp.eq.s32.totalorder %s17, 0
    %p154 = por %p152, %p153
    %p155 = scmp.le.s32.totalorder 1, %s11
    %p156 = scmp.lt.s32.totalorder %s11, 3
    %p157 = pnand %p155, %p156
    %p158 = pneg %p157
    // Predicated region
    $region9: #{localnet_forward.1} parent=5 // pred_check
      _
    $region10: #{localnet_forward.1} parent=5 // pred_check_branch
      %160 = sbr.rel (%p157) target = $region12
    $region11: #{localnet_forward.1} parent=5 // pred_region
      %s161 = ssub.s32 %s11, 1
      // Predicated region
      $region13: #{localnet_forward.1} parent=11 // pred_check
        %p162 = pneg %p58
      $region14: #{localnet_forward.1} parent=11 // pred_check_branch
        %164 = sbr.rel (%p162) target = $region16
      $region15: #{localnet_forward.1} parent=11 // pred_region
        _
      $region16: #{localnet_forward.1} parent=11 // pred_fallthru
        _
      // Predicated region
      $region17: #{localnet_forward.1} parent=11 // pred_check
        %p165 = pneg %p79
      $region18: #{localnet_forward.1} parent=11 // pred_check_branch
        %167 = sbr.rel (%p165) target = $region20
      $region19: #{localnet_forward.1} parent=11 // pred_region
        _
      $region20: #{localnet_forward.1} parent=11 // pred_fallthru
        _
      // Predicated region
      $region21: #{localnet_forward.1} parent=11 // pred_check
        %p168 = pneg %p100
      $region22: #{localnet_forward.1} parent=11 // pred_check_branch
        %170 = sbr.rel (%p168) target = $region24
      $region23: #{localnet_forward.1} parent=11 // pred_region
        _
      $region24: #{localnet_forward.1} parent=11 // pred_fallthru
        _
      // Predicated region
      $region25: #{localnet_forward.1} parent=11 // pred_check
        %p171 = pneg %p121
      $region26: #{localnet_forward.1} parent=11 // pred_check_branch
        %173 = sbr.rel (%p171) target = $region28
      $region27: #{localnet_forward.1} parent=11 // pred_region
        _
      $region28: #{localnet_forward.1} parent=11 // pred_fallthru
        _
    $region12: #{localnet_forward.1} parent=5 // pred_fallthru
      _
    %p174 = scmp.lt.s32.totalorder %s11, 2
    // Predicated region
    $region29: #{localnet_forward.1} parent=5 // pred_check
      %p175 = pneg %p174
    $region30: #{localnet_forward.1} parent=5 // pred_check_branch
      %177 = sbr.rel (%p175) target = $region32
    $region31: #{localnet_forward.1} parent=5 // pred_region
      // Predicated region
      $region33: #{localnet_forward.1} parent=31 // pred_check
        %p178 = pneg %p31
      $region34: #{localnet_forward.1} parent=31 // pred_check_branch
        %180 = sbr.rel (%p178) target = $region36
      $region35: #{localnet_forward.1} parent=31 // pred_region
        %p181 = scmp.lt.s32.totalorder %s11, 1
        %s182 = scalar_select %p181, %s11, 1
        %s183 = smul.addr %s182, 32
        %s184 = smul.addr %s183, 8
        %s185 = scalar_lea.vmem %s0, %s184
      $region36: #{localnet_forward.1} parent=31 // pred_fallthru
        _
    $region32: #{localnet_forward.1} parent=5 // pred_fallthru
      _
    %p186 = scmp.le.s32.totalorder 1, %s11
    %p187 = scmp.lt.s32.totalorder %s11, 3
    %p188 = pnand %p186, %p187
    %p189 = pneg %p188
    // Predicated region
    $region37: #{localnet_forward.1} parent=5 // pred_check
      _
    $region38: #{localnet_forward.1} parent=5 // pred_check_branch
      %191 = sbr.rel (%p188) target = $region40
    $region39: #{localnet_forward.1} parent=5 // pred_region
      %s192 = ssub.s32 %s11, 1
      %p193 = scmp.lt.s32.totalorder %s16, 1
      %s194 = scalar_select %p193, %s16, 1
      %s195 = smul.addr %s194, 32
      %s196 = smul.addr %s195, 8
      %s197 = scalar_lea.vmem %s0, %s196
      %p198 = pneg %p37
      %p199 = pneg %p34
      %p200 = pneg %p58
      %p201 = pneg %p55
      %p202 = pneg %p79
      %p203 = pneg %p76
      %p204 = pneg %p100
      %p205 = pneg %p97
      %p206 = pneg %p121
      %p207 = pneg %p118
      %p208 = pneg %p147
      %p209 = pneg %p144
      %p210 = scmp.lt.s32.totalorder %s16, 1
      %s211 = scalar_select %p210, %s16, 1
      %s212 = smul.addr %s211, 16
      %s213 = smul.addr %s212, 8
      %s214 = scalar_lea.vmem %s5, %s213
      %p215 = scmp.lt.s32.totalorder %s16, 1
      %s216 = scalar_select %p215, %s16, 1
      %s217 = smul.addr %s216, 32
      %s218 = smul.addr %s217, 8
      %s219 = scalar_lea.vmem %s0, %s218
      %p220 = scmp.lt.s32.totalorder %s16, 1
      %s221 = scalar_select %p220, %s16, 1
      %s222 = smul.addr %s221, 16
      %s223 = smul.addr %s222, 8
      %s224 = scalar_lea.vmem %s5, %s223
      %v226 = vld [vmem:[%s219] sm:$0xff]
      %v227 = vld [vmem:[%s219 + $0x8] sm:$0xff]
      %v228 = vld [vmem:[%s219 + $0x10] sm:$0xff]
      %v229 = vld [vmem:[%s219 + $0x18] sm:$0xff]
      %v230 = vld [vmem:[%s219 + $0x20] sm:$0xff]
      %v231 = vld [vmem:[%s219 + $0x28] sm:$0xff]
      %v232 = vld [vmem:[%s219 + $0x30] sm:$0xff]
      %v233 = vld [vmem:[%s219 + $0x38] sm:$0xff]
      %v234 = vld [vmem:[%s219 + $0x40] sm:$0xff]
      %v235 = vld [vmem:[%s219 + $0x48] sm:$0xff]
      %v236 = vld [vmem:[%s219 + $0x50] sm:$0xff]
      %v237 = vld [vmem:[%s219 + $0x58] sm:$0xff]
      %v238 = vld [vmem:[%s219 + $0x60] sm:$0xff]
      %v239 = vld [vmem:[%s219 + $0x68] sm:$0xff]
      %v240 = vld [vmem:[%s219 + $0x70] sm:$0xff]
      %v241 = vld [vmem:[%s219 + $0x78] sm:$0xff]
      %v242 = vld [vmem:[%s219 + $0x80] sm:$0xff]
      %v243 = vld [vmem:[%s219 + $0x88] sm:$0xff]
      %v244 = vld [vmem:[%s219 + $0x90] sm:$0xff]
      %v245 = vld [vmem:[%s219 + $0x98] sm:$0xff]
      %v246 = vld [vmem:[%s219 + $0xa0] sm:$0xff]
      %v247 = vld [vmem:[%s219 + $0xa8] sm:$0xff]
      %v248 = vld [vmem:[%s219 + $0xb0] sm:$0xff]
      %v249 = vld [vmem:[%s219 + $0xb8] sm:$0xff]
      %v250 = vld [vmem:[%s219 + $0xc0] sm:$0xff]
      %v251 = vld [vmem:[%s219 + $0xc8] sm:$0xff]
      %v252 = vld [vmem:[%s219 + $0xd0] sm:$0xff]
      %v253 = vld [vmem:[%s219 + $0xd8] sm:$0xff]
      %v254 = vld [vmem:[%s219 + $0xe0] sm:$0xff]
      %v255 = vld [vmem:[%s219 + $0xe8] sm:$0xff]
      %v256 = vld [vmem:[%s219 + $0xf0] sm:$0xff]
      %v257 = vld [vmem:[%s219 + $0xf8] sm:$0xff]
      %s258 = scalar_lea.vmem [#allocation2], 24
      %vm259 = vcmask 130048
      %260 = vst.msk [vmem:[%s258 + $0x1] sm:$0xff] %vm259, %v226
      %261 = vst.msk [vmem:[%s258 + $0x9] sm:$0xff] %vm259, %v227
      %262 = vst.msk [vmem:[%s258 + $0x19] sm:$0xff] %vm259, %v228
      %263 = vst.msk [vmem:[%s258 + $0x21] sm:$0xff] %vm259, %v229
      %264 = vst.msk [vmem:[%s258 + $0x31] sm:$0xff] %vm259, %v230
      %265 = vst.msk [vmem:[%s258 + $0x39] sm:$0xff] %vm259, %v231
      %266 = vst.msk [vmem:[%s258 + $0x49] sm:$0xff] %vm259, %v232
      %267 = vst.msk [vmem:[%s258 + $0x51] sm:$0xff] %vm259, %v233
      %268 = vst.msk [vmem:[%s258 + $0x61] sm:$0xff] %vm259, %v234
      %269 = vst.msk [vmem:[%s258 + $0x69] sm:$0xff] %vm259, %v235
      %270 = vst.msk [vmem:[%s258 + $0x79] sm:$0xff] %vm259, %v236
      %271 = vst.msk [vmem:[%s258 + $0x81] sm:$0xff] %vm259, %v237
      %272 = vst.msk [vmem:[%s258 + $0x91] sm:$0xff] %vm259, %v238
      %273 = vst.msk [vmem:[%s258 + $0x99] sm:$0xff] %vm259, %v239
      %274 = vst.msk [vmem:[%s258 + $0xa9] sm:$0xff] %vm259, %v240
      %275 = vst.msk [vmem:[%s258 + $0xb1] sm:$0xff] %vm259, %v241
      %276 = vst.msk [vmem:[%s258 + $0xc1] sm:$0xff] %vm259, %v242
      %277 = vst.msk [vmem:[%s258 + $0xc9] sm:$0xff] %vm259, %v243
      %278 = vst.msk [vmem:[%s258 + $0xd9] sm:$0xff] %vm259, %v244
      %279 = vst.msk [vmem:[%s258 + $0xe1] sm:$0xff] %vm259, %v245
      %280 = vst.msk [vmem:[%s258 + $0xf1] sm:$0xff] %vm259, %v246
      %281 = vst.msk [vmem:[%s258 + $0xf9] sm:$0xff] %vm259, %v247
      %282 = vst.msk [vmem:[%s258 + $0x109] sm:$0xff] %vm259, %v248
      %283 = vst.msk [vmem:[%s258 + $0x111] sm:$0xff] %vm259, %v249
      %284 = vst.msk [vmem:[%s258 + $0x121] sm:$0xff] %vm259, %v250
      %285 = vst.msk [vmem:[%s258 + $0x129] sm:$0xff] %vm259, %v251
      %286 = vst.msk [vmem:[%s258 + $0x139] sm:$0xff] %vm259, %v252
      %287 = vst.msk [vmem:[%s258 + $0x141] sm:$0xff] %vm259, %v253
      %288 = vst.msk [vmem:[%s258 + $0x151] sm:$0xff] %vm259, %v254
      %289 = vst.msk [vmem:[%s258 + $0x159] sm:$0xff] %vm259, %v255
      %290 = vst.msk [vmem:[%s258 + $0x169] sm:$0xff] %vm259, %v256
      %291 = vst.msk [vmem:[%s258 + $0x171] sm:$0xff] %vm259, %v257
      %vm292 = vcmask 123905
      %293 = vst.msk [vmem:[%s258 - $0x1] sm:$0x2] %vm292, %v226
      %294 = vst.msk [vmem:[%s258 + $0x17] sm:$0x2] %vm292, %v228
      %295 = vst.msk [vmem:[%s258 + $0x2f] sm:$0x2] %vm292, %v230
      %296 = vst.msk [vmem:[%s258 + $0x47] sm:$0x2] %vm292, %v232
      %297 = vst.msk [vmem:[%s258 + $0x5f] sm:$0x2] %vm292, %v234
      %298 = vst.msk [vmem:[%s258 + $0x77] sm:$0x2] %vm292, %v236
      %299 = vst.msk [vmem:[%s258 + $0x8f] sm:$0x2] %vm292, %v238
      %300 = vst.msk [vmem:[%s258 + $0xa7] sm:$0x2] %vm292, %v240
      %301 = vst.msk [vmem:[%s258 + $0xbf] sm:$0x2] %vm292, %v242
      %302 = vst.msk [vmem:[%s258 + $0xd7] sm:$0x2] %vm292, %v244
      %303 = vst.msk [vmem:[%s258 + $0xef] sm:$0x2] %vm292, %v246
      %304 = vst.msk [vmem:[%s258 + $0x107] sm:$0x2] %vm292, %v248
      %305 = vst.msk [vmem:[%s258 + $0x11f] sm:$0x2] %vm292, %v250
      %306 = vst.msk [vmem:[%s258 + $0x137] sm:$0x2] %vm292, %v252
      %307 = vst.msk [vmem:[%s258 + $0x14f] sm:$0x2] %vm292, %v254
      %308 = vst.msk [vmem:[%s258 + $0x167] sm:$0x2] %vm292, %v256
      %vm309 = vcmask 129030
      %310 = vst.msk [vmem:[%s258 + $0xb] sm:$0x40] %vm309, %v227
      %311 = vst.msk [vmem:[%s258 + $0x23] sm:$0x40] %vm309, %v229
      %312 = vst.msk [vmem:[%s258 + $0x3b] sm:$0x40] %vm309, %v231
      %313 = vst.msk [vmem:[%s258 + $0x53] sm:$0x40] %vm309, %v233
      %314 = vst.msk [vmem:[%s258 + $0x6b] sm:$0x40] %vm309, %v235
      %315 = vst.msk [vmem:[%s258 + $0x83] sm:$0x40] %vm309, %v237
      %316 = vst.msk [vmem:[%s258 + $0x9b] sm:$0x40] %vm309, %v239
      %317 = vst.msk [vmem:[%s258 + $0xb3] sm:$0x40] %vm309, %v241
      %318 = vst.msk [vmem:[%s258 + $0xcb] sm:$0x40] %vm309, %v243
      %319 = vst.msk [vmem:[%s258 + $0xe3] sm:$0x40] %vm309, %v245
      %320 = vst.msk [vmem:[%s258 + $0xfb] sm:$0x40] %vm309, %v247
      %321 = vst.msk [vmem:[%s258 + $0x113] sm:$0x40] %vm309, %v249
      %322 = vst.msk [vmem:[%s258 + $0x12b] sm:$0x40] %vm309, %v251
      %323 = vst.msk [vmem:[%s258 + $0x143] sm:$0x40] %vm309, %v253
      %324 = vst.msk [vmem:[%s258 + $0x15b] sm:$0x40] %vm309, %v255
      %325 = vst.msk [vmem:[%s258 + $0x173] sm:$0x40] %vm309, %v257
      %326 = vst.msk [vmem:[#allocation2 + $0x1] sm:$0xff] %vm259, %v228
      %327 = vst.msk [vmem:[#allocation2 + $0x9] sm:$0xff] %vm259, %v229
      %328 = vst.msk [vmem:[#allocation2 - $0x1] sm:$0x2] %vm292, %v228
      %329 = vst.msk [vmem:[#allocation2 + $0xb] sm:$0x40] %vm309, %v229
      %s330 = scalar_lea.vmem [#allocation2], 408
      %331 = vst.msk [vmem:[%s330 + $0x1] sm:$0xff] %vm259, %v254
      %332 = vst.msk [vmem:[%s330 + $0x9] sm:$0xff] %vm259, %v255
      %333 = vst.msk [vmem:[%s330 - $0x1] sm:$0x2] %vm292, %v254
      %334 = vst.msk [vmem:[%s330 + $0xb] sm:$0x40] %vm309, %v255
      %v335 = vld [vmem:[#allocation2] sm:$0xff]
      %v336 = vld [vmem:[#allocation2 + $0x8] sm:$0xff]
      %v337 = vld [vmem:[#allocation2 + $0x18] sm:$0xff]
      %v338 = vld [vmem:[#allocation2 + $0x20] sm:$0xff]
      %v339 = vld [vmem:[#allocation2 + $0x30] sm:$0xff]
      %v340 = vld [vmem:[#allocation2 + $0x38] sm:$0xff]
      %v341 = vld [vmem:[#allocation2 + $0x48] sm:$0xff]
      %v342 = vld [vmem:[#allocation2 + $0x50] sm:$0xff]
      %v343 = vld [vmem:[#allocation2 + $0x60] sm:$0xff]
      %v344 = vld [vmem:[#allocation2 + $0x68] sm:$0xff]
      %v345 = vld [vmem:[#allocation2 + $0x78] sm:$0xff]
      %v346 = vld [vmem:[#allocation2 + $0x80] sm:$0xff]
      %v347 = vld [vmem:[#allocation2 + $0x90] sm:$0xff]
      %v348 = vld [vmem:[#allocation2 + $0x98] sm:$0xff]
      %v349 = vld [vmem:[#allocation2 + $0xa8] sm:$0xff]
      %v350 = vld [vmem:[#allocation2 + $0xb0] sm:$0xff]
      %v351 = vld [vmem:[#allocation2 + $0xc0] sm:$0xff]
      %v352 = vld [vmem:[#allocation2 + $0xc8] sm:$0xff]
      %v353 = vld [vmem:[#allocation2 + $0xd8] sm:$0xff]
      %v354 = vld [vmem:[#allocation2 + $0xe0] sm:$0xff]
      %v355 = vld [vmem:[#allocation2 + $0xf0] sm:$0xff]
      %v356 = vld [vmem:[#allocation2 + $0xf8] sm:$0xff]
      %v357 = vld [vmem:[#allocation2 + $0x108] sm:$0xff]
      %v358 = vld [vmem:[#allocation2 + $0x110] sm:$0xff]
      %v359 = vld [vmem:[#allocation2 + $0x120] sm:$0xff]
      %v360 = vld [vmem:[#allocation2 + $0x128] sm:$0xff]
      %v361 = vld [vmem:[#allocation2 + $0x138] sm:$0xff]
      %v362 = vld [vmem:[#allocation2 + $0x140] sm:$0xff]
      %v363 = vld [vmem:[#allocation2 + $0x150] sm:$0xff]
      %v364 = vld [vmem:[#allocation2 + $0x158] sm:$0xff]
      %v365 = vld [vmem:[#allocation2 + $0x168] sm:$0xff]
      %v366 = vld [vmem:[#allocation2 + $0x170] sm:$0xff]
      %v367 = vld [vmem:[#allocation2 + $0x1] sm:$0xff]
      %v368 = vld [vmem:[#allocation2 + $0x9] sm:$0xff]
      %v369 = vld [vmem:[#allocation2 + $0x19] sm:$0xff]
      %v370 = vld [vmem:[#allocation2 + $0x21] sm:$0xff]
      %v371 = vld [vmem:[#allocation2 + $0x31] sm:$0xff]
      %v372 = vld [vmem:[#allocation2 + $0x39] sm:$0xff]
      %v373 = vld [vmem:[#allocation2 + $0x49] sm:$0xff]
      %v374 = vld [vmem:[#allocation2 + $0x51] sm:$0xff]
      %v375 = vld [vmem:[#allocation2 + $0x61] sm:$0xff]
      %v376 = vld [vmem:[#allocation2 + $0x69] sm:$0xff]
      %v377 = vld [vmem:[#allocation2 + $0x79] sm:$0xff]
      %v378 = vld [vmem:[#allocation2 + $0x81] sm:$0xff]
      %v379 = vld [vmem:[#allocation2 + $0x91] sm:$0xff]
      %v380 = vld [vmem:[#allocation2 + $0x99] sm:$0xff]
      %v381 = vld [vmem:[#allocation2 + $0xa9] sm:$0xff]
      %v382 = vld [vmem:[#allocation2 + $0xb1] sm:$0xff]
      %v383 = vld [vmem:[#allocation2 + $0xc1] sm:$0xff]
      %v384 = vld [vmem:[#allocation2 + $0xc9] sm:$0xff]
      %v385 = vld [vmem:[#allocation2 + $0xd9] sm:$0xff]
      %v386 = vld [vmem:[#allocation2 + $0xe1] sm:$0xff]
      %v387 = vld [vmem:[#allocation2 + $0xf1] sm:$0xff]
      %v388 = vld [vmem:[#allocation2 + $0xf9] sm:$0xff]
      %v389 = vld [vmem:[#allocation2 + $0x109] sm:$0xff]
      %v390 = vld [vmem:[#allocation2 + $0x111] sm:$0xff]
      %v391 = vld [vmem:[#allocation2 + $0x121] sm:$0xff]
      %v392 = vld [vmem:[#allocation2 + $0x129] sm:$0xff]
      %v393 = vld [vmem:[#allocation2 + $0x139] sm:$0xff]
      %v394 = vld [vmem:[#allocation2 + $0x141] sm:$0xff]
      %v395 = vld [vmem:[#allocation2 + $0x151] sm:$0xff]
      %v396 = vld [vmem:[#allocation2 + $0x159] sm:$0xff]
      %v397 = vld [vmem:[#allocation2 + $0x169] sm:$0xff]
      %v398 = vld [vmem:[#allocation2 + $0x171] sm:$0xff]
      %v399 = vld [vmem:[#allocation2 + $0x2] sm:$0xff]
      %v400 = vld [vmem:[#allocation2 + $0xa] sm:$0xff]
      %v401 = vld [vmem:[#allocation2 + $0x1a] sm:$0xff]
      %v402 = vld [vmem:[#allocation2 + $0x22] sm:$0xff]
      %v403 = vld [vmem:[#allocation2 + $0x32] sm:$0xff]
      %v404 = vld [vmem:[#allocation2 + $0x3a] sm:$0xff]
      %v405 = vld [vmem:[#allocation2 + $0x4a] sm:$0xff]
      %v406 = vld [vmem:[#allocation2 + $0x52] sm:$0xff]
      %v407 = vld [vmem:[#allocation2 + $0x62] sm:$0xff]
      %v408 = vld [vmem:[#allocation2 + $0x6a] sm:$0xff]
      %v409 = vld [vmem:[#allocation2 + $0x7a] sm:$0xff]
      %v410 = vld [vmem:[#allocation2 + $0x82] sm:$0xff]
      %v411 = vld [vmem:[#allocation2 + $0x92] sm:$0xff]
      %v412 = vld [vmem:[#allocation2 + $0x9a] sm:$0xff]
      %v413 = vld [vmem:[#allocation2 + $0xaa] sm:$0xff]
      %v414 = vld [vmem:[#allocation2 + $0xb2] sm:$0xff]
      %v415 = vld [vmem:[#allocation2 + $0xc2] sm:$0xff]
      %v416 = vld [vmem:[#allocation2 + $0xca] sm:$0xff]
      %v417 = vld [vmem:[#allocation2 + $0xda] sm:$0xff]
      %v418 = vld [vmem:[#allocation2 + $0xe2] sm:$0xff]
      %v419 = vld [vmem:[#allocation2 + $0xf2] sm:$0xff]
      %v420 = vld [vmem:[#allocation2 + $0xfa] sm:$0xff]
      %v421 = vld [vmem:[#allocation2 + $0x10a] sm:$0xff]
      %v422 = vld [vmem:[#allocation2 + $0x112] sm:$0xff]
      %v423 = vld [vmem:[#allocation2 + $0x122] sm:$0xff]
      %v424 = vld [vmem:[#allocation2 + $0x12a] sm:$0xff]
      %v425 = vld [vmem:[#allocation2 + $0x13a] sm:$0xff]
      %v426 = vld [vmem:[#allocation2 + $0x142] sm:$0xff]
      %v427 = vld [vmem:[#allocation2 + $0x152] sm:$0xff]
      %v428 = vld [vmem:[#allocation2 + $0x15a] sm:$0xff]
      %v429 = vld [vmem:[#allocation2 + $0x16a] sm:$0xff]
      %v430 = vld [vmem:[#allocation2 + $0x172] sm:$0xff]
      %v431 = vld [vmem:[%s258] sm:$0xff]
      %v432 = vld [vmem:[%s258 + $0x8] sm:$0xff]
      %v433 = vld [vmem:[%s258 + $0x18] sm:$0xff]
      %v434 = vld [vmem:[%s258 + $0x20] sm:$0xff]
      %v435 = vld [vmem:[%s258 + $0x30] sm:$0xff]
      %v436 = vld [vmem:[%s258 + $0x38] sm:$0xff]
      %v437 = vld [vmem:[%s258 + $0x48] sm:$0xff]
      %v438 = vld [vmem:[%s258 + $0x50] sm:$0xff]
      %v439 = vld [vmem:[%s258 + $0x60] sm:$0xff]
      %v440 = vld [vmem:[%s258 + $0x68] sm:$0xff]
      %v441 = vld [vmem:[%s258 + $0x78] sm:$0xff]
      %v442 = vld [vmem:[%s258 + $0x80] sm:$0xff]
      %v443 = vld [vmem:[%s258 + $0x90] sm:$0xff]
      %v444 = vld [vmem:[%s258 + $0x98] sm:$0xff]
      %v445 = vld [vmem:[%s258 + $0xa8] sm:$0xff]
      %v446 = vld [vmem:[%s258 + $0xb0] sm:$0xff]
      %v447 = vld [vmem:[%s258 + $0xc0] sm:$0xff]
      %v448 = vld [vmem:[%s258 + $0xc8] sm:$0xff]
      %v449 = vld [vmem:[%s258 + $0xd8] sm:$0xff]
      %v450 = vld [vmem:[%s258 + $0xe0] sm:$0xff]
      %v451 = vld [vmem:[%s258 + $0xf0] sm:$0xff]
      %v452 = vld [vmem:[%s258 + $0xf8] sm:$0xff]
      %v453 = vld [vmem:[%s258 + $0x108] sm:$0xff]
      %v454 = vld [vmem:[%s258 + $0x110] sm:$0xff]
      %v455 = vld [vmem:[%s258 + $0x120] sm:$0xff]
      %v456 = vld [vmem:[%s258 + $0x128] sm:$0xff]
      %v457 = vld [vmem:[%s258 + $0x138] sm:$0xff]
      %v458 = vld [vmem:[%s258 + $0x140] sm:$0xff]
      %v459 = vld [vmem:[%s258 + $0x150] sm:$0xff]
      %v460 = vld [vmem:[%s258 + $0x158] sm:$0xff]
      %v461 = vld [vmem:[%s258 + $0x168] sm:$0xff]
      %v462 = vld [vmem:[%s258 + $0x170] sm:$0xff]
      %v463 = vld [vmem:[%s258 + $0x1] sm:$0xff]
      %v464 = vld [vmem:[%s258 + $0x9] sm:$0xff]
      %v465 = vld [vmem:[%s258 + $0x19] sm:$0xff]
      %v466 = vld [vmem:[%s258 + $0x21] sm:$0xff]
      %v467 = vld [vmem:[%s258 + $0x31] sm:$0xff]
      %v468 = vld [vmem:[%s258 + $0x39] sm:$0xff]
      %v469 = vld [vmem:[%s258 + $0x49] sm:$0xff]
      %v470 = vld [vmem:[%s258 + $0x51] sm:$0xff]
      %v471 = vld [vmem:[%s258 + $0x61] sm:$0xff]
      %v472 = vld [vmem:[%s258 + $0x69] sm:$0xff]
      %v473 = vld [vmem:[%s258 + $0x79] sm:$0xff]
      %v474 = vld [vmem:[%s258 + $0x81] sm:$0xff]
      %v475 = vld [vmem:[%s258 + $0x91] sm:$0xff]
      %v476 = vld [vmem:[%s258 + $0x99] sm:$0xff]
      %v477 = vld [vmem:[%s258 + $0xa9] sm:$0xff]
      %v478 = vld [vmem:[%s258 + $0xb1] sm:$0xff]
      %v479 = vld [vmem:[%s258 + $0xc1] sm:$0xff]
      %v480 = vld [vmem:[%s258 + $0xc9] sm:$0xff]
      %v481 = vld [vmem:[%s258 + $0xd9] sm:$0xff]
      %v482 = vld [vmem:[%s258 + $0xe1] sm:$0xff]
      %v483 = vld [vmem:[%s258 + $0xf1] sm:$0xff]
      %v484 = vld [vmem:[%s258 + $0xf9] sm:$0xff]
      %v485 = vld [vmem:[%s258 + $0x109] sm:$0xff]
      %v486 = vld [vmem:[%s258 + $0x111] sm:$0xff]
      %v487 = vld [vmem:[%s258 + $0x121] sm:$0xff]
      %v488 = vld [vmem:[%s258 + $0x129] sm:$0xff]
      %v489 = vld [vmem:[%s258 + $0x139] sm:$0xff]
      %v490 = vld [vmem:[%s258 + $0x141] sm:$0xff]
      %v491 = vld [vmem:[%s258 + $0x151] sm:$0xff]
      %v492 = vld [vmem:[%s258 + $0x159] sm:$0xff]
      %v493 = vld [vmem:[%s258 + $0x169] sm:$0xff]
      %v494 = vld [vmem:[%s258 + $0x171] sm:$0xff]
      %v495 = vld [vmem:[%s258 + $0x2] sm:$0xff]
      %v496 = vld [vmem:[%s258 + $0xa] sm:$0xff]
      %v497 = vld [vmem:[%s258 + $0x1a] sm:$0xff]
      %v498 = vld [vmem:[%s258 + $0x22] sm:$0xff]
      %v499 = vld [vmem:[%s258 + $0x32] sm:$0xff]
      %v500 = vld [vmem:[%s258 + $0x3a] sm:$0xff]
      %v501 = vld [vmem:[%s258 + $0x4a] sm:$0xff]
      %v502 = vld [vmem:[%s258 + $0x52] sm:$0xff]
      %v503 = vld [vmem:[%s258 + $0x62] sm:$0xff]
      %v504 = vld [vmem:[%s258 + $0x6a] sm:$0xff]
      %v505 = vld [vmem:[%s258 + $0x7a] sm:$0xff]
      %v506 = vld [vmem:[%s258 + $0x82] sm:$0xff]
      %v507 = vld [vmem:[%s258 + $0x92] sm:$0xff]
      %v508 = vld [vmem:[%s258 + $0x9a] sm:$0xff]
      %v509 = vld [vmem:[%s258 + $0xaa] sm:$0xff]
      %v510 = vld [vmem:[%s258 + $0xb2] sm:$0xff]
      %v511 = vld [vmem:[%s258 + $0xc2] sm:$0xff]
      %v512 = vld [vmem:[%s258 + $0xca] sm:$0xff]
      %v513 = vld [vmem:[%s258 + $0xda] sm:$0xff]
      %v514 = vld [vmem:[%s258 + $0xe2] sm:$0xff]
      %v515 = vld [vmem:[%s258 + $0xf2] sm:$0xff]
      %v516 = vld [vmem:[%s258 + $0xfa] sm:$0xff]
      %v517 = vld [vmem:[%s258 + $0x10a] sm:$0xff]
      %v518 = vld [vmem:[%s258 + $0x112] sm:$0xff]
      %v519 = vld [vmem:[%s258 + $0x122] sm:$0xff]
      %v520 = vld [vmem:[%s258 + $0x12a] sm:$0xff]
      %v521 = vld [vmem:[%s258 + $0x13a] sm:$0xff]
      %v522 = vld [vmem:[%s258 + $0x142] sm:$0xff]
      %v523 = vld [vmem:[%s258 + $0x152] sm:$0xff]
      %v524 = vld [vmem:[%s258 + $0x15a] sm:$0xff]
      %v525 = vld [vmem:[%s258 + $0x16a] sm:$0xff]
      %v526 = vld [vmem:[%s258 + $0x172] sm:$0xff]
      %s527 = scalar_lea.vmem [#allocation2], 48
      %v528 = vld [vmem:[%s527] sm:$0xff]
      %v529 = vld [vmem:[%s527 + $0x8] sm:$0xff]
      %v530 = vld [vmem:[%s527 + $0x18] sm:$0xff]
      %v531 = vld [vmem:[%s527 + $0x20] sm:$0xff]
      %v532 = vld [vmem:[%s527 + $0x30] sm:$0xff]
      %v533 = vld [vmem:[%s527 + $0x38] sm:$0xff]
      %v534 = vld [vmem:[%s527 + $0x48] sm:$0xff]
      %v535 = vld [vmem:[%s527 + $0x50] sm:$0xff]
      %v536 = vld [vmem:[%s527 + $0x60] sm:$0xff]
      %v537 = vld [vmem:[%s527 + $0x68] sm:$0xff]
      %v538 = vld [vmem:[%s527 + $0x78] sm:$0xff]
      %v539 = vld [vmem:[%s527 + $0x80] sm:$0xff]
      %v540 = vld [vmem:[%s527 + $0x90] sm:$0xff]
      %v541 = vld [vmem:[%s527 + $0x98] sm:$0xff]
      %v542 = vld [vmem:[%s527 + $0xa8] sm:$0xff]
      %v543 = vld [vmem:[%s527 + $0xb0] sm:$0xff]
      %v544 = vld [vmem:[%s527 + $0xc0] sm:$0xff]
      %v545 = vld [vmem:[%s527 + $0xc8] sm:$0xff]
      %v546 = vld [vmem:[%s527 + $0xd8] sm:$0xff]
      %v547 = vld [vmem:[%s527 + $0xe0] sm:$0xff]
      %v548 = vld [vmem:[%s527 + $0xf0] sm:$0xff]
      %v549 = vld [vmem:[%s527 + $0xf8] sm:$0xff]
      %v550 = vld [vmem:[%s527 + $0x108] sm:$0xff]
      %v551 = vld [vmem:[%s527 + $0x110] sm:$0xff]
      %v552 = vld [vmem:[%s527 + $0x120] sm:$0xff]
      %v553 = vld [vmem:[%s527 + $0x128] sm:$0xff]
      %v554 = vld [vmem:[%s527 + $0x138] sm:$0xff]
      %v555 = vld [vmem:[%s527 + $0x140] sm:$0xff]
      %v556 = vld [vmem:[%s527 + $0x150] sm:$0xff]
      %v557 = vld [vmem:[%s527 + $0x158] sm:$0xff]
      %v558 = vld [vmem:[%s527 + $0x168] sm:$0xff]
      %v559 = vld [vmem:[%s527 + $0x170] sm:$0xff]
      %v560 = vld [vmem:[%s527 + $0x1] sm:$0xff]
      %v561 = vld [vmem:[%s527 + $0x9] sm:$0xff]
      %v562 = vld [vmem:[%s527 + $0x19] sm:$0xff]
      %v563 = vld [vmem:[%s527 + $0x21] sm:$0xff]
      %v564 = vld [vmem:[%s527 + $0x31] sm:$0xff]
      %v565 = vld [vmem:[%s527 + $0x39] sm:$0xff]
      %v566 = vld [vmem:[%s527 + $0x49] sm:$0xff]
      %v567 = vld [vmem:[%s527 + $0x51] sm:$0xff]
      %v568 = vld [vmem:[%s527 + $0x61] sm:$0xff]
      %v569 = vld [vmem:[%s527 + $0x69] sm:$0xff]
      %v570 = vld [vmem:[%s527 + $0x79] sm:$0xff]
      %v571 = vld [vmem:[%s527 + $0x81] sm:$0xff]
      %v572 = vld [vmem:[%s527 + $0x91] sm:$0xff]
      %v573 = vld [vmem:[%s527 + $0x99] sm:$0xff]
      %v574 = vld [vmem:[%s527 + $0xa9] sm:$0xff]
      %v575 = vld [vmem:[%s527 + $0xb1] sm:$0xff]
      %v576 = vld [vmem:[%s527 + $0xc1] sm:$0xff]
      %v577 = vld [vmem:[%s527 + $0xc9] sm:$0xff]
      %v578 = vld [vmem:[%s527 + $0xd9] sm:$0xff]
      %v579 = vld [vmem:[%s527 + $0xe1] sm:$0xff]
      %v580 = vld [vmem:[%s527 + $0xf1] sm:$0xff]
      %v581 = vld [vmem:[%s527 + $0xf9] sm:$0xff]
      %v582 = vld [vmem:[%s527 + $0x109] sm:$0xff]
      %v583 = vld [vmem:[%s527 + $0x111] sm:$0xff]
      %v584 = vld [vmem:[%s527 + $0x121] sm:$0xff]
      %v585 = vld [vmem:[%s527 + $0x129] sm:$0xff]
      %v586 = vld [vmem:[%s527 + $0x139] sm:$0xff]
      %v587 = vld [vmem:[%s527 + $0x141] sm:$0xff]
      %v588 = vld [vmem:[%s527 + $0x151] sm:$0xff]
      %v589 = vld [vmem:[%s527 + $0x159] sm:$0xff]
      %v590 = vld [vmem:[%s527 + $0x169] sm:$0xff]
      %v591 = vld [vmem:[%s527 + $0x171] sm:$0xff]
      %v592 = vld [vmem:[%s527 + $0x2] sm:$0xff]
      %v593 = vld [vmem:[%s527 + $0xa] sm:$0xff]
      %v594 = vld [vmem:[%s527 + $0x1a] sm:$0xff]
      %v595 = vld [vmem:[%s527 + $0x22] sm:$0xff]
      %v596 = vld [vmem:[%s527 + $0x32] sm:$0xff]
      %v597 = vld [vmem:[%s527 + $0x3a] sm:$0xff]
      %v598 = vld [vmem:[%s527 + $0x4a] sm:$0xff]
      %v599 = vld [vmem:[%s527 + $0x52] sm:$0xff]
      %v600 = vld [vmem:[%s527 + $0x62] sm:$0xff]
      %v601 = vld [vmem:[%s527 + $0x6a] sm:$0xff]
      %v602 = vld [vmem:[%s527 + $0x7a] sm:$0xff]
      %v603 = vld [vmem:[%s527 + $0x82] sm:$0xff]
      %v604 = vld [vmem:[%s527 + $0x92] sm:$0xff]
      %v605 = vld [vmem:[%s527 + $0x9a] sm:$0xff]
      %v606 = vld [vmem:[%s527 + $0xaa] sm:$0xff]
      %v607 = vld [vmem:[%s527 + $0xb2] sm:$0xff]
      %v608 = vld [vmem:[%s527 + $0xc2] sm:$0xff]
      %v609 = vld [vmem:[%s527 + $0xca] sm:$0xff]
      %v610 = vld [vmem:[%s527 + $0xda] sm:$0xff]
      %v611 = vld [vmem:[%s527 + $0xe2] sm:$0xff]
      %v612 = vld [vmem:[%s527 + $0xf2] sm:$0xff]
      %v613 = vld [vmem:[%s527 + $0xfa] sm:$0xff]
      %v614 = vld [vmem:[%s527 + $0x10a] sm:$0xff]
      %v615 = vld [vmem:[%s527 + $0x112] sm:$0xff]
      %v616 = vld [vmem:[%s527 + $0x122] sm:$0xff]
      %v617 = vld [vmem:[%s527 + $0x12a] sm:$0xff]
      %v618 = vld [vmem:[%s527 + $0x13a] sm:$0xff]
      %v619 = vld [vmem:[%s527 + $0x142] sm:$0xff]
      %v620 = vld [vmem:[%s527 + $0x152] sm:$0xff]
      %v621 = vld [vmem:[%s527 + $0x15a] sm:$0xff]
      %v622 = vld [vmem:[%s527 + $0x16a] sm:$0xff]
      %v623 = vld [vmem:[%s527 + $0x172] sm:$0xff]
      %656 = vrot.lane.b32.xlu0 %v367, 16
      %v657 = vpop.permute.xlu0 %656
      %658 = vrot.lane.b32.xlu0 %v368, 16
      %v659 = vpop.permute.xlu0 %658
      %660 = vrot.lane.b32.xlu0 %v369, 16
      %v661 = vpop.permute.xlu0 %660
      %662 = vrot.lane.b32.xlu0 %v370, 16
      %v663 = vpop.permute.xlu0 %662
      %664 = vrot.lane.b32.xlu0 %v371, 16
      %v665 = vpop.permute.xlu0 %664
      %666 = vrot.lane.b32.xlu0 %v372, 16
      %v667 = vpop.permute.xlu0 %666
      %668 = vrot.lane.b32.xlu0 %v373, 16
      %v669 = vpop.permute.xlu0 %668
      %670 = vrot.lane.b32.xlu0 %v374, 16
      %v671 = vpop.permute.xlu0 %670
      %672 = vrot.lane.b32.xlu0 %v375, 16
      %v673 = vpop.permute.xlu0 %672
      %674 = vrot.lane.b32.xlu0 %v376, 16
      %v675 = vpop.permute.xlu0 %674
      %676 = vrot.lane.b32.xlu0 %v377, 16
      %v677 = vpop.permute.xlu0 %676
      %678 = vrot.lane.b32.xlu0 %v378, 16
      %v679 = vpop.permute.xlu0 %678
      %680 = vrot.lane.b32.xlu0 %v379, 16
      %v681 = vpop.permute.xlu0 %680
      %682 = vrot.lane.b32.xlu0 %v380, 16
      %v683 = vpop.permute.xlu0 %682
      %684 = vrot.lane.b32.xlu0 %v381, 16
      %v685 = vpop.permute.xlu0 %684
      %686 = vrot.lane.b32.xlu0 %v382, 16
      %v687 = vpop.permute.xlu0 %686
      %688 = vrot.lane.b32.xlu0 %v383, 16
      %v689 = vpop.permute.xlu0 %688
      %690 = vrot.lane.b32.xlu0 %v384, 16
      %v691 = vpop.permute.xlu0 %690
      %692 = vrot.lane.b32.xlu0 %v385, 16
      %v693 = vpop.permute.xlu0 %692
      %694 = vrot.lane.b32.xlu0 %v386, 16
      %v695 = vpop.permute.xlu0 %694
      %696 = vrot.lane.b32.xlu0 %v387, 16
      %v697 = vpop.permute.xlu0 %696
      %698 = vrot.lane.b32.xlu0 %v388, 16
      %v699 = vpop.permute.xlu0 %698
      %700 = vrot.lane.b32.xlu0 %v389, 16
      %v701 = vpop.permute.xlu0 %700
      %702 = vrot.lane.b32.xlu0 %v390, 16
      %v703 = vpop.permute.xlu0 %702
      %704 = vrot.lane.b32.xlu0 %v391, 16
      %v705 = vpop.permute.xlu0 %704
      %706 = vrot.lane.b32.xlu0 %v392, 16
      %v707 = vpop.permute.xlu0 %706
      %708 = vrot.lane.b32.xlu0 %v393, 16
      %v709 = vpop.permute.xlu0 %708
      %710 = vrot.lane.b32.xlu0 %v394, 16
      %v711 = vpop.permute.xlu0 %710
      %712 = vrot.lane.b32.xlu0 %v395, 16
      %v713 = vpop.permute.xlu0 %712
      %714 = vrot.lane.b32.xlu0 %v396, 16
      %v715 = vpop.permute.xlu0 %714
      %716 = vrot.lane.b32.xlu0 %v397, 16
      %v717 = vpop.permute.xlu0 %716
      %718 = vrot.lane.b32.xlu0 %v398, 16
      %v719 = vpop.permute.xlu0 %718
      %784 = vrot.lane.b32.xlu0 %v399, 32
      %v785 = vpop.permute.xlu0 %784
      %786 = vrot.lane.b32.xlu0 %v400, 32
      %v787 = vpop.permute.xlu0 %786
      %788 = vrot.lane.b32.xlu0 %v401, 32
      %v789 = vpop.permute.xlu0 %788
      %790 = vrot.lane.b32.xlu0 %v402, 32
      %v791 = vpop.permute.xlu0 %790
      %792 = vrot.lane.b32.xlu0 %v403, 32
      %v793 = vpop.permute.xlu0 %792
      %794 = vrot.lane.b32.xlu0 %v404, 32
      %v795 = vpop.permute.xlu0 %794
      %796 = vrot.lane.b32.xlu0 %v405, 32
      %v797 = vpop.permute.xlu0 %796
      %798 = vrot.lane.b32.xlu0 %v406, 32
      %v799 = vpop.permute.xlu0 %798
      %800 = vrot.lane.b32.xlu0 %v407, 32
      %v801 = vpop.permute.xlu0 %800
      %802 = vrot.lane.b32.xlu0 %v408, 32
      %v803 = vpop.permute.xlu0 %802
      %804 = vrot.lane.b32.xlu0 %v409, 32
      %v805 = vpop.permute.xlu0 %804
      %806 = vrot.lane.b32.xlu0 %v410, 32
      %v807 = vpop.permute.xlu0 %806
      %808 = vrot.lane.b32.xlu0 %v411, 32
      %v809 = vpop.permute.xlu0 %808
      %810 = vrot.lane.b32.xlu0 %v412, 32
      %v811 = vpop.permute.xlu0 %810
      %812 = vrot.lane.b32.xlu0 %v413, 32
      %v813 = vpop.permute.xlu0 %812
      %814 = vrot.lane.b32.xlu0 %v414, 32
      %v815 = vpop.permute.xlu0 %814
      %816 = vrot.lane.b32.xlu0 %v415, 32
      %v817 = vpop.permute.xlu0 %816
      %818 = vrot.lane.b32.xlu0 %v416, 32
      %v819 = vpop.permute.xlu0 %818
      %820 = vrot.lane.b32.xlu0 %v417, 32
      %v821 = vpop.permute.xlu0 %820
      %822 = vrot.lane.b32.xlu0 %v418, 32
      %v823 = vpop.permute.xlu0 %822
      %824 = vrot.lane.b32.xlu0 %v419, 32
      %v825 = vpop.permute.xlu0 %824
      %826 = vrot.lane.b32.xlu0 %v420, 32
      %v827 = vpop.permute.xlu0 %826
      %828 = vrot.lane.b32.xlu0 %v421, 32
      %v829 = vpop.permute.xlu0 %828
      %830 = vrot.lane.b32.xlu0 %v422, 32
      %v831 = vpop.permute.xlu0 %830
      %832 = vrot.lane.b32.xlu0 %v423, 32
      %v833 = vpop.permute.xlu0 %832
      %834 = vrot.lane.b32.xlu0 %v424, 32
      %v835 = vpop.permute.xlu0 %834
      %836 = vrot.lane.b32.xlu0 %v425, 32
      %v837 = vpop.permute.xlu0 %836
      %838 = vrot.lane.b32.xlu0 %v426, 32
      %v839 = vpop.permute.xlu0 %838
      %840 = vrot.lane.b32.xlu0 %v427, 32
      %v841 = vpop.permute.xlu0 %840
      %842 = vrot.lane.b32.xlu0 %v428, 32
      %v843 = vpop.permute.xlu0 %842
      %844 = vrot.lane.b32.xlu0 %v429, 32
      %v845 = vpop.permute.xlu0 %844
      %846 = vrot.lane.b32.xlu0 %v430, 32
      %v847 = vpop.permute.xlu0 %846
      %912 = vrot.lane.b32.xlu0 %v431, 48
      %v913 = vpop.permute.xlu0 %912
      %914 = vrot.lane.b32.xlu0 %v432, 48
      %v915 = vpop.permute.xlu0 %914
      %916 = vrot.lane.b32.xlu0 %v433, 48
      %v917 = vpop.permute.xlu0 %916
      %918 = vrot.lane.b32.xlu0 %v434, 48
      %v919 = vpop.permute.xlu0 %918
      %920 = vrot.lane.b32.xlu0 %v435, 48
      %v921 = vpop.permute.xlu0 %920
      %922 = vrot.lane.b32.xlu0 %v436, 48
      %v923 = vpop.permute.xlu0 %922
      %924 = vrot.lane.b32.xlu0 %v437, 48
      %v925 = vpop.permute.xlu0 %924
      %926 = vrot.lane.b32.xlu0 %v438, 48
      %v927 = vpop.permute.xlu0 %926
      %928 = vrot.lane.b32.xlu0 %v439, 48
      %v929 = vpop.permute.xlu0 %928
      %930 = vrot.lane.b32.xlu0 %v440, 48
      %v931 = vpop.permute.xlu0 %930
      %932 = vrot.lane.b32.xlu0 %v441, 48
      %v933 = vpop.permute.xlu0 %932
      %934 = vrot.lane.b32.xlu0 %v442, 48
      %v935 = vpop.permute.xlu0 %934
      %936 = vrot.lane.b32.xlu0 %v443, 48
      %v937 = vpop.permute.xlu0 %936
      %938 = vrot.lane.b32.xlu0 %v444, 48
      %v939 = vpop.permute.xlu0 %938
      %940 = vrot.lane.b32.xlu0 %v445, 48
      %v941 = vpop.permute.xlu0 %940
      %942 = vrot.lane.b32.xlu0 %v446, 48
      %v943 = vpop.permute.xlu0 %942
      %944 = vrot.lane.b32.xlu0 %v447, 48
      %v945 = vpop.permute.xlu0 %944
      %946 = vrot.lane.b32.xlu0 %v448, 48
      %v947 = vpop.permute.xlu0 %946
      %948 = vrot.lane.b32.xlu0 %v449, 48
      %v949 = vpop.permute.xlu0 %948
      %950 = vrot.lane.b32.xlu0 %v450, 48
      %v951 = vpop.permute.xlu0 %950
      %952 = vrot.lane.b32.xlu0 %v451, 48
      %v953 = vpop.permute.xlu0 %952
      %954 = vrot.lane.b32.xlu0 %v452, 48
      %v955 = vpop.permute.xlu0 %954
      %956 = vrot.lane.b32.xlu0 %v453, 48
      %v957 = vpop.permute.xlu0 %956
      %958 = vrot.lane.b32.xlu0 %v454, 48
      %v959 = vpop.permute.xlu0 %958
      %960 = vrot.lane.b32.xlu0 %v455, 48
      %v961 = vpop.permute.xlu0 %960
      %962 = vrot.lane.b32.xlu0 %v456, 48
      %v963 = vpop.permute.xlu0 %962
      %964 = vrot.lane.b32.xlu0 %v457, 48
      %v965 = vpop.permute.xlu0 %964
      %966 = vrot.lane.b32.xlu0 %v458, 48
      %v967 = vpop.permute.xlu0 %966
      %968 = vrot.lane.b32.xlu0 %v459, 48
      %v969 = vpop.permute.xlu0 %968
      %970 = vrot.lane.b32.xlu0 %v460, 48
      %v971 = vpop.permute.xlu0 %970
      %972 = vrot.lane.b32.xlu0 %v461, 48
      %v973 = vpop.permute.xlu0 %972
      %974 = vrot.lane.b32.xlu0 %v462, 48
      %v975 = vpop.permute.xlu0 %974
      %1040 = vrot.lane.b32.xlu0 %v463, 64
      %v1041 = vpop.permute.xlu0 %1040
      %1042 = vrot.lane.b32.xlu0 %v464, 64
      %v1043 = vpop.permute.xlu0 %1042
      %1044 = vrot.lane.b32.xlu0 %v465, 64
      %v1045 = vpop.permute.xlu0 %1044
      %1046 = vrot.lane.b32.xlu0 %v466, 64
      %v1047 = vpop.permute.xlu0 %1046
      %1048 = vrot.lane.b32.xlu0 %v467, 64
      %v1049 = vpop.permute.xlu0 %1048
      %1050 = vrot.lane.b32.xlu0 %v468, 64
      %v1051 = vpop.permute.xlu0 %1050
      %1052 = vrot.lane.b32.xlu0 %v469, 64
      %v1053 = vpop.permute.xlu0 %1052
      %1054 = vrot.lane.b32.xlu0 %v470, 64
      %v1055 = vpop.permute.xlu0 %1054
      %1056 = vrot.lane.b32.xlu0 %v471, 64
      %v1057 = vpop.permute.xlu0 %1056
      %1058 = vrot.lane.b32.xlu0 %v472, 64
      %v1059 = vpop.permute.xlu0 %1058
      %1060 = vrot.lane.b32.xlu0 %v473, 64
      %v1061 = vpop.permute.xlu0 %1060
      %1062 = vrot.lane.b32.xlu0 %v474, 64
      %v1063 = vpop.permute.xlu0 %1062
      %1064 = vrot.lane.b32.xlu0 %v475, 64
      %v1065 = vpop.permute.xlu0 %1064
      %1066 = vrot.lane.b32.xlu0 %v476, 64
      %v1067 = vpop.permute.xlu0 %1066
      %1068 = vrot.lane.b32.xlu0 %v477, 64
      %v1069 = vpop.permute.xlu0 %1068
      %1070 = vrot.lane.b32.xlu0 %v478, 64
      %v1071 = vpop.permute.xlu0 %1070
      %1072 = vrot.lane.b32.xlu0 %v479, 64
      %v1073 = vpop.permute.xlu0 %1072
      %1074 = vrot.lane.b32.xlu0 %v480, 64
      %v1075 = vpop.permute.xlu0 %1074
      %1076 = vrot.lane.b32.xlu0 %v481, 64
      %v1077 = vpop.permute.xlu0 %1076
      %1078 = vrot.lane.b32.xlu0 %v482, 64
      %v1079 = vpop.permute.xlu0 %1078
      %1080 = vrot.lane.b32.xlu0 %v483, 64
      %v1081 = vpop.permute.xlu0 %1080
      %1082 = vrot.lane.b32.xlu0 %v484, 64
      %v1083 = vpop.permute.xlu0 %1082
      %1084 = vrot.lane.b32.xlu0 %v485, 64
      %v1085 = vpop.permute.xlu0 %1084
      %1086 = vrot.lane.b32.xlu0 %v486, 64
      %v1087 = vpop.permute.xlu0 %1086
      %1088 = vrot.lane.b32.xlu0 %v487, 64
      %v1089 = vpop.permute.xlu0 %1088
      %1090 = vrot.lane.b32.xlu0 %v488, 64
      %v1091 = vpop.permute.xlu0 %1090
      %1092 = vrot.lane.b32.xlu0 %v489, 64
      %v1093 = vpop.permute.xlu0 %1092
      %1094 = vrot.lane.b32.xlu0 %v490, 64
      %v1095 = vpop.permute.xlu0 %1094
      %1096 = vrot.lane.b32.xlu0 %v491, 64
      %v1097 = vpop.permute.xlu0 %1096
      %1098 = vrot.lane.b32.xlu0 %v492, 64
      %v1099 = vpop.permute.xlu0 %1098
      %1100 = vrot.lane.b32.xlu0 %v493, 64
      %v1101 = vpop.permute.xlu0 %1100
      %1102 = vrot.lane.b32.xlu0 %v494, 64
      %v1103 = vpop.permute.xlu0 %1102
      %1168 = vrot.lane.b32.xlu0 %v495, 80
      %v1169 = vpop.permute.xlu0 %1168
      %1170 = vrot.lane.b32.xlu0 %v496, 80
      %v1171 = vpop.permute.xlu0 %1170
      %1172 = vrot.lane.b32.xlu0 %v497, 80
      %v1173 = vpop.permute.xlu0 %1172
      %1174 = vrot.lane.b32.xlu0 %v498, 80
      %v1175 = vpop.permute.xlu0 %1174
      %1176 = vrot.lane.b32.xlu0 %v499, 80
      %v1177 = vpop.permute.xlu0 %1176
      %1178 = vrot.lane.b32.xlu0 %v500, 80
      %v1179 = vpop.permute.xlu0 %1178
      %1180 = vrot.lane.b32.xlu0 %v501, 80
      %v1181 = vpop.permute.xlu0 %1180
      %1182 = vrot.lane.b32.xlu0 %v502, 80
      %v1183 = vpop.permute.xlu0 %1182
      %1184 = vrot.lane.b32.xlu0 %v503, 80
      %v1185 = vpop.permute.xlu0 %1184
      %1186 = vrot.lane.b32.xlu0 %v504, 80
      %v1187 = vpop.permute.xlu0 %1186
      %1188 = vrot.lane.b32.xlu0 %v505, 80
      %v1189 = vpop.permute.xlu0 %1188
      %1190 = vrot.lane.b32.xlu0 %v506, 80
      %v1191 = vpop.permute.xlu0 %1190
      %1192 = vrot.lane.b32.xlu0 %v507, 80
      %v1193 = vpop.permute.xlu0 %1192
      %1194 = vrot.lane.b32.xlu0 %v508, 80
      %v1195 = vpop.permute.xlu0 %1194
      %1196 = vrot.lane.b32.xlu0 %v509, 80
      %v1197 = vpop.permute.xlu0 %1196
      %1198 = vrot.lane.b32.xlu0 %v510, 80
      %v1199 = vpop.permute.xlu0 %1198
      %1200 = vrot.lane.b32.xlu0 %v511, 80
      %v1201 = vpop.permute.xlu0 %1200
      %1202 = vrot.lane.b32.xlu0 %v512, 80
      %v1203 = vpop.permute.xlu0 %1202
      %1204 = vrot.lane.b32.xlu0 %v513, 80
      %v1205 = vpop.permute.xlu0 %1204
      %1206 = vrot.lane.b32.xlu0 %v514, 80
      %v1207 = vpop.permute.xlu0 %1206
      %1208 = vrot.lane.b32.xlu0 %v515, 80
      %v1209 = vpop.permute.xlu0 %1208
      %1210 = vrot.lane.b32.xlu0 %v516, 80
      %v1211 = vpop.permute.xlu0 %1210
      %1212 = vrot.lane.b32.xlu0 %v517, 80
      %v1213 = vpop.permute.xlu0 %1212
      %1214 = vrot.lane.b32.xlu0 %v518, 80
      %v1215 = vpop.permute.xlu0 %1214
      %1216 = vrot.lane.b32.xlu0 %v519, 80
      %v1217 = vpop.permute.xlu0 %1216
      %1218 = vrot.lane.b32.xlu0 %v520, 80
      %v1219 = vpop.permute.xlu0 %1218
      %1220 = vrot.lane.b32.xlu0 %v521, 80
      %v1221 = vpop.permute.xlu0 %1220
      %1222 = vrot.lane.b32.xlu0 %v522, 80
      %v1223 = vpop.permute.xlu0 %1222
      %1224 = vrot.lane.b32.xlu0 %v523, 80
      %v1225 = vpop.permute.xlu0 %1224
      %1226 = vrot.lane.b32.xlu0 %v524, 80
      %v1227 = vpop.permute.xlu0 %1226
      %1228 = vrot.lane.b32.xlu0 %v525, 80
      %v1229 = vpop.permute.xlu0 %1228
      %1230 = vrot.lane.b32.xlu0 %v526, 80
      %v1231 = vpop.permute.xlu0 %1230
      %1296 = vrot.lane.b32.xlu0 %v528, 96
      %v1297 = vpop.permute.xlu0 %1296
      %1298 = vrot.lane.b32.xlu0 %v529, 96
      %v1299 = vpop.permute.xlu0 %1298
      %1300 = vrot.lane.b32.xlu0 %v530, 96
      %v1301 = vpop.permute.xlu0 %1300
      %1302 = vrot.lane.b32.xlu0 %v531, 96
      %v1303 = vpop.permute.xlu0 %1302
      %1304 = vrot.lane.b32.xlu0 %v532, 96
      %v1305 = vpop.permute.xlu0 %1304
      %1306 = vrot.lane.b32.xlu0 %v533, 96
      %v1307 = vpop.permute.xlu0 %1306
      %1308 = vrot.lane.b32.xlu0 %v534, 96
      %v1309 = vpop.permute.xlu0 %1308
      %1310 = vrot.lane.b32.xlu0 %v535, 96
      %v1311 = vpop.permute.xlu0 %1310
      %1312 = vrot.lane.b32.xlu0 %v536, 96
      %v1313 = vpop.permute.xlu0 %1312
      %1314 = vrot.lane.b32.xlu0 %v537, 96
      %v1315 = vpop.permute.xlu0 %1314
      %1316 = vrot.lane.b32.xlu0 %v538, 96
      %v1317 = vpop.permute.xlu0 %1316
      %1318 = vrot.lane.b32.xlu0 %v539, 96
      %v1319 = vpop.permute.xlu0 %1318
      %1320 = vrot.lane.b32.xlu0 %v540, 96
      %v1321 = vpop.permute.xlu0 %1320
      %1322 = vrot.lane.b32.xlu0 %v541, 96
      %v1323 = vpop.permute.xlu0 %1322
      %1324 = vrot.lane.b32.xlu0 %v542, 96
      %v1325 = vpop.permute.xlu0 %1324
      %1326 = vrot.lane.b32.xlu0 %v543, 96
      %v1327 = vpop.permute.xlu0 %1326
      %1328 = vrot.lane.b32.xlu0 %v544, 96
      %v1329 = vpop.permute.xlu0 %1328
      %1330 = vrot.lane.b32.xlu0 %v545, 96
      %v1331 = vpop.permute.xlu0 %1330
      %1332 = vrot.lane.b32.xlu0 %v546, 96
      %v1333 = vpop.permute.xlu0 %1332
      %1334 = vrot.lane.b32.xlu0 %v547, 96
      %v1335 = vpop.permute.xlu0 %1334
      %1336 = vrot.lane.b32.xlu0 %v548, 96
      %v1337 = vpop.permute.xlu0 %1336
      %1338 = vrot.lane.b32.xlu0 %v549, 96
      %v1339 = vpop.permute.xlu0 %1338
      %1340 = vrot.lane.b32.xlu0 %v550, 96
      %v1341 = vpop.permute.xlu0 %1340
      %1342 = vrot.lane.b32.xlu0 %v551, 96
      %v1343 = vpop.permute.xlu0 %1342
      %1344 = vrot.lane.b32.xlu0 %v552, 96
      %v1345 = vpop.permute.xlu0 %1344
      %1346 = vrot.lane.b32.xlu0 %v553, 96
      %v1347 = vpop.permute.xlu0 %1346
      %1348 = vrot.lane.b32.xlu0 %v554, 96
      %v1349 = vpop.permute.xlu0 %1348
      %1350 = vrot.lane.b32.xlu0 %v555, 96
      %v1351 = vpop.permute.xlu0 %1350
      %1352 = vrot.lane.b32.xlu0 %v556, 96
      %v1353 = vpop.permute.xlu0 %1352
      %1354 = vrot.lane.b32.xlu0 %v557, 96
      %v1355 = vpop.permute.xlu0 %1354
      %1356 = vrot.lane.b32.xlu0 %v558, 96
      %v1357 = vpop.permute.xlu0 %1356
      %1358 = vrot.lane.b32.xlu0 %v559, 96
      %v1359 = vpop.permute.xlu0 %1358
      %1424 = vrot.lane.b32.xlu0 %v560, 112
      %v1425 = vpop.permute.xlu0 %1424
      %1426 = vrot.lane.b32.xlu0 %v561, 112
      %v1427 = vpop.permute.xlu0 %1426
      %1428 = vrot.lane.b32.xlu0 %v562, 112
      %v1429 = vpop.permute.xlu0 %1428
      %1430 = vrot.lane.b32.xlu0 %v563, 112
      %v1431 = vpop.permute.xlu0 %1430
      %1432 = vrot.lane.b32.xlu0 %v564, 112
      %v1433 = vpop.permute.xlu0 %1432
      %1434 = vrot.lane.b32.xlu0 %v565, 112
      %v1435 = vpop.permute.xlu0 %1434
      %1436 = vrot.lane.b32.xlu0 %v566, 112
      %v1437 = vpop.permute.xlu0 %1436
      %1438 = vrot.lane.b32.xlu0 %v567, 112
      %v1439 = vpop.permute.xlu0 %1438
      %1440 = vrot.lane.b32.xlu0 %v568, 112
      %v1441 = vpop.permute.xlu0 %1440
      %1442 = vrot.lane.b32.xlu0 %v569, 112
      %v1443 = vpop.permute.xlu0 %1442
      %1444 = vrot.lane.b32.xlu0 %v570, 112
      %v1445 = vpop.permute.xlu0 %1444
      %1446 = vrot.lane.b32.xlu0 %v571, 112
      %v1447 = vpop.permute.xlu0 %1446
      %1448 = vrot.lane.b32.xlu0 %v572, 112
      %v1449 = vpop.permute.xlu0 %1448
      %1450 = vrot.lane.b32.xlu0 %v573, 112
      %v1451 = vpop.permute.xlu0 %1450
      %1452 = vrot.lane.b32.xlu0 %v574, 112
      %v1453 = vpop.permute.xlu0 %1452
      %1454 = vrot.lane.b32.xlu0 %v575, 112
      %v1455 = vpop.permute.xlu0 %1454
      %1456 = vrot.lane.b32.xlu0 %v576, 112
      %v1457 = vpop.permute.xlu0 %1456
      %1458 = vrot.lane.b32.xlu0 %v577, 112
      %v1459 = vpop.permute.xlu0 %1458
      %1460 = vrot.lane.b32.xlu0 %v578, 112
      %v1461 = vpop.permute.xlu0 %1460
      %1462 = vrot.lane.b32.xlu0 %v579, 112
      %v1463 = vpop.permute.xlu0 %1462
      %1464 = vrot.lane.b32.xlu0 %v580, 112
      %v1465 = vpop.permute.xlu0 %1464
      %1466 = vrot.lane.b32.xlu0 %v581, 112
      %v1467 = vpop.permute.xlu0 %1466
      %1468 = vrot.lane.b32.xlu0 %v582, 112
      %v1469 = vpop.permute.xlu0 %1468
      %1470 = vrot.lane.b32.xlu0 %v583, 112
      %v1471 = vpop.permute.xlu0 %1470
      %1472 = vrot.lane.b32.xlu0 %v584, 112
      %v1473 = vpop.permute.xlu0 %1472
      %1474 = vrot.lane.b32.xlu0 %v585, 112
      %v1475 = vpop.permute.xlu0 %1474
      %1476 = vrot.lane.b32.xlu0 %v586, 112
      %v1477 = vpop.permute.xlu0 %1476
      %1478 = vrot.lane.b32.xlu0 %v587, 112
      %v1479 = vpop.permute.xlu0 %1478
      %1480 = vrot.lane.b32.xlu0 %v588, 112
      %v1481 = vpop.permute.xlu0 %1480
      %1482 = vrot.lane.b32.xlu0 %v589, 112
      %v1483 = vpop.permute.xlu0 %1482
      %1484 = vrot.lane.b32.xlu0 %v590, 112
      %v1485 = vpop.permute.xlu0 %1484
      %1486 = vrot.lane.b32.xlu0 %v591, 112
      %v1487 = vpop.permute.xlu0 %1486
      %v1520 = vsel %vm259, %v335, %v657
      %v1521 = vsel %vm259, %v336, %v659
      %v1522 = vsel %vm259, %v337, %v661
      %v1523 = vsel %vm259, %v338, %v663
      %v1524 = vsel %vm259, %v339, %v665
      %v1525 = vsel %vm259, %v340, %v667
      %v1526 = vsel %vm259, %v341, %v669
      %v1527 = vsel %vm259, %v342, %v671
      %v1528 = vsel %vm259, %v343, %v673
      %v1529 = vsel %vm259, %v344, %v675
      %v1530 = vsel %vm259, %v345, %v677
      %v1531 = vsel %vm259, %v346, %v679
      %v1532 = vsel %vm259, %v347, %v681
      %v1533 = vsel %vm259, %v348, %v683
      %v1534 = vsel %vm259, %v349, %v685
      %v1535 = vsel %vm259, %v350, %v687
      %v1536 = vsel %vm259, %v351, %v689
      %v1537 = vsel %vm259, %v352, %v691
      %v1538 = vsel %vm259, %v353, %v693
      %v1539 = vsel %vm259, %v354, %v695
      %v1540 = vsel %vm259, %v355, %v697
      %v1541 = vsel %vm259, %v356, %v699
      %v1542 = vsel %vm259, %v357, %v701
      %v1543 = vsel %vm259, %v358, %v703
      %v1544 = vsel %vm259, %v359, %v705
      %v1545 = vsel %vm259, %v360, %v707
      %v1546 = vsel %vm259, %v361, %v709
      %v1547 = vsel %vm259, %v362, %v711
      %v1548 = vsel %vm259, %v363, %v713
      %v1549 = vsel %vm259, %v364, %v715
      %v1550 = vsel %vm259, %v365, %v717
      %v1551 = vsel %vm259, %v366, %v719
      %vm1552 = vcmask 261120
      %v1553 = vsel %vm1552, %v1520, %v785
      %v1554 = vsel %vm1552, %v1521, %v787
      %v1555 = vsel %vm1552, %v1522, %v789
      %v1556 = vsel %vm1552, %v1523, %v791
      %v1557 = vsel %vm1552, %v1524, %v793
      %v1558 = vsel %vm1552, %v1525, %v795
      %v1559 = vsel %vm1552, %v1526, %v797
      %v1560 = vsel %vm1552, %v1527, %v799
      %v1561 = vsel %vm1552, %v1528, %v801
      %v1562 = vsel %vm1552, %v1529, %v803
      %v1563 = vsel %vm1552, %v1530, %v805
      %v1564 = vsel %vm1552, %v1531, %v807
      %v1565 = vsel %vm1552, %v1532, %v809
      %v1566 = vsel %vm1552, %v1533, %v811
      %v1567 = vsel %vm1552, %v1534, %v813
      %v1568 = vsel %vm1552, %v1535, %v815
      %v1569 = vsel %vm1552, %v1536, %v817
      %v1570 = vsel %vm1552, %v1537, %v819
      %v1571 = vsel %vm1552, %v1538, %v821
      %v1572 = vsel %vm1552, %v1539, %v823
      %v1573 = vsel %vm1552, %v1540, %v825
      %v1574 = vsel %vm1552, %v1541, %v827
      %v1575 = vsel %vm1552, %v1542, %v829
      %v1576 = vsel %vm1552, %v1543, %v831
      %v1577 = vsel %vm1552, %v1544, %v833
      %v1578 = vsel %vm1552, %v1545, %v835
      %v1579 = vsel %vm1552, %v1546, %v837
      %v1580 = vsel %vm1552, %v1547, %v839
      %v1581 = vsel %vm1552, %v1548, %v841
      %v1582 = vsel %vm1552, %v1549, %v843
      %v1583 = vsel %vm1552, %v1550, %v845
      %v1584 = vsel %vm1552, %v1551, %v847
      %vm1585 = vcmask 392192
      %v1586 = vsel %vm1585, %v1553, %v913
      %v1587 = vsel %vm1585, %v1554, %v915
      %v1588 = vsel %vm1585, %v1555, %v917
      %v1589 = vsel %vm1585, %v1556, %v919
      %v1590 = vsel %vm1585, %v1557, %v921
      %v1591 = vsel %vm1585, %v1558, %v923
      %v1592 = vsel %vm1585, %v1559, %v925
      %v1593 = vsel %vm1585, %v1560, %v927
      %v1594 = vsel %vm1585, %v1561, %v929
      %v1595 = vsel %vm1585, %v1562, %v931
      %v1596 = vsel %vm1585, %v1563, %v933
      %v1597 = vsel %vm1585, %v1564, %v935
      %v1598 = vsel %vm1585, %v1565, %v937
      %v1599 = vsel %vm1585, %v1566, %v939
      %v1600 = vsel %vm1585, %v1567, %v941
      %v1601 = vsel %vm1585, %v1568, %v943
      %v1602 = vsel %vm1585, %v1569, %v945
      %v1603 = vsel %vm1585, %v1570, %v947
      %v1604 = vsel %vm1585, %v1571, %v949
      %v1605 = vsel %vm1585, %v1572, %v951
      %v1606 = vsel %vm1585, %v1573, %v953
      %v1607 = vsel %vm1585, %v1574, %v955
      %v1608 = vsel %vm1585, %v1575, %v957
      %v1609 = vsel %vm1585, %v1576, %v959
      %v1610 = vsel %vm1585, %v1577, %v961
      %v1611 = vsel %vm1585, %v1578, %v963
      %v1612 = vsel %vm1585, %v1579, %v965
      %v1613 = vsel %vm1585, %v1580, %v967
      %v1614 = vsel %vm1585, %v1581, %v969
      %v1615 = vsel %vm1585, %v1582, %v971
      %v1616 = vsel %vm1585, %v1583, %v973
      %v1617 = vsel %vm1585, %v1584, %v975
      %vm1618 = vcmask 523264
      %v1619 = vsel %vm1618, %v1586, %v1041
      %v1620 = vsel %vm1618, %v1587, %v1043
      %v1621 = vsel %vm1618, %v1588, %v1045
      %v1622 = vsel %vm1618, %v1589, %v1047
      %v1623 = vsel %vm1618, %v1590, %v1049
      %v1624 = vsel %vm1618, %v1591, %v1051
      %v1625 = vsel %vm1618, %v1592, %v1053
      %v1626 = vsel %vm1618, %v1593, %v1055
      %v1627 = vsel %vm1618, %v1594, %v1057
      %v1628 = vsel %vm1618, %v1595, %v1059
      %v1629 = vsel %vm1618, %v1596, %v1061
      %v1630 = vsel %vm1618, %v1597, %v1063
      %v1631 = vsel %vm1618, %v1598, %v1065
      %v1632 = vsel %vm1618, %v1599, %v1067
      %v1633 = vsel %vm1618, %v1600, %v1069
      %v1634 = vsel %vm1618, %v1601, %v1071
      %v1635 = vsel %vm1618, %v1602, %v1073
      %v1636 = vsel %vm1618, %v1603, %v1075
      %v1637 = vsel %vm1618, %v1604, %v1077
      %v1638 = vsel %vm1618, %v1605, %v1079
      %v1639 = vsel %vm1618, %v1606, %v1081
      %v1640 = vsel %vm1618, %v1607, %v1083
      %v1641 = vsel %vm1618, %v1608, %v1085
      %v1642 = vsel %vm1618, %v1609, %v1087
      %v1643 = vsel %vm1618, %v1610, %v1089
      %v1644 = vsel %vm1618, %v1611, %v1091
      %v1645 = vsel %vm1618, %v1612, %v1093
      %v1646 = vsel %vm1618, %v1613, %v1095
      %v1647 = vsel %vm1618, %v1614, %v1097
      %v1648 = vsel %vm1618, %v1615, %v1099
      %v1649 = vsel %vm1618, %v1616, %v1101
      %v1650 = vsel %vm1618, %v1617, %v1103
      %vm1651 = vcmask 654336
      %v1652 = vsel %vm1651, %v1619, %v1169
      %v1653 = vsel %vm1651, %v1620, %v1171
      %v1654 = vsel %vm1651, %v1621, %v1173
      %v1655 = vsel %vm1651, %v1622, %v1175
      %v1656 = vsel %vm1651, %v1623, %v1177
      %v1657 = vsel %vm1651, %v1624, %v1179
      %v1658 = vsel %vm1651, %v1625, %v1181
      %v1659 = vsel %vm1651, %v1626, %v1183
      %v1660 = vsel %vm1651, %v1627, %v1185
      %v1661 = vsel %vm1651, %v1628, %v1187
      %v1662 = vsel %vm1651, %v1629, %v1189
      %v1663 = vsel %vm1651, %v1630, %v1191
      %v1664 = vsel %vm1651, %v1631, %v1193
      %v1665 = vsel %vm1651, %v1632, %v1195
      %v1666 = vsel %vm1651, %v1633, %v1197
      %v1667 = vsel %vm1651, %v1634, %v1199
      %v1668 = vsel %vm1651, %v1635, %v1201
      %v1669 = vsel %vm1651, %v1636, %v1203
      %v1670 = vsel %vm1651, %v1637, %v1205
      %v1671 = vsel %vm1651, %v1638, %v1207
      %v1672 = vsel %vm1651, %v1639, %v1209
      %v1673 = vsel %vm1651, %v1640, %v1211
      %v1674 = vsel %vm1651, %v1641, %v1213
      %v1675 = vsel %vm1651, %v1642, %v1215
      %v1676 = vsel %vm1651, %v1643, %v1217
      %v1677 = vsel %vm1651, %v1644, %v1219
      %v1678 = vsel %vm1651, %v1645, %v1221
      %v1679 = vsel %vm1651, %v1646, %v1223
      %v1680 = vsel %vm1651, %v1647, %v1225
      %v1681 = vsel %vm1651, %v1648, %v1227
      %v1682 = vsel %vm1651, %v1649, %v1229
      %v1683 = vsel %vm1651, %v1650, %v1231
      %vm1684 = vcmask 785408
      %v1685 = vsel %vm1684, %v1652, %v1297
      %v1686 = vsel %vm1684, %v1653, %v1299
      %v1687 = vsel %vm1684, %v1654, %v1301
      %v1688 = vsel %vm1684, %v1655, %v1303
      %v1689 = vsel %vm1684, %v1656, %v1305
      %v1690 = vsel %vm1684, %v1657, %v1307
      %v1691 = vsel %vm1684, %v1658, %v1309
      %v1692 = vsel %vm1684, %v1659, %v1311
      %v1693 = vsel %vm1684, %v1660, %v1313
      %v1694 = vsel %vm1684, %v1661, %v1315
      %v1695 = vsel %vm1684, %v1662, %v1317
      %v1696 = vsel %vm1684, %v1663, %v1319
      %v1697 = vsel %vm1684, %v1664, %v1321
      %v1698 = vsel %vm1684, %v1665, %v1323
      %v1699 = vsel %vm1684, %v1666, %v1325
      %v1700 = vsel %vm1684, %v1667, %v1327
      %v1701 = vsel %vm1684, %v1668, %v1329
      %v1702 = vsel %vm1684, %v1669, %v1331
      %v1703 = vsel %vm1684, %v1670, %v1333
      %v1704 = vsel %vm1684, %v1671, %v1335
      %v1705 = vsel %vm1684, %v1672, %v1337
      %v1706 = vsel %vm1684, %v1673, %v1339
      %v1707 = vsel %vm1684, %v1674, %v1341
      %v1708 = vsel %vm1684, %v1675, %v1343
      %v1709 = vsel %vm1684, %v1676, %v1345
      %v1710 = vsel %vm1684, %v1677, %v1347
      %v1711 = vsel %vm1684, %v1678, %v1349
      %v1712 = vsel %vm1684, %v1679, %v1351
      %v1713 = vsel %vm1684, %v1680, %v1353
      %v1714 = vsel %vm1684, %v1681, %v1355
      %v1715 = vsel %vm1684, %v1682, %v1357
      %v1716 = vsel %vm1684, %v1683, %v1359
      %vm1717 = vcmask 916480
      %v1718 = vsel %vm1717, %v1685, %v1425
      %v1719 = vsel %vm1717, %v1686, %v1427
      %v1720 = vsel %vm1717, %v1687, %v1429
      %v1721 = vsel %vm1717, %v1688, %v1431
      %v1722 = vsel %vm1717, %v1689, %v1433
      %v1723 = vsel %vm1717, %v1690, %v1435
      %v1724 = vsel %vm1717, %v1691, %v1437
      %v1725 = vsel %vm1717, %v1692, %v1439
      %v1726 = vsel %vm1717, %v1693, %v1441
      %v1727 = vsel %vm1717, %v1694, %v1443
      %v1728 = vsel %vm1717, %v1695, %v1445
      %v1729 = vsel %vm1717, %v1696, %v1447
      %v1730 = vsel %vm1717, %v1697, %v1449
      %v1731 = vsel %vm1717, %v1698, %v1451
      %v1732 = vsel %vm1717, %v1699, %v1453
      %v1733 = vsel %vm1717, %v1700, %v1455
      %v1734 = vsel %vm1717, %v1701, %v1457
      %v1735 = vsel %vm1717, %v1702, %v1459
      %v1736 = vsel %vm1717, %v1703, %v1461
      %v1737 = vsel %vm1717, %v1704, %v1463
      %v1738 = vsel %vm1717, %v1705, %v1465
      %v1739 = vsel %vm1717, %v1706, %v1467
      %v1740 = vsel %vm1717, %v1707, %v1469
      %v1741 = vsel %vm1717, %v1708, %v1471
      %v1742 = vsel %vm1717, %v1709, %v1473
      %v1743 = vsel %vm1717, %v1710, %v1475
      %v1744 = vsel %vm1717, %v1711, %v1477
      %v1745 = vsel %vm1717, %v1712, %v1479
      %v1746 = vsel %vm1717, %v1713, %v1481
      %v1747 = vsel %vm1717, %v1714, %v1483
      %v1748 = vsel %vm1717, %v1715, %v1485
      %v1749 = vsel %vm1717, %v1716, %v1487
      %v1750 = vpack.c.bf16 %v1719, %v1718
      %v1751 = vpack.c.bf16 %v593, %v592
      %v1752 = vpack.c.bf16 %v1721, %v1720
      %v1753 = vpack.c.bf16 %v595, %v594
      %v1754 = vpack.c.bf16 %v1723, %v1722
      %v1755 = vpack.c.bf16 %v597, %v596
      %v1756 = vpack.c.bf16 %v1725, %v1724
      %v1757 = vpack.c.bf16 %v599, %v598
      %v1758 = vpack.c.bf16 %v1727, %v1726
      %v1759 = vpack.c.bf16 %v601, %v600
      %v1760 = vpack.c.bf16 %v1729, %v1728
      %v1761 = vpack.c.bf16 %v603, %v602
      %v1762 = vpack.c.bf16 %v1731, %v1730
      %v1763 = vpack.c.bf16 %v605, %v604
      %v1764 = vpack.c.bf16 %v1733, %v1732
      %v1765 = vpack.c.bf16 %v607, %v606
      %v1766 = vpack.c.bf16 %v1735, %v1734
      %v1767 = vpack.c.bf16 %v609, %v608
      %v1768 = vpack.c.bf16 %v1737, %v1736
      %v1769 = vpack.c.bf16 %v611, %v610
      %v1770 = vpack.c.bf16 %v1739, %v1738
      %v1771 = vpack.c.bf16 %v613, %v612
      %v1772 = vpack.c.bf16 %v1741, %v1740
      %v1773 = vpack.c.bf16 %v615, %v614
      %v1774 = vpack.c.bf16 %v1743, %v1742
      %v1775 = vpack.c.bf16 %v617, %v616
      %v1776 = vpack.c.bf16 %v1745, %v1744
      %v1777 = vpack.c.bf16 %v619, %v618
      %v1778 = vpack.c.bf16 %v1747, %v1746
      %v1779 = vpack.c.bf16 %v621, %v620
      %v1780 = vpack.c.bf16 %v1749, %v1748
      %v1781 = vpack.c.bf16 %v623, %v622
      %v1782 = vld [vmem:[%s2] sm:$0x1]
      %v1784 = vperm.slane %v1782, 0
      %v1786 = vld [vmem:[%s1] sm:$0xf]
      %v1787 = vld [vmem:[%s1 + $0x4] sm:$0xf]
      %v1788 = vld [vmem:[%s1 + $0x8] sm:$0xf]
      %v1789 = vld [vmem:[%s1 + $0xc] sm:$0xf]
      %v1790 = vld [vmem:[%s1 + $0x10] sm:$0xf]
      %v1791 = vld [vmem:[%s1 + $0x14] sm:$0xf]
      %v1792 = vld [vmem:[%s1 + $0x18] sm:$0xf]
      %v1793 = vld [vmem:[%s1 + $0x1c] sm:$0xf]
      %v1794 = vld [vmem:[%s1 + $0x20] sm:$0xf]
      %v1795 = vld [vmem:[%s1 + $0x24] sm:$0xf]
      %v1796 = vld [vmem:[%s1 + $0x28] sm:$0xf]
      %v1797 = vld [vmem:[%s1 + $0x2c] sm:$0xf]
      %v1798 = vld [vmem:[%s1 + $0x30] sm:$0xf]
      %v1799 = vld [vmem:[%s1 + $0x34] sm:$0xf]
      %v1800 = vld [vmem:[%s1 + $0x38] sm:$0xf]
      %v1801 = vld [vmem:[%s1 + $0x3c] sm:$0xf]
      %v1802 = vld [vmem:[%s1 + $0x40] sm:$0xf]
      %v1803 = vld [vmem:[%s1 + $0x44] sm:$0xf]
      %v1822 = vunpack.c.l.b16 %v1786
      %v1823 = vunpack.c.l.b16 %v1787
      %v1824 = vunpack.c.l.b16 %v1788
      %v1825 = vunpack.c.l.b16 %v1789
      %v1826 = vunpack.c.l.b16 %v1790
      %v1827 = vunpack.c.l.b16 %v1791
      %v1828 = vunpack.c.l.b16 %v1792
      %v1829 = vunpack.c.l.b16 %v1793
      %v1830 = vunpack.c.l.b16 %v1794
      %v1831 = vunpack.c.l.b16 %v1795
      %v1832 = vunpack.c.l.b16 %v1796
      %v1833 = vunpack.c.l.b16 %v1797
      %v1834 = vunpack.c.l.b16 %v1798
      %v1835 = vunpack.c.l.b16 %v1799
      %v1836 = vunpack.c.l.b16 %v1800
      %v1837 = vunpack.c.l.b16 %v1801
      %v1838 = vunpack.c.l.b16 %v1802
      %v1839 = vunpack.c.l.b16 %v1803
      %v1840 = vpack.c.b16 %v1823, %v1822
      %v1841 = vpack.c.b16 %v1825, %v1824
      %v1842 = vpack.c.b16 %v1827, %v1826
      %v1843 = vpack.c.b16 %v1829, %v1828
      %v1844 = vpack.c.b16 %v1831, %v1830
      %v1845 = vpack.c.b16 %v1833, %v1832
      %v1846 = vpack.c.b16 %v1835, %v1834
      %v1847 = vpack.c.b16 %v1837, %v1836
      %v1848 = vpack.c.b16 %v1839, %v1838
      %v1859 = vsel %vm259, %v1751, 0
      %v1862 = vsel %vm259, %v1753, 0
      %v1865 = vsel %vm259, %v1755, 0
      %v1868 = vsel %vm259, %v1757, 0
      %v1871 = vsel %vm259, %v1759, 0
      %v1874 = vsel %vm259, %v1761, 0
      %v1877 = vsel %vm259, %v1763, 0
      %v1880 = vsel %vm259, %v1765, 0
      %v1883 = vsel %vm259, %v1767, 0
      %v1886 = vsel %vm259, %v1769, 0
      %v1889 = vsel %vm259, %v1771, 0
      %v1892 = vsel %vm259, %v1773, 0
      %v1895 = vsel %vm259, %v1775, 0
      %v1898 = vsel %vm259, %v1777, 0
      %v1901 = vsel %vm259, %v1779, 0
      %v1904 = vsel %vm259, %v1781, 0
      %1906 = vmatpush.bf16.msra.mxu0 %v1847
      %1907 = vmatpush.bf16.msra.mxu0 %v1846
      %1908 = vmatpush.bf16.msra.mxu0 %v1845
      %1909 = vmatpush.bf16.msra.mxu0 %v1844
      %1910 = vmatpush.bf16.msra.mxu0 %v1843
      %1911 = vmatpush.bf16.msra.mxu0 %v1842
      %1912 = vmatpush.bf16.msra.mxu0 %v1841
      %1913 = vmatpush.bf16.msra.mxu0 %v1840
      %1914 = vmatmul.bf16.gmra.mxu0 %v1750
      %v1915 = vpop.f32.mrf.mxu0
      %v1916 = vadd.f32 0.0, %v1915
      %v1917 = vpop.f32.mrf.mxu0
      %v1918 = vadd.f32 0.0, %v1917
      %1919 = vmatmul.bf16.gmra.mxu0 %v1752
      %v1920 = vpop.f32.mrf.mxu0
      %v1921 = vadd.f32 0.0, %v1920
      %v1922 = vpop.f32.mrf.mxu0
      %v1923 = vadd.f32 0.0, %v1922
      %1924 = vmatmul.bf16.gmra.mxu0 %v1754
      %v1925 = vpop.f32.mrf.mxu0
      %v1926 = vadd.f32 0.0, %v1925
      %v1927 = vpop.f32.mrf.mxu0
      %v1928 = vadd.f32 0.0, %v1927
      %1929 = vmatmul.bf16.gmra.mxu0 %v1756
      %v1930 = vpop.f32.mrf.mxu0
      %v1931 = vadd.f32 0.0, %v1930
      %v1932 = vpop.f32.mrf.mxu0
      %v1933 = vadd.f32 0.0, %v1932
      %1934 = vmatmul.bf16.gmra.mxu0 %v1758
      %v1935 = vpop.f32.mrf.mxu0
      %v1936 = vadd.f32 0.0, %v1935
      %v1937 = vpop.f32.mrf.mxu0
      %v1938 = vadd.f32 0.0, %v1937
      %1939 = vmatmul.bf16.gmra.mxu0 %v1760
      %v1940 = vpop.f32.mrf.mxu0
      %v1941 = vadd.f32 0.0, %v1940
      %v1942 = vpop.f32.mrf.mxu0
      %v1943 = vadd.f32 0.0, %v1942
      %1944 = vmatmul.bf16.gmra.mxu0 %v1762
      %v1945 = vpop.f32.mrf.mxu0
      %v1946 = vadd.f32 0.0, %v1945
      %v1947 = vpop.f32.mrf.mxu0
      %v1948 = vadd.f32 0.0, %v1947
      %1949 = vmatmul.bf16.gmra.mxu0 %v1764
      %v1950 = vpop.f32.mrf.mxu0
      %v1951 = vadd.f32 0.0, %v1950
      %v1952 = vpop.f32.mrf.mxu0
      %v1953 = vadd.f32 0.0, %v1952
      %1954 = vmatmul.bf16.gmra.mxu0 %v1766
      %v1955 = vpop.f32.mrf.mxu0
      %v1956 = vadd.f32 0.0, %v1955
      %v1957 = vpop.f32.mrf.mxu0
      %v1958 = vadd.f32 0.0, %v1957
      %1959 = vmatmul.bf16.gmra.mxu0 %v1768
      %v1960 = vpop.f32.mrf.mxu0
      %v1961 = vadd.f32 0.0, %v1960
      %v1962 = vpop.f32.mrf.mxu0
      %v1963 = vadd.f32 0.0, %v1962
      %1964 = vmatmul.bf16.gmra.mxu0 %v1770
      %v1965 = vpop.f32.mrf.mxu0
      %v1966 = vadd.f32 0.0, %v1965
      %v1967 = vpop.f32.mrf.mxu0
      %v1968 = vadd.f32 0.0, %v1967
      %1969 = vmatmul.bf16.gmra.mxu0 %v1772
      %v1970 = vpop.f32.mrf.mxu0
      %v1971 = vadd.f32 0.0, %v1970
      %v1972 = vpop.f32.mrf.mxu0
      %v1973 = vadd.f32 0.0, %v1972
      %1974 = vmatmul.bf16.gmra.mxu0 %v1774
      %v1975 = vpop.f32.mrf.mxu0
      %v1976 = vadd.f32 0.0, %v1975
      %v1977 = vpop.f32.mrf.mxu0
      %v1978 = vadd.f32 0.0, %v1977
      %1979 = vmatmul.bf16.gmra.mxu0 %v1776
      %v1980 = vpop.f32.mrf.mxu0
      %v1981 = vadd.f32 0.0, %v1980
      %v1982 = vpop.f32.mrf.mxu0
      %v1983 = vadd.f32 0.0, %v1982
      %1984 = vmatmul.bf16.gmra.mxu0 %v1778
      %v1985 = vpop.f32.mrf.mxu0
      %v1986 = vadd.f32 0.0, %v1985
      %v1987 = vpop.f32.mrf.mxu0
      %v1988 = vadd.f32 0.0, %v1987
      %1989 = vmatmul.bf16.gmra.mxu0 %v1780
      %v1990 = vpop.f32.mrf.mxu0
      %v1991 = vadd.f32 0.0, %v1990
      %v1992 = vpop.f32.mrf.mxu0
      %v1993 = vadd.f32 0.0, %v1992
      %1994 = vdwg.mxu0
      %1995 = vmatpush.bf16.msra.mxu0 0
      %1996 = vmatpush.bf16.msra.mxu0 0
      %1997 = vmatpush.bf16.msra.mxu0 0
      %1998 = vmatpush.bf16.msra.mxu0 0
      %1999 = vmatpush.bf16.msra.mxu0 0
      %2000 = vmatpush.bf16.msra.mxu0 0
      %2001 = vmatpush.bf16.msra.mxu0 0
      %2002 = vmatpush.bf16.msra.mxu0 %v1848
      %2003 = vmatmul.bf16.gmra.mxu0 %v1859
      %v2004 = vpop.f32.mrf.mxu0
      %v2005 = vadd.f32 %v1916, %v2004
      %v2006 = vpop.f32.mrf.mxu0
      %v2007 = vadd.f32 %v1918, %v2006
      %2008 = vmatmul.bf16.gmra.mxu0 %v1862
      %v2009 = vpop.f32.mrf.mxu0
      %v2010 = vadd.f32 %v1921, %v2009
      %v2011 = vpop.f32.mrf.mxu0
      %v2012 = vadd.f32 %v1923, %v2011
      %2013 = vmatmul.bf16.gmra.mxu0 %v1865
      %v2014 = vpop.f32.mrf.mxu0
      %v2015 = vadd.f32 %v1926, %v2014
      %v2016 = vpop.f32.mrf.mxu0
      %v2017 = vadd.f32 %v1928, %v2016
      %2018 = vmatmul.bf16.gmra.mxu0 %v1868
      %v2019 = vpop.f32.mrf.mxu0
      %v2020 = vadd.f32 %v1931, %v2019
      %v2021 = vpop.f32.mrf.mxu0
      %v2022 = vadd.f32 %v1933, %v2021
      %2023 = vmatmul.bf16.gmra.mxu0 %v1871
      %v2024 = vpop.f32.mrf.mxu0
      %v2025 = vadd.f32 %v1936, %v2024
      %v2026 = vpop.f32.mrf.mxu0
      %v2027 = vadd.f32 %v1938, %v2026
      %2028 = vmatmul.bf16.gmra.mxu0 %v1874
      %v2029 = vpop.f32.mrf.mxu0
      %v2030 = vadd.f32 %v1941, %v2029
      %v2031 = vpop.f32.mrf.mxu0
      %v2032 = vadd.f32 %v1943, %v2031
      %2033 = vmatmul.bf16.gmra.mxu0 %v1877
      %v2034 = vpop.f32.mrf.mxu0
      %v2035 = vadd.f32 %v1946, %v2034
      %v2036 = vpop.f32.mrf.mxu0
      %v2037 = vadd.f32 %v1948, %v2036
      %2038 = vmatmul.bf16.gmra.mxu0 %v1880
      %v2039 = vpop.f32.mrf.mxu0
      %v2040 = vadd.f32 %v1951, %v2039
      %v2041 = vpop.f32.mrf.mxu0
      %v2042 = vadd.f32 %v1953, %v2041
      %2043 = vmatmul.bf16.gmra.mxu0 %v1883
      %v2044 = vpop.f32.mrf.mxu0
      %v2045 = vadd.f32 %v1956, %v2044
      %v2046 = vpop.f32.mrf.mxu0
      %v2047 = vadd.f32 %v1958, %v2046
      %2048 = vmatmul.bf16.gmra.mxu0 %v1886
      %v2049 = vpop.f32.mrf.mxu0
      %v2050 = vadd.f32 %v1961, %v2049
      %v2051 = vpop.f32.mrf.mxu0
      %v2052 = vadd.f32 %v1963, %v2051
      %2053 = vmatmul.bf16.gmra.mxu0 %v1889
      %v2054 = vpop.f32.mrf.mxu0
      %v2055 = vadd.f32 %v1966, %v2054
      %v2056 = vpop.f32.mrf.mxu0
      %v2057 = vadd.f32 %v1968, %v2056
      %2058 = vmatmul.bf16.gmra.mxu0 %v1892
      %v2059 = vpop.f32.mrf.mxu0
      %v2060 = vadd.f32 %v1971, %v2059
      %v2061 = vpop.f32.mrf.mxu0
      %v2062 = vadd.f32 %v1973, %v2061
      %2063 = vmatmul.bf16.gmra.mxu0 %v1895
      %v2064 = vpop.f32.mrf.mxu0
      %v2065 = vadd.f32 %v1976, %v2064
      %v2066 = vpop.f32.mrf.mxu0
      %v2067 = vadd.f32 %v1978, %v2066
      %2068 = vmatmul.bf16.gmra.mxu0 %v1898
      %v2069 = vpop.f32.mrf.mxu0
      %v2070 = vadd.f32 %v1981, %v2069
      %v2071 = vpop.f32.mrf.mxu0
      %v2072 = vadd.f32 %v1983, %v2071
      %2073 = vmatmul.bf16.gmra.mxu0 %v1901
      %v2074 = vpop.f32.mrf.mxu0
      %v2075 = vadd.f32 %v1986, %v2074
      %v2076 = vpop.f32.mrf.mxu0
      %v2077 = vadd.f32 %v1988, %v2076
      %2078 = vmatmul.bf16.gmra.mxu0 %v1904
      %v2079 = vpop.f32.mrf.mxu0
      %v2080 = vadd.f32 %v1991, %v2079
      %v2081 = vpop.f32.mrf.mxu0
      %v2082 = vadd.f32 %v1993, %v2081
      %2083 = vdwg.mxu0
      %v2084 = vadd.f32 %v1784, %v2005
      %v2085 = vadd.f32 %v1784, %v2007
      %v2086 = vadd.f32 %v1784, %v2010
      %v2087 = vadd.f32 %v1784, %v2012
      %v2088 = vadd.f32 %v1784, %v2015
      %v2089 = vadd.f32 %v1784, %v2017
      %v2090 = vadd.f32 %v1784, %v2020
      %v2091 = vadd.f32 %v1784, %v2022
      %v2092 = vadd.f32 %v1784, %v2025
      %v2093 = vadd.f32 %v1784, %v2027
      %v2094 = vadd.f32 %v1784, %v2030
      %v2095 = vadd.f32 %v1784, %v2032
      %v2096 = vadd.f32 %v1784, %v2035
      %v2097 = vadd.f32 %v1784, %v2037
      %v2098 = vadd.f32 %v1784, %v2040
      %v2099 = vadd.f32 %v1784, %v2042
      %v2100 = vadd.f32 %v1784, %v2045
      %v2101 = vadd.f32 %v1784, %v2047
      %v2102 = vadd.f32 %v1784, %v2050
      %v2103 = vadd.f32 %v1784, %v2052
      %v2104 = vadd.f32 %v1784, %v2055
      %v2105 = vadd.f32 %v1784, %v2057
      %v2106 = vadd.f32 %v1784, %v2060
      %v2107 = vadd.f32 %v1784, %v2062
      %v2108 = vadd.f32 %v1784, %v2065
      %v2109 = vadd.f32 %v1784, %v2067
      %v2110 = vadd.f32 %v1784, %v2070
      %v2111 = vadd.f32 %v1784, %v2072
      %v2112 = vadd.f32 %v1784, %v2075
      %v2113 = vadd.f32 %v1784, %v2077
      %v2114 = vadd.f32 %v1784, %v2080
      %v2115 = vadd.f32 %v1784, %v2082
      %vm2116 = vcmp.ge.f32.partialorder %v2084, 0.0
      %vm2117 = vcmp.ge.f32.partialorder %v2085, 0.0
      %vm2118 = vcmp.ge.f32.partialorder %v2086, 0.0
      %vm2119 = vcmp.ge.f32.partialorder %v2087, 0.0
      %vm2120 = vcmp.ge.f32.partialorder %v2088, 0.0
      %vm2121 = vcmp.ge.f32.partialorder %v2089, 0.0
      %vm2122 = vcmp.ge.f32.partialorder %v2090, 0.0
      %vm2123 = vcmp.ge.f32.partialorder %v2091, 0.0
      %vm2124 = vcmp.ge.f32.partialorder %v2092, 0.0
      %vm2125 = vcmp.ge.f32.partialorder %v2093, 0.0
      %vm2126 = vcmp.ge.f32.partialorder %v2094, 0.0
      %vm2127 = vcmp.ge.f32.partialorder %v2095, 0.0
      %vm2128 = vcmp.ge.f32.partialorder %v2096, 0.0
      %vm2129 = vcmp.ge.f32.partialorder %v2097, 0.0
      %vm2130 = vcmp.ge.f32.partialorder %v2098, 0.0
      %vm2131 = vcmp.ge.f32.partialorder %v2099, 0.0
      %vm2132 = vcmp.ge.f32.partialorder %v2100, 0.0
      %vm2133 = vcmp.ge.f32.partialorder %v2101, 0.0
      %vm2134 = vcmp.ge.f32.partialorder %v2102, 0.0
      %vm2135 = vcmp.ge.f32.partialorder %v2103, 0.0
      %vm2136 = vcmp.ge.f32.partialorder %v2104, 0.0
      %vm2137 = vcmp.ge.f32.partialorder %v2105, 0.0
      %vm2138 = vcmp.ge.f32.partialorder %v2106, 0.0
      %vm2139 = vcmp.ge.f32.partialorder %v2107, 0.0
      %vm2140 = vcmp.ge.f32.partialorder %v2108, 0.0
      %vm2141 = vcmp.ge.f32.partialorder %v2109, 0.0
      %vm2142 = vcmp.ge.f32.partialorder %v2110, 0.0
      %vm2143 = vcmp.ge.f32.partialorder %v2111, 0.0
      %vm2144 = vcmp.ge.f32.partialorder %v2112, 0.0
      %vm2145 = vcmp.ge.f32.partialorder %v2113, 0.0
      %vm2146 = vcmp.ge.f32.partialorder %v2114, 0.0
      %vm2147 = vcmp.ge.f32.partialorder %v2115, 0.0
      %v2148 = vmul.f32 %v2084, 0.01
      %v2149 = vmul.f32 %v2085, 0.01
      %v2150 = vmul.f32 %v2086, 0.01
      %v2151 = vmul.f32 %v2087, 0.01
      %v2152 = vmul.f32 %v2088, 0.01
      %v2153 = vmul.f32 %v2089, 0.01
      %v2154 = vmul.f32 %v2090, 0.01
      %v2155 = vmul.f32 %v2091, 0.01
      %v2156 = vmul.f32 %v2092, 0.01
      %v2157 = vmul.f32 %v2093, 0.01
      %v2158 = vmul.f32 %v2094, 0.01
      %v2159 = vmul.f32 %v2095, 0.01
      %v2160 = vmul.f32 %v2096, 0.01
      %v2161 = vmul.f32 %v2097, 0.01
      %v2162 = vmul.f32 %v2098, 0.01
      %v2163 = vmul.f32 %v2099, 0.01
      %v2164 = vmul.f32 %v2100, 0.01
      %v2165 = vmul.f32 %v2101, 0.01
      %v2166 = vmul.f32 %v2102, 0.01
      %v2167 = vmul.f32 %v2103, 0.01
      %v2168 = vmul.f32 %v2104, 0.01
      %v2169 = vmul.f32 %v2105, 0.01
      %v2170 = vmul.f32 %v2106, 0.01
      %v2171 = vmul.f32 %v2107, 0.01
      %v2172 = vmul.f32 %v2108, 0.01
      %v2173 = vmul.f32 %v2109, 0.01
      %v2174 = vmul.f32 %v2110, 0.01
      %v2175 = vmul.f32 %v2111, 0.01
      %v2176 = vmul.f32 %v2112, 0.01
      %v2177 = vmul.f32 %v2113, 0.01
      %v2178 = vmul.f32 %v2114, 0.01
      %v2179 = vmul.f32 %v2115, 0.01
      %v2180 = vsel %vm2116, %v2084, %v2148
      %v2181 = vsel %vm2117, %v2085, %v2149
      %v2182 = vsel %vm2118, %v2086, %v2150
      %v2183 = vsel %vm2119, %v2087, %v2151
      %v2184 = vsel %vm2120, %v2088, %v2152
      %v2185 = vsel %vm2121, %v2089, %v2153
      %v2186 = vsel %vm2122, %v2090, %v2154
      %v2187 = vsel %vm2123, %v2091, %v2155
      %v2188 = vsel %vm2124, %v2092, %v2156
      %v2189 = vsel %vm2125, %v2093, %v2157
      %v2190 = vsel %vm2126, %v2094, %v2158
      %v2191 = vsel %vm2127, %v2095, %v2159
      %v2192 = vsel %vm2128, %v2096, %v2160
      %v2193 = vsel %vm2129, %v2097, %v2161
      %v2194 = vsel %vm2130, %v2098, %v2162
      %v2195 = vsel %vm2131, %v2099, %v2163
      %v2196 = vsel %vm2132, %v2100, %v2164
      %v2197 = vsel %vm2133, %v2101, %v2165
      %v2198 = vsel %vm2134, %v2102, %v2166
      %v2199 = vsel %vm2135, %v2103, %v2167
      %v2200 = vsel %vm2136, %v2104, %v2168
      %v2201 = vsel %vm2137, %v2105, %v2169
      %v2202 = vsel %vm2138, %v2106, %v2170
      %v2203 = vsel %vm2139, %v2107, %v2171
      %v2204 = vsel %vm2140, %v2108, %v2172
      %v2205 = vsel %vm2141, %v2109, %v2173
      %v2206 = vsel %vm2142, %v2110, %v2174
      %v2207 = vsel %vm2143, %v2111, %v2175
      %v2208 = vsel %vm2144, %v2112, %v2176
      %v2209 = vsel %vm2145, %v2113, %v2177
      %v2210 = vsel %vm2146, %v2114, %v2178
      %v2211 = vsel %vm2147, %v2115, %v2179
      %s2212 = scalar_lea.vmem [#allocation3], 24
      %2213 = vst.msk [vmem:[%s2212 + $0x1] sm:$0xff] %vm1618, %v2180
      %2214 = vst.msk [vmem:[%s2212 + $0x9] sm:$0xff] %vm1618, %v2181
      %2215 = vst.msk [vmem:[%s2212 + $0x19] sm:$0xff] %vm1618, %v2182
      %2216 = vst.msk [vmem:[%s2212 + $0x21] sm:$0xff] %vm1618, %v2183
      %2217 = vst.msk [vmem:[%s2212 + $0x31] sm:$0xff] %vm1618, %v2184
      %2218 = vst.msk [vmem:[%s2212 + $0x39] sm:$0xff] %vm1618, %v2185
      %2219 = vst.msk [vmem:[%s2212 + $0x49] sm:$0xff] %vm1618, %v2186
      %2220 = vst.msk [vmem:[%s2212 + $0x51] sm:$0xff] %vm1618, %v2187
      %2221 = vst.msk [vmem:[%s2212 + $0x61] sm:$0xff] %vm1618, %v2188
      %2222 = vst.msk [vmem:[%s2212 + $0x69] sm:$0xff] %vm1618, %v2189
      %2223 = vst.msk [vmem:[%s2212 + $0x79] sm:$0xff] %vm1618, %v2190
      %2224 = vst.msk [vmem:[%s2212 + $0x81] sm:$0xff] %vm1618, %v2191
      %2225 = vst.msk [vmem:[%s2212 + $0x91] sm:$0xff] %vm1618, %v2192
      %2226 = vst.msk [vmem:[%s2212 + $0x99] sm:$0xff] %vm1618, %v2193
      %2227 = vst.msk [vmem:[%s2212 + $0xa9] sm:$0xff] %vm1618, %v2194
      %2228 = vst.msk [vmem:[%s2212 + $0xb1] sm:$0xff] %vm1618, %v2195
      %2229 = vst.msk [vmem:[%s2212 + $0xc1] sm:$0xff] %vm1618, %v2196
      %2230 = vst.msk [vmem:[%s2212 + $0xc9] sm:$0xff] %vm1618, %v2197
      %2231 = vst.msk [vmem:[%s2212 + $0xd9] sm:$0xff] %vm1618, %v2198
      %2232 = vst.msk [vmem:[%s2212 + $0xe1] sm:$0xff] %vm1618, %v2199
      %2233 = vst.msk [vmem:[%s2212 + $0xf1] sm:$0xff] %vm1618, %v2200
      %2234 = vst.msk [vmem:[%s2212 + $0xf9] sm:$0xff] %vm1618, %v2201
      %2235 = vst.msk [vmem:[%s2212 + $0x109] sm:$0xff] %vm1618, %v2202
      %2236 = vst.msk [vmem:[%s2212 + $0x111] sm:$0xff] %vm1618, %v2203
      %2237 = vst.msk [vmem:[%s2212 + $0x121] sm:$0xff] %vm1618, %v2204
      %2238 = vst.msk [vmem:[%s2212 + $0x129] sm:$0xff] %vm1618, %v2205
      %2239 = vst.msk [vmem:[%s2212 + $0x139] sm:$0xff] %vm1618, %v2206
      %2240 = vst.msk [vmem:[%s2212 + $0x141] sm:$0xff] %vm1618, %v2207
      %2241 = vst.msk [vmem:[%s2212 + $0x151] sm:$0xff] %vm1618, %v2208
      %2242 = vst.msk [vmem:[%s2212 + $0x159] sm:$0xff] %vm1618, %v2209
      %2243 = vst.msk [vmem:[%s2212 + $0x169] sm:$0xff] %vm1618, %v2210
      %2244 = vst.msk [vmem:[%s2212 + $0x171] sm:$0xff] %vm1618, %v2211
      %vm2245 = vcmask 517121
      %2246 = vst.msk [vmem:[%s2212 - $0x1] sm:$0x2] %vm2245, %v2180
      %2247 = vst.msk [vmem:[%s2212 + $0x17] sm:$0x2] %vm2245, %v2182
      %2248 = vst.msk [vmem:[%s2212 + $0x2f] sm:$0x2] %vm2245, %v2184
      %2249 = vst.msk [vmem:[%s2212 + $0x47] sm:$0x2] %vm2245, %v2186
      %2250 = vst.msk [vmem:[%s2212 + $0x5f] sm:$0x2] %vm2245, %v2188
      %2251 = vst.msk [vmem:[%s2212 + $0x77] sm:$0x2] %vm2245, %v2190
      %2252 = vst.msk [vmem:[%s2212 + $0x8f] sm:$0x2] %vm2245, %v2192
      %2253 = vst.msk [vmem:[%s2212 + $0xa7] sm:$0x2] %vm2245, %v2194
      %2254 = vst.msk [vmem:[%s2212 + $0xbf] sm:$0x2] %vm2245, %v2196
      %2255 = vst.msk [vmem:[%s2212 + $0xd7] sm:$0x2] %vm2245, %v2198
      %2256 = vst.msk [vmem:[%s2212 + $0xef] sm:$0x2] %vm2245, %v2200
      %2257 = vst.msk [vmem:[%s2212 + $0x107] sm:$0x2] %vm2245, %v2202
      %2258 = vst.msk [vmem:[%s2212 + $0x11f] sm:$0x2] %vm2245, %v2204
      %2259 = vst.msk [vmem:[%s2212 + $0x137] sm:$0x2] %vm2245, %v2206
      %2260 = vst.msk [vmem:[%s2212 + $0x14f] sm:$0x2] %vm2245, %v2208
      %2261 = vst.msk [vmem:[%s2212 + $0x167] sm:$0x2] %vm2245, %v2210
      %vm2262 = vcmask 522246
      %2263 = vst.msk [vmem:[%s2212 + $0xb] sm:$0x40] %vm2262, %v2181
      %2264 = vst.msk [vmem:[%s2212 + $0x23] sm:$0x40] %vm2262, %v2183
      %2265 = vst.msk [vmem:[%s2212 + $0x3b] sm:$0x40] %vm2262, %v2185
      %2266 = vst.msk [vmem:[%s2212 + $0x53] sm:$0x40] %vm2262, %v2187
      %2267 = vst.msk [vmem:[%s2212 + $0x6b] sm:$0x40] %vm2262, %v2189
      %2268 = vst.msk [vmem:[%s2212 + $0x83] sm:$0x40] %vm2262, %v2191
      %2269 = vst.msk [vmem:[%s2212 + $0x9b] sm:$0x40] %vm2262, %v2193
      %2270 = vst.msk [vmem:[%s2212 + $0xb3] sm:$0x40] %vm2262, %v2195
      %2271 = vst.msk [vmem:[%s2212 + $0xcb] sm:$0x40] %vm2262, %v2197
      %2272 = vst.msk [vmem:[%s2212 + $0xe3] sm:$0x40] %vm2262, %v2199
      %2273 = vst.msk [vmem:[%s2212 + $0xfb] sm:$0x40] %vm2262, %v2201
      %2274 = vst.msk [vmem:[%s2212 + $0x113] sm:$0x40] %vm2262, %v2203
      %2275 = vst.msk [vmem:[%s2212 + $0x12b] sm:$0x40] %vm2262, %v2205
      %2276 = vst.msk [vmem:[%s2212 + $0x143] sm:$0x40] %vm2262, %v2207
      %2277 = vst.msk [vmem:[%s2212 + $0x15b] sm:$0x40] %vm2262, %v2209
      %2278 = vst.msk [vmem:[%s2212 + $0x173] sm:$0x40] %vm2262, %v2211
      %2279 = vst.msk [vmem:[#allocation3 + $0x1] sm:$0xff] %vm1618, %v2182
      %2280 = vst.msk [vmem:[#allocation3 + $0x9] sm:$0xff] %vm1618, %v2183
      %2281 = vst.msk [vmem:[#allocation3 - $0x1] sm:$0x2] %vm2245, %v2182
      %2282 = vst.msk [vmem:[#allocation3 + $0xb] sm:$0x40] %vm2262, %v2183
      %s2283 = scalar_lea.vmem [#allocation3], 408
      %2284 = vst.msk [vmem:[%s2283 + $0x1] sm:$0xff] %vm1618, %v2208
      %2285 = vst.msk [vmem:[%s2283 + $0x9] sm:$0xff] %vm1618, %v2209
      %2286 = vst.msk [vmem:[%s2283 - $0x1] sm:$0x2] %vm2245, %v2208
      %2287 = vst.msk [vmem:[%s2283 + $0xb] sm:$0x40] %vm2262, %v2209
      %v2288 = vld [vmem:[%s4] sm:$0xff]
      %v2289 = vld [vmem:[%s4 + $0x8] sm:$0xff]
      %v2290 = vld [vmem:[%s4 + $0x10] sm:$0xff]
      %v2291 = vld [vmem:[%s4 + $0x18] sm:$0xff]
      %v2292 = vld [vmem:[%s4 + $0x20] sm:$0xff]
      %v2293 = vld [vmem:[%s4 + $0x28] sm:$0xff]
      %v2294 = vld [vmem:[%s4 + $0x30] sm:$0xff]
      %v2295 = vld [vmem:[%s4 + $0x38] sm:$0xff]
      %2297 = vset.pattern.permute.xlu0 0
      %2298 = vperm.xlu0 %2297, %v2288
      %v2299 = vpop.permute.xlu0 %2298
      %2302 = vset.pattern.permute.xlu0 0
      %2303 = vperm.xlu0 %2302, %v2289
      %v2304 = vpop.permute.xlu0 %2303
      %2307 = vset.pattern.permute.xlu0 0
      %2308 = vperm.xlu0 %2307, %v2290
      %v2309 = vpop.permute.xlu0 %2308
      %2312 = vset.pattern.permute.xlu0 0
      %2313 = vperm.xlu0 %2312, %v2291
      %v2314 = vpop.permute.xlu0 %2313
      %2317 = vset.pattern.permute.xlu0 0
      %2318 = vperm.xlu0 %2317, %v2292
      %v2319 = vpop.permute.xlu0 %2318
      %2322 = vset.pattern.permute.xlu0 0
      %2323 = vperm.xlu0 %2322, %v2293
      %v2324 = vpop.permute.xlu0 %2323
      %2327 = vset.pattern.permute.xlu0 0
      %2328 = vperm.xlu0 %2327, %v2294
      %v2329 = vpop.permute.xlu0 %2328
      %2332 = vset.pattern.permute.xlu0 0
      %2333 = vperm.xlu0 %2332, %v2295
      %v2334 = vpop.permute.xlu0 %2333
      %v2336 = vld [vmem:[#allocation3] sm:$0xff]
      %v2337 = vld [vmem:[#allocation3 + $0x8] sm:$0xff]
      %v2338 = vld [vmem:[#allocation3 + $0x18] sm:$0xff]
      %v2339 = vld [vmem:[#allocation3 + $0x20] sm:$0xff]
      %v2340 = vld [vmem:[#allocation3 + $0x30] sm:$0xff]
      %v2341 = vld [vmem:[#allocation3 + $0x38] sm:$0xff]
      %v2342 = vld [vmem:[#allocation3 + $0x48] sm:$0xff]
      %v2343 = vld [vmem:[#allocation3 + $0x50] sm:$0xff]
      %v2344 = vld [vmem:[#allocation3 + $0x60] sm:$0xff]
      %v2345 = vld [vmem:[#allocation3 + $0x68] sm:$0xff]
      %v2346 = vld [vmem:[#allocation3 + $0x78] sm:$0xff]
      %v2347 = vld [vmem:[#allocation3 + $0x80] sm:$0xff]
      %v2348 = vld [vmem:[#allocation3 + $0x90] sm:$0xff]
      %v2349 = vld [vmem:[#allocation3 + $0x98] sm:$0xff]
      %v2350 = vld [vmem:[#allocation3 + $0xa8] sm:$0xff]
      %v2351 = vld [vmem:[#allocation3 + $0xb0] sm:$0xff]
      %v2352 = vld [vmem:[#allocation3 + $0xc0] sm:$0xff]
      %v2353 = vld [vmem:[#allocation3 + $0xc8] sm:$0xff]
      %v2354 = vld [vmem:[#allocation3 + $0xd8] sm:$0xff]
      %v2355 = vld [vmem:[#allocation3 + $0xe0] sm:$0xff]
      %v2356 = vld [vmem:[#allocation3 + $0xf0] sm:$0xff]
      %v2357 = vld [vmem:[#allocation3 + $0xf8] sm:$0xff]
      %v2358 = vld [vmem:[#allocation3 + $0x108] sm:$0xff]
      %v2359 = vld [vmem:[#allocation3 + $0x110] sm:$0xff]
      %v2360 = vld [vmem:[#allocation3 + $0x120] sm:$0xff]
      %v2361 = vld [vmem:[#allocation3 + $0x128] sm:$0xff]
      %v2362 = vld [vmem:[#allocation3 + $0x138] sm:$0xff]
      %v2363 = vld [vmem:[#allocation3 + $0x140] sm:$0xff]
      %v2364 = vld [vmem:[#allocation3 + $0x150] sm:$0xff]
      %v2365 = vld [vmem:[#allocation3 + $0x158] sm:$0xff]
      %v2366 = vld [vmem:[#allocation3 + $0x168] sm:$0xff]
      %v2367 = vld [vmem:[#allocation3 + $0x170] sm:$0xff]
      %v2368 = vld [vmem:[#allocation3 + $0x1] sm:$0xff]
      %v2369 = vld [vmem:[#allocation3 + $0x9] sm:$0xff]
      %v2370 = vld [vmem:[#allocation3 + $0x19] sm:$0xff]
      %v2371 = vld [vmem:[#allocation3 + $0x21] sm:$0xff]
      %v2372 = vld [vmem:[#allocation3 + $0x31] sm:$0xff]
      %v2373 = vld [vmem:[#allocation3 + $0x39] sm:$0xff]
      %v2374 = vld [vmem:[#allocation3 + $0x49] sm:$0xff]
      %v2375 = vld [vmem:[#allocation3 + $0x51] sm:$0xff]
      %v2376 = vld [vmem:[#allocation3 + $0x61] sm:$0xff]
      %v2377 = vld [vmem:[#allocation3 + $0x69] sm:$0xff]
      %v2378 = vld [vmem:[#allocation3 + $0x79] sm:$0xff]
      %v2379 = vld [vmem:[#allocation3 + $0x81] sm:$0xff]
      %v2380 = vld [vmem:[#allocation3 + $0x91] sm:$0xff]
      %v2381 = vld [vmem:[#allocation3 + $0x99] sm:$0xff]
      %v2382 = vld [vmem:[#allocation3 + $0xa9] sm:$0xff]
      %v2383 = vld [vmem:[#allocation3 + $0xb1] sm:$0xff]
      %v2384 = vld [vmem:[#allocation3 + $0xc1] sm:$0xff]
      %v2385 = vld [vmem:[#allocation3 + $0xc9] sm:$0xff]
      %v2386 = vld [vmem:[#allocation3 + $0xd9] sm:$0xff]
      %v2387 = vld [vmem:[#allocation3 + $0xe1] sm:$0xff]
      %v2388 = vld [vmem:[#allocation3 + $0xf1] sm:$0xff]
      %v2389 = vld [vmem:[#allocation3 + $0xf9] sm:$0xff]
      %v2390 = vld [vmem:[#allocation3 + $0x109] sm:$0xff]
      %v2391 = vld [vmem:[#allocation3 + $0x111] sm:$0xff]
      %v2392 = vld [vmem:[#allocation3 + $0x121] sm:$0xff]
      %v2393 = vld [vmem:[#allocation3 + $0x129] sm:$0xff]
      %v2394 = vld [vmem:[#allocation3 + $0x139] sm:$0xff]
      %v2395 = vld [vmem:[#allocation3 + $0x141] sm:$0xff]
      %v2396 = vld [vmem:[#allocation3 + $0x151] sm:$0xff]
      %v2397 = vld [vmem:[#allocation3 + $0x159] sm:$0xff]
      %v2398 = vld [vmem:[#allocation3 + $0x169] sm:$0xff]
      %v2399 = vld [vmem:[#allocation3 + $0x171] sm:$0xff]
      %v2400 = vld [vmem:[#allocation3 + $0x2] sm:$0xff]
      %v2401 = vld [vmem:[#allocation3 + $0xa] sm:$0xff]
      %v2402 = vld [vmem:[#allocation3 + $0x1a] sm:$0xff]
      %v2403 = vld [vmem:[#allocation3 + $0x22] sm:$0xff]
      %v2404 = vld [vmem:[#allocation3 + $0x32] sm:$0xff]
      %v2405 = vld [vmem:[#allocation3 + $0x3a] sm:$0xff]
      %v2406 = vld [vmem:[#allocation3 + $0x4a] sm:$0xff]
      %v2407 = vld [vmem:[#allocation3 + $0x52] sm:$0xff]
      %v2408 = vld [vmem:[#allocation3 + $0x62] sm:$0xff]
      %v2409 = vld [vmem:[#allocation3 + $0x6a] sm:$0xff]
      %v2410 = vld [vmem:[#allocation3 + $0x7a] sm:$0xff]
      %v2411 = vld [vmem:[#allocation3 + $0x82] sm:$0xff]
      %v2412 = vld [vmem:[#allocation3 + $0x92] sm:$0xff]
      %v2413 = vld [vmem:[#allocation3 + $0x9a] sm:$0xff]
      %v2414 = vld [vmem:[#allocation3 + $0xaa] sm:$0xff]
      %v2415 = vld [vmem:[#allocation3 + $0xb2] sm:$0xff]
      %v2416 = vld [vmem:[#allocation3 + $0xc2] sm:$0xff]
      %v2417 = vld [vmem:[#allocation3 + $0xca] sm:$0xff]
      %v2418 = vld [vmem:[#allocation3 + $0xda] sm:$0xff]
      %v2419 = vld [vmem:[#allocation3 + $0xe2] sm:$0xff]
      %v2420 = vld [vmem:[#allocation3 + $0xf2] sm:$0xff]
      %v2421 = vld [vmem:[#allocation3 + $0xfa] sm:$0xff]
      %v2422 = vld [vmem:[#allocation3 + $0x10a] sm:$0xff]
      %v2423 = vld [vmem:[#allocation3 + $0x112] sm:$0xff]
      %v2424 = vld [vmem:[#allocation3 + $0x122] sm:$0xff]
      %v2425 = vld [vmem:[#allocation3 + $0x12a] sm:$0xff]
      %v2426 = vld [vmem:[#allocation3 + $0x13a] sm:$0xff]
      %v2427 = vld [vmem:[#allocation3 + $0x142] sm:$0xff]
      %v2428 = vld [vmem:[#allocation3 + $0x152] sm:$0xff]
      %v2429 = vld [vmem:[#allocation3 + $0x15a] sm:$0xff]
      %v2430 = vld [vmem:[#allocation3 + $0x16a] sm:$0xff]
      %v2431 = vld [vmem:[#allocation3 + $0x172] sm:$0xff]
      %2464 = vrot.lane.b32.xlu0 %v2368, 64
      %v2465 = vpop.permute.xlu0 %2464
      %2466 = vrot.lane.b32.xlu0 %v2369, 64
      %v2467 = vpop.permute.xlu0 %2466
      %2468 = vrot.lane.b32.xlu0 %v2370, 64
      %v2469 = vpop.permute.xlu0 %2468
      %2470 = vrot.lane.b32.xlu0 %v2371, 64
      %v2471 = vpop.permute.xlu0 %2470
      %2472 = vrot.lane.b32.xlu0 %v2372, 64
      %v2473 = vpop.permute.xlu0 %2472
      %2474 = vrot.lane.b32.xlu0 %v2373, 64
      %v2475 = vpop.permute.xlu0 %2474
      %2476 = vrot.lane.b32.xlu0 %v2374, 64
      %v2477 = vpop.permute.xlu0 %2476
      %2478 = vrot.lane.b32.xlu0 %v2375, 64
      %v2479 = vpop.permute.xlu0 %2478
      %2480 = vrot.lane.b32.xlu0 %v2376, 64
      %v2481 = vpop.permute.xlu0 %2480
      %2482 = vrot.lane.b32.xlu0 %v2377, 64
      %v2483 = vpop.permute.xlu0 %2482
      %2484 = vrot.lane.b32.xlu0 %v2378, 64
      %v2485 = vpop.permute.xlu0 %2484
      %2486 = vrot.lane.b32.xlu0 %v2379, 64
      %v2487 = vpop.permute.xlu0 %2486
      %2488 = vrot.lane.b32.xlu0 %v2380, 64
      %v2489 = vpop.permute.xlu0 %2488
      %2490 = vrot.lane.b32.xlu0 %v2381, 64
      %v2491 = vpop.permute.xlu0 %2490
      %2492 = vrot.lane.b32.xlu0 %v2382, 64
      %v2493 = vpop.permute.xlu0 %2492
      %2494 = vrot.lane.b32.xlu0 %v2383, 64
      %v2495 = vpop.permute.xlu0 %2494
      %2496 = vrot.lane.b32.xlu0 %v2384, 64
      %v2497 = vpop.permute.xlu0 %2496
      %2498 = vrot.lane.b32.xlu0 %v2385, 64
      %v2499 = vpop.permute.xlu0 %2498
      %2500 = vrot.lane.b32.xlu0 %v2386, 64
      %v2501 = vpop.permute.xlu0 %2500
      %2502 = vrot.lane.b32.xlu0 %v2387, 64
      %v2503 = vpop.permute.xlu0 %2502
      %2504 = vrot.lane.b32.xlu0 %v2388, 64
      %v2505 = vpop.permute.xlu0 %2504
      %2506 = vrot.lane.b32.xlu0 %v2389, 64
      %v2507 = vpop.permute.xlu0 %2506
      %2508 = vrot.lane.b32.xlu0 %v2390, 64
      %v2509 = vpop.permute.xlu0 %2508
      %2510 = vrot.lane.b32.xlu0 %v2391, 64
      %v2511 = vpop.permute.xlu0 %2510
      %2512 = vrot.lane.b32.xlu0 %v2392, 64
      %v2513 = vpop.permute.xlu0 %2512
      %2514 = vrot.lane.b32.xlu0 %v2393, 64
      %v2515 = vpop.permute.xlu0 %2514
      %2516 = vrot.lane.b32.xlu0 %v2394, 64
      %v2517 = vpop.permute.xlu0 %2516
      %2518 = vrot.lane.b32.xlu0 %v2395, 64
      %v2519 = vpop.permute.xlu0 %2518
      %2520 = vrot.lane.b32.xlu0 %v2396, 64
      %v2521 = vpop.permute.xlu0 %2520
      %2522 = vrot.lane.b32.xlu0 %v2397, 64
      %v2523 = vpop.permute.xlu0 %2522
      %2524 = vrot.lane.b32.xlu0 %v2398, 64
      %v2525 = vpop.permute.xlu0 %2524
      %2526 = vrot.lane.b32.xlu0 %v2399, 64
      %v2527 = vpop.permute.xlu0 %2526
      %v2560 = vsel %vm1618, %v2336, %v2465
      %v2561 = vsel %vm1618, %v2337, %v2467
      %v2562 = vsel %vm1618, %v2338, %v2469
      %v2563 = vsel %vm1618, %v2339, %v2471
      %v2564 = vsel %vm1618, %v2340, %v2473
      %v2565 = vsel %vm1618, %v2341, %v2475
      %v2566 = vsel %vm1618, %v2342, %v2477
      %v2567 = vsel %vm1618, %v2343, %v2479
      %v2568 = vsel %vm1618, %v2344, %v2481
      %v2569 = vsel %vm1618, %v2345, %v2483
      %v2570 = vsel %vm1618, %v2346, %v2485
      %v2571 = vsel %vm1618, %v2347, %v2487
      %v2572 = vsel %vm1618, %v2348, %v2489
      %v2573 = vsel %vm1618, %v2349, %v2491
      %v2574 = vsel %vm1618, %v2350, %v2493
      %v2575 = vsel %vm1618, %v2351, %v2495
      %v2576 = vsel %vm1618, %v2352, %v2497
      %v2577 = vsel %vm1618, %v2353, %v2499
      %v2578 = vsel %vm1618, %v2354, %v2501
      %v2579 = vsel %vm1618, %v2355, %v2503
      %v2580 = vsel %vm1618, %v2356, %v2505
      %v2581 = vsel %vm1618, %v2357, %v2507
      %v2582 = vsel %vm1618, %v2358, %v2509
      %v2583 = vsel %vm1618, %v2359, %v2511
      %v2584 = vsel %vm1618, %v2360, %v2513
      %v2585 = vsel %vm1618, %v2361, %v2515
      %v2586 = vsel %vm1618, %v2362, %v2517
      %v2587 = vsel %vm1618, %v2363, %v2519
      %v2588 = vsel %vm1618, %v2364, %v2521
      %v2589 = vsel %vm1618, %v2365, %v2523
      %v2590 = vsel %vm1618, %v2366, %v2525
      %v2591 = vsel %vm1618, %v2367, %v2527
      %v2592 = vpack.c.bf16 %v2561, %v2560
      %v2593 = vpack.c.bf16 %v2401, %v2400
      %v2594 = vpack.c.bf16 %v2563, %v2562
      %v2595 = vpack.c.bf16 %v2403, %v2402
      %v2596 = vpack.c.bf16 %v2565, %v2564
      %v2597 = vpack.c.bf16 %v2405, %v2404
      %v2598 = vpack.c.bf16 %v2567, %v2566
      %v2599 = vpack.c.bf16 %v2407, %v2406
      %v2600 = vpack.c.bf16 %v2569, %v2568
      %v2601 = vpack.c.bf16 %v2409, %v2408
      %v2602 = vpack.c.bf16 %v2571, %v2570
      %v2603 = vpack.c.bf16 %v2411, %v2410
      %v2604 = vpack.c.bf16 %v2573, %v2572
      %v2605 = vpack.c.bf16 %v2413, %v2412
      %v2606 = vpack.c.bf16 %v2575, %v2574
      %v2607 = vpack.c.bf16 %v2415, %v2414
      %v2608 = vpack.c.bf16 %v2577, %v2576
      %v2609 = vpack.c.bf16 %v2417, %v2416
      %v2610 = vpack.c.bf16 %v2579, %v2578
      %v2611 = vpack.c.bf16 %v2419, %v2418
      %v2612 = vpack.c.bf16 %v2581, %v2580
      %v2613 = vpack.c.bf16 %v2421, %v2420
      %v2614 = vpack.c.bf16 %v2583, %v2582
      %v2615 = vpack.c.bf16 %v2423, %v2422
      %v2616 = vpack.c.bf16 %v2585, %v2584
      %v2617 = vpack.c.bf16 %v2425, %v2424
      %v2618 = vpack.c.bf16 %v2587, %v2586
      %v2619 = vpack.c.bf16 %v2427, %v2426
      %v2620 = vpack.c.bf16 %v2589, %v2588
      %v2621 = vpack.c.bf16 %v2429, %v2428
      %v2622 = vpack.c.bf16 %v2591, %v2590
      %v2623 = vpack.c.bf16 %v2431, %v2430
      %v2624 = vld [vmem:[%s3] sm:$0xff]
      %v2625 = vld [vmem:[%s3 + $0x8] sm:$0xff]
      %v2626 = vld [vmem:[%s3 + $0x10] sm:$0xff]
      %v2627 = vld [vmem:[%s3 + $0x18] sm:$0xff]
      %v2628 = vld [vmem:[%s3 + $0x20] sm:$0xff]
      %v2629 = vld [vmem:[%s3 + $0x28] sm:$0xff]
      %v2630 = vld [vmem:[%s3 + $0x30] sm:$0xff]
      %v2631 = vld [vmem:[%s3 + $0x38] sm:$0xff]
      %v2640 = vunpack.c.l.b16 %v2624
      %v2641 = vunpack.c.h.b16 %v2624
      %v2642 = vunpack.c.l.b16 %v2625
      %v2643 = vunpack.c.h.b16 %v2625
      %v2644 = vunpack.c.l.b16 %v2626
      %v2645 = vunpack.c.h.b16 %v2626
      %v2646 = vunpack.c.l.b16 %v2627
      %v2647 = vunpack.c.h.b16 %v2627
      %v2648 = vunpack.c.l.b16 %v2628
      %v2649 = vunpack.c.h.b16 %v2628
      %v2650 = vunpack.c.l.b16 %v2629
      %v2651 = vunpack.c.h.b16 %v2629
      %v2652 = vunpack.c.l.b16 %v2630
      %v2653 = vunpack.c.h.b16 %v2630
      %v2654 = vunpack.c.l.b16 %v2631
      %v2655 = vunpack.c.h.b16 %v2631
      %v2656 = vpack.c.b16 %v2642, %v2640
      %v2657 = vpack.c.b16 %v2643, %v2641
      %v2658 = vpack.c.b16 %v2646, %v2644
      %v2659 = vpack.c.b16 %v2647, %v2645
      %v2660 = vpack.c.b16 %v2650, %v2648
      %v2661 = vpack.c.b16 %v2651, %v2649
      %v2662 = vpack.c.b16 %v2654, %v2652
      %v2663 = vpack.c.b16 %v2655, %v2653
      %v2669 = vsel %vm1618, %v2657, 0
      %v2672 = vsel %vm1618, %v2659, 0
      %v2675 = vsel %vm1618, %v2661, 0
      %v2678 = vsel %vm1618, %v2663, 0
      %v2681 = vsel %vm1618, %v2593, 0
      %v2684 = vsel %vm1618, %v2595, 0
      %v2687 = vsel %vm1618, %v2597, 0
      %v2690 = vsel %vm1618, %v2599, 0
      %v2693 = vsel %vm1618, %v2601, 0
      %v2696 = vsel %vm1618, %v2603, 0
      %v2699 = vsel %vm1618, %v2605, 0
      %v2702 = vsel %vm1618, %v2607, 0
      %v2705 = vsel %vm1618, %v2609, 0
      %v2708 = vsel %vm1618, %v2611, 0
      %v2711 = vsel %vm1618, %v2613, 0
      %v2714 = vsel %vm1618, %v2615, 0
      %v2717 = vsel %vm1618, %v2617, 0
      %v2720 = vsel %vm1618, %v2619, 0
      %v2723 = vsel %vm1618, %v2621, 0
      %v2726 = vsel %vm1618, %v2623, 0
      %2728 = vmatpush.bf16.xpose.msra.mxu0 %v2606
      %2729 = vmatpush.bf16.xpose.msra.mxu0 %v2604
      %2730 = vmatpush.bf16.xpose.msra.mxu0 %v2602
      %2731 = vmatpush.bf16.xpose.msra.mxu0 %v2600
      %2732 = vmatpush.bf16.xpose.msra.mxu0 %v2598
      %2733 = vmatpush.bf16.xpose.msra.mxu0 %v2596
      %2734 = vmatpush.bf16.xpose.msra.mxu0 %v2594
      %2735 = vmatpush.bf16.xpose.msra.mxu0 %v2592
      %2736 = vmatmul.bf16.gmra.mxu0 %v2656
      %v2737 = vpop.f32.mrf.mxu0
      %v2738 = vadd.f32 0.0, %v2737
      %v2739 = vpop.f32.mrf.mxu0
      %v2740 = vadd.f32 0.0, %v2739
      %2741 = vmatmul.bf16.gmra.mxu0 %v2658
      %v2742 = vpop.f32.mrf.mxu0
      %v2743 = vadd.f32 0.0, %v2742
      %v2744 = vpop.f32.mrf.mxu0
      %v2745 = vadd.f32 0.0, %v2744
      %2746 = vmatmul.bf16.gmra.mxu0 %v2660
      %v2747 = vpop.f32.mrf.mxu0
      %v2748 = vadd.f32 0.0, %v2747
      %v2749 = vpop.f32.mrf.mxu0
      %v2750 = vadd.f32 0.0, %v2749
      %2751 = vmatmul.bf16.gmra.mxu0 %v2662
      %v2752 = vpop.f32.mrf.mxu0
      %v2753 = vadd.f32 0.0, %v2752
      %v2754 = vpop.f32.mrf.mxu0
      %v2755 = vadd.f32 0.0, %v2754
      %2756 = vdwg.mxu0
      %2757 = vmatpush.bf16.xpose.msra.mxu0 %v2702
      %2758 = vmatpush.bf16.xpose.msra.mxu0 %v2699
      %2759 = vmatpush.bf16.xpose.msra.mxu0 %v2696
      %2760 = vmatpush.bf16.xpose.msra.mxu0 %v2693
      %2761 = vmatpush.bf16.xpose.msra.mxu0 %v2690
      %2762 = vmatpush.bf16.xpose.msra.mxu0 %v2687
      %2763 = vmatpush.bf16.xpose.msra.mxu0 %v2684
      %2764 = vmatpush.bf16.xpose.msra.mxu0 %v2681
      %2765 = vmatmul.bf16.gmra.mxu0 %v2669
      %v2766 = vpop.f32.mrf.mxu0
      %v2767 = vadd.f32 %v2738, %v2766
      %v2768 = vpop.f32.mrf.mxu0
      %v2769 = vadd.f32 %v2740, %v2768
      %2770 = vmatmul.bf16.gmra.mxu0 %v2672
      %v2771 = vpop.f32.mrf.mxu0
      %v2772 = vadd.f32 %v2743, %v2771
      %v2773 = vpop.f32.mrf.mxu0
      %v2774 = vadd.f32 %v2745, %v2773
      %2775 = vmatmul.bf16.gmra.mxu0 %v2675
      %v2776 = vpop.f32.mrf.mxu0
      %v2777 = vadd.f32 %v2748, %v2776
      %v2778 = vpop.f32.mrf.mxu0
      %v2779 = vadd.f32 %v2750, %v2778
      %2780 = vmatmul.bf16.gmra.mxu0 %v2678
      %v2781 = vpop.f32.mrf.mxu0
      %v2782 = vadd.f32 %v2753, %v2781
      %v2783 = vpop.f32.mrf.mxu0
      %v2784 = vadd.f32 %v2755, %v2783
      %2785 = vdwg.mxu0
      %2786 = vmatpush.bf16.xpose.msra.mxu0 %v2622
      %2787 = vmatpush.bf16.xpose.msra.mxu0 %v2620
      %2788 = vmatpush.bf16.xpose.msra.mxu0 %v2618
      %2789 = vmatpush.bf16.xpose.msra.mxu0 %v2616
      %2790 = vmatpush.bf16.xpose.msra.mxu0 %v2614
      %2791 = vmatpush.bf16.xpose.msra.mxu0 %v2612
      %2792 = vmatpush.bf16.xpose.msra.mxu0 %v2610
      %2793 = vmatpush.bf16.xpose.msra.mxu0 %v2608
      %2794 = vmatmul.bf16.gmra.mxu0 %v2656
      %v2795 = vpop.f32.mrf.mxu0
      %v2796 = vadd.f32 0.0, %v2795
      %v2797 = vpop.f32.mrf.mxu0
      %v2798 = vadd.f32 0.0, %v2797
      %2799 = vmatmul.bf16.gmra.mxu0 %v2658
      %v2800 = vpop.f32.mrf.mxu0
      %v2801 = vadd.f32 0.0, %v2800
      %v2802 = vpop.f32.mrf.mxu0
      %v2803 = vadd.f32 0.0, %v2802
      %2804 = vmatmul.bf16.gmra.mxu0 %v2660
      %v2805 = vpop.f32.mrf.mxu0
      %v2806 = vadd.f32 0.0, %v2805
      %v2807 = vpop.f32.mrf.mxu0
      %v2808 = vadd.f32 0.0, %v2807
      %2809 = vmatmul.bf16.gmra.mxu0 %v2662
      %v2810 = vpop.f32.mrf.mxu0
      %v2811 = vadd.f32 0.0, %v2810
      %v2812 = vpop.f32.mrf.mxu0
      %v2813 = vadd.f32 0.0, %v2812
      %2814 = vdwg.mxu0
      %2815 = vmatpush.bf16.xpose.msra.mxu0 %v2726
      %2816 = vmatpush.bf16.xpose.msra.mxu0 %v2723
      %2817 = vmatpush.bf16.xpose.msra.mxu0 %v2720
      %2818 = vmatpush.bf16.xpose.msra.mxu0 %v2717
      %2819 = vmatpush.bf16.xpose.msra.mxu0 %v2714
      %2820 = vmatpush.bf16.xpose.msra.mxu0 %v2711
      %2821 = vmatpush.bf16.xpose.msra.mxu0 %v2708
      %2822 = vmatpush.bf16.xpose.msra.mxu0 %v2705
      %2823 = vmatmul.bf16.gmra.mxu0 %v2669
      %v2824 = vpop.f32.mrf.mxu0
      %v2825 = vadd.f32 %v2796, %v2824
      %v2826 = vpop.f32.mrf.mxu0
      %v2827 = vadd.f32 %v2798, %v2826
      %2828 = vmatmul.bf16.gmra.mxu0 %v2672
      %v2829 = vpop.f32.mrf.mxu0
      %v2830 = vadd.f32 %v2801, %v2829
      %v2831 = vpop.f32.mrf.mxu0
      %v2832 = vadd.f32 %v2803, %v2831
      %2833 = vmatmul.bf16.gmra.mxu0 %v2675
      %v2834 = vpop.f32.mrf.mxu0
      %v2835 = vadd.f32 %v2806, %v2834
      %v2836 = vpop.f32.mrf.mxu0
      %v2837 = vadd.f32 %v2808, %v2836
      %2838 = vmatmul.bf16.gmra.mxu0 %v2678
      %v2839 = vpop.f32.mrf.mxu0
      %v2840 = vadd.f32 %v2811, %v2839
      %v2841 = vpop.f32.mrf.mxu0
      %v2842 = vadd.f32 %v2813, %v2841
      %2843 = vdwg.mxu0
      %v2844 = vadd.f32 %v2299, %v2767
      %v2845 = vadd.f32 %v2299, %v2825
      %v2846 = vadd.f32 %v2304, %v2769
      %v2847 = vadd.f32 %v2304, %v2827
      %v2848 = vadd.f32 %v2309, %v2772
      %v2849 = vadd.f32 %v2309, %v2830
      %v2850 = vadd.f32 %v2314, %v2774
      %v2851 = vadd.f32 %v2314, %v2832
      %v2852 = vadd.f32 %v2319, %v2777
      %v2853 = vadd.f32 %v2319, %v2835
      %v2854 = vadd.f32 %v2324, %v2779
      %v2855 = vadd.f32 %v2324, %v2837
      %v2856 = vadd.f32 %v2329, %v2782
      %v2857 = vadd.f32 %v2329, %v2840
      %v2858 = vadd.f32 %v2334, %v2784
      %v2859 = vadd.f32 %v2334, %v2842
      %v2860 = vld [vmem:[%s2212] sm:$0xff]
      %v2861 = vld [vmem:[%s2212 + $0x8] sm:$0xff]
      %v2862 = vld [vmem:[%s2212 + $0x18] sm:$0xff]
      %v2863 = vld [vmem:[%s2212 + $0x20] sm:$0xff]
      %v2864 = vld [vmem:[%s2212 + $0x30] sm:$0xff]
      %v2865 = vld [vmem:[%s2212 + $0x38] sm:$0xff]
      %v2866 = vld [vmem:[%s2212 + $0x48] sm:$0xff]
      %v2867 = vld [vmem:[%s2212 + $0x50] sm:$0xff]
      %v2868 = vld [vmem:[%s2212 + $0x60] sm:$0xff]
      %v2869 = vld [vmem:[%s2212 + $0x68] sm:$0xff]
      %v2870 = vld [vmem:[%s2212 + $0x78] sm:$0xff]
      %v2871 = vld [vmem:[%s2212 + $0x80] sm:$0xff]
      %v2872 = vld [vmem:[%s2212 + $0x90] sm:$0xff]
      %v2873 = vld [vmem:[%s2212 + $0x98] sm:$0xff]
      %v2874 = vld [vmem:[%s2212 + $0xa8] sm:$0xff]
      %v2875 = vld [vmem:[%s2212 + $0xb0] sm:$0xff]
      %v2876 = vld [vmem:[%s2212 + $0xc0] sm:$0xff]
      %v2877 = vld [vmem:[%s2212 + $0xc8] sm:$0xff]
      %v2878 = vld [vmem:[%s2212 + $0xd8] sm:$0xff]
      %v2879 = vld [vmem:[%s2212 + $0xe0] sm:$0xff]
      %v2880 = vld [vmem:[%s2212 + $0xf0] sm:$0xff]
      %v2881 = vld [vmem:[%s2212 + $0xf8] sm:$0xff]
      %v2882 = vld [vmem:[%s2212 + $0x108] sm:$0xff]
      %v2883 = vld [vmem:[%s2212 + $0x110] sm:$0xff]
      %v2884 = vld [vmem:[%s2212 + $0x120] sm:$0xff]
      %v2885 = vld [vmem:[%s2212 + $0x128] sm:$0xff]
      %v2886 = vld [vmem:[%s2212 + $0x138] sm:$0xff]
      %v2887 = vld [vmem:[%s2212 + $0x140] sm:$0xff]
      %v2888 = vld [vmem:[%s2212 + $0x150] sm:$0xff]
      %v2889 = vld [vmem:[%s2212 + $0x158] sm:$0xff]
      %v2890 = vld [vmem:[%s2212 + $0x168] sm:$0xff]
      %v2891 = vld [vmem:[%s2212 + $0x170] sm:$0xff]
      %v2892 = vld [vmem:[%s2212 + $0x1] sm:$0xff]
      %v2893 = vld [vmem:[%s2212 + $0x9] sm:$0xff]
      %v2894 = vld [vmem:[%s2212 + $0x19] sm:$0xff]
      %v2895 = vld [vmem:[%s2212 + $0x21] sm:$0xff]
      %v2896 = vld [vmem:[%s2212 + $0x31] sm:$0xff]
      %v2897 = vld [vmem:[%s2212 + $0x39] sm:$0xff]
      %v2898 = vld [vmem:[%s2212 + $0x49] sm:$0xff]
      %v2899 = vld [vmem:[%s2212 + $0x51] sm:$0xff]
      %v2900 = vld [vmem:[%s2212 + $0x61] sm:$0xff]
      %v2901 = vld [vmem:[%s2212 + $0x69] sm:$0xff]
      %v2902 = vld [vmem:[%s2212 + $0x79] sm:$0xff]
      %v2903 = vld [vmem:[%s2212 + $0x81] sm:$0xff]
      %v2904 = vld [vmem:[%s2212 + $0x91] sm:$0xff]
      %v2905 = vld [vmem:[%s2212 + $0x99] sm:$0xff]
      %v2906 = vld [vmem:[%s2212 + $0xa9] sm:$0xff]
      %v2907 = vld [vmem:[%s2212 + $0xb1] sm:$0xff]
      %v2908 = vld [vmem:[%s2212 + $0xc1] sm:$0xff]
      %v2909 = vld [vmem:[%s2212 + $0xc9] sm:$0xff]
      %v2910 = vld [vmem:[%s2212 + $0xd9] sm:$0xff]
      %v2911 = vld [vmem:[%s2212 + $0xe1] sm:$0xff]
      %v2912 = vld [vmem:[%s2212 + $0xf1] sm:$0xff]
      %v2913 = vld [vmem:[%s2212 + $0xf9] sm:$0xff]
      %v2914 = vld [vmem:[%s2212 + $0x109] sm:$0xff]
      %v2915 = vld [vmem:[%s2212 + $0x111] sm:$0xff]
      %v2916 = vld [vmem:[%s2212 + $0x121] sm:$0xff]
      %v2917 = vld [vmem:[%s2212 + $0x129] sm:$0xff]
      %v2918 = vld [vmem:[%s2212 + $0x139] sm:$0xff]
      %v2919 = vld [vmem:[%s2212 + $0x141] sm:$0xff]
      %v2920 = vld [vmem:[%s2212 + $0x151] sm:$0xff]
      %v2921 = vld [vmem:[%s2212 + $0x159] sm:$0xff]
      %v2922 = vld [vmem:[%s2212 + $0x169] sm:$0xff]
      %v2923 = vld [vmem:[%s2212 + $0x171] sm:$0xff]
      %v2924 = vld [vmem:[%s2212 + $0x2] sm:$0xff]
      %v2925 = vld [vmem:[%s2212 + $0xa] sm:$0xff]
      %v2926 = vld [vmem:[%s2212 + $0x1a] sm:$0xff]
      %v2927 = vld [vmem:[%s2212 + $0x22] sm:$0xff]
      %v2928 = vld [vmem:[%s2212 + $0x32] sm:$0xff]
      %v2929 = vld [vmem:[%s2212 + $0x3a] sm:$0xff]
      %v2930 = vld [vmem:[%s2212 + $0x4a] sm:$0xff]
      %v2931 = vld [vmem:[%s2212 + $0x52] sm:$0xff]
      %v2932 = vld [vmem:[%s2212 + $0x62] sm:$0xff]
      %v2933 = vld [vmem:[%s2212 + $0x6a] sm:$0xff]
      %v2934 = vld [vmem:[%s2212 + $0x7a] sm:$0xff]
      %v2935 = vld [vmem:[%s2212 + $0x82] sm:$0xff]
      %v2936 = vld [vmem:[%s2212 + $0x92] sm:$0xff]
      %v2937 = vld [vmem:[%s2212 + $0x9a] sm:$0xff]
      %v2938 = vld [vmem:[%s2212 + $0xaa] sm:$0xff]
      %v2939 = vld [vmem:[%s2212 + $0xb2] sm:$0xff]
      %v2940 = vld [vmem:[%s2212 + $0xc2] sm:$0xff]
      %v2941 = vld [vmem:[%s2212 + $0xca] sm:$0xff]
      %v2942 = vld [vmem:[%s2212 + $0xda] sm:$0xff]
      %v2943 = vld [vmem:[%s2212 + $0xe2] sm:$0xff]
      %v2944 = vld [vmem:[%s2212 + $0xf2] sm:$0xff]
      %v2945 = vld [vmem:[%s2212 + $0xfa] sm:$0xff]
      %v2946 = vld [vmem:[%s2212 + $0x10a] sm:$0xff]
      %v2947 = vld [vmem:[%s2212 + $0x112] sm:$0xff]
      %v2948 = vld [vmem:[%s2212 + $0x122] sm:$0xff]
      %v2949 = vld [vmem:[%s2212 + $0x12a] sm:$0xff]
      %v2950 = vld [vmem:[%s2212 + $0x13a] sm:$0xff]
      %v2951 = vld [vmem:[%s2212 + $0x142] sm:$0xff]
      %v2952 = vld [vmem:[%s2212 + $0x152] sm:$0xff]
      %v2953 = vld [vmem:[%s2212 + $0x15a] sm:$0xff]
      %v2954 = vld [vmem:[%s2212 + $0x16a] sm:$0xff]
      %v2955 = vld [vmem:[%s2212 + $0x172] sm:$0xff]
      %2988 = vrot.lane.b32.xlu0 %v2892, 64
      %v2989 = vpop.permute.xlu0 %2988
      %2990 = vrot.lane.b32.xlu0 %v2893, 64
      %v2991 = vpop.permute.xlu0 %2990
      %2992 = vrot.lane.b32.xlu0 %v2894, 64
      %v2993 = vpop.permute.xlu0 %2992
      %2994 = vrot.lane.b32.xlu0 %v2895, 64
      %v2995 = vpop.permute.xlu0 %2994
      %2996 = vrot.lane.b32.xlu0 %v2896, 64
      %v2997 = vpop.permute.xlu0 %2996
      %2998 = vrot.lane.b32.xlu0 %v2897, 64
      %v2999 = vpop.permute.xlu0 %2998
      %3000 = vrot.lane.b32.xlu0 %v2898, 64
      %v3001 = vpop.permute.xlu0 %3000
      %3002 = vrot.lane.b32.xlu0 %v2899, 64
      %v3003 = vpop.permute.xlu0 %3002
      %3004 = vrot.lane.b32.xlu0 %v2900, 64
      %v3005 = vpop.permute.xlu0 %3004
      %3006 = vrot.lane.b32.xlu0 %v2901, 64
      %v3007 = vpop.permute.xlu0 %3006
      %3008 = vrot.lane.b32.xlu0 %v2902, 64
      %v3009 = vpop.permute.xlu0 %3008
      %3010 = vrot.lane.b32.xlu0 %v2903, 64
      %v3011 = vpop.permute.xlu0 %3010
      %3012 = vrot.lane.b32.xlu0 %v2904, 64
      %v3013 = vpop.permute.xlu0 %3012
      %3014 = vrot.lane.b32.xlu0 %v2905, 64
      %v3015 = vpop.permute.xlu0 %3014
      %3016 = vrot.lane.b32.xlu0 %v2906, 64
      %v3017 = vpop.permute.xlu0 %3016
      %3018 = vrot.lane.b32.xlu0 %v2907, 64
      %v3019 = vpop.permute.xlu0 %3018
      %3020 = vrot.lane.b32.xlu0 %v2908, 64
      %v3021 = vpop.permute.xlu0 %3020
      %3022 = vrot.lane.b32.xlu0 %v2909, 64
      %v3023 = vpop.permute.xlu0 %3022
      %3024 = vrot.lane.b32.xlu0 %v2910, 64
      %v3025 = vpop.permute.xlu0 %3024
      %3026 = vrot.lane.b32.xlu0 %v2911, 64
      %v3027 = vpop.permute.xlu0 %3026
      %3028 = vrot.lane.b32.xlu0 %v2912, 64
      %v3029 = vpop.permute.xlu0 %3028
      %3030 = vrot.lane.b32.xlu0 %v2913, 64
      %v3031 = vpop.permute.xlu0 %3030
      %3032 = vrot.lane.b32.xlu0 %v2914, 64
      %v3033 = vpop.permute.xlu0 %3032
      %3034 = vrot.lane.b32.xlu0 %v2915, 64
      %v3035 = vpop.permute.xlu0 %3034
      %3036 = vrot.lane.b32.xlu0 %v2916, 64
      %v3037 = vpop.permute.xlu0 %3036
      %3038 = vrot.lane.b32.xlu0 %v2917, 64
      %v3039 = vpop.permute.xlu0 %3038
      %3040 = vrot.lane.b32.xlu0 %v2918, 64
      %v3041 = vpop.permute.xlu0 %3040
      %3042 = vrot.lane.b32.xlu0 %v2919, 64
      %v3043 = vpop.permute.xlu0 %3042
      %3044 = vrot.lane.b32.xlu0 %v2920, 64
      %v3045 = vpop.permute.xlu0 %3044
      %3046 = vrot.lane.b32.xlu0 %v2921, 64
      %v3047 = vpop.permute.xlu0 %3046
      %3048 = vrot.lane.b32.xlu0 %v2922, 64
      %v3049 = vpop.permute.xlu0 %3048
      %3050 = vrot.lane.b32.xlu0 %v2923, 64
      %v3051 = vpop.permute.xlu0 %3050
      %v3084 = vsel %vm1618, %v2860, %v2989
      %v3085 = vsel %vm1618, %v2861, %v2991
      %v3086 = vsel %vm1618, %v2862, %v2993
      %v3087 = vsel %vm1618, %v2863, %v2995
      %v3088 = vsel %vm1618, %v2864, %v2997
      %v3089 = vsel %vm1618, %v2865, %v2999
      %v3090 = vsel %vm1618, %v2866, %v3001
      %v3091 = vsel %vm1618, %v2867, %v3003
      %v3092 = vsel %vm1618, %v2868, %v3005
      %v3093 = vsel %vm1618, %v2869, %v3007
      %v3094 = vsel %vm1618, %v2870, %v3009
      %v3095 = vsel %vm1618, %v2871, %v3011
      %v3096 = vsel %vm1618, %v2872, %v3013
      %v3097 = vsel %vm1618, %v2873, %v3015
      %v3098 = vsel %vm1618, %v2874, %v3017
      %v3099 = vsel %vm1618, %v2875, %v3019
      %v3100 = vsel %vm1618, %v2876, %v3021
      %v3101 = vsel %vm1618, %v2877, %v3023
      %v3102 = vsel %vm1618, %v2878, %v3025
      %v3103 = vsel %vm1618, %v2879, %v3027
      %v3104 = vsel %vm1618, %v2880, %v3029
      %v3105 = vsel %vm1618, %v2881, %v3031
      %v3106 = vsel %vm1618, %v2882, %v3033
      %v3107 = vsel %vm1618, %v2883, %v3035
      %v3108 = vsel %vm1618, %v2884, %v3037
      %v3109 = vsel %vm1618, %v2885, %v3039
      %v3110 = vsel %vm1618, %v2886, %v3041
      %v3111 = vsel %vm1618, %v2887, %v3043
      %v3112 = vsel %vm1618, %v2888, %v3045
      %v3113 = vsel %vm1618, %v2889, %v3047
      %v3114 = vsel %vm1618, %v2890, %v3049
      %v3115 = vsel %vm1618, %v2891, %v3051
      %v3116 = vpack.c.bf16 %v3085, %v3084
      %v3117 = vpack.c.bf16 %v2925, %v2924
      %v3118 = vpack.c.bf16 %v3087, %v3086
      %v3119 = vpack.c.bf16 %v2927, %v2926
      %v3120 = vpack.c.bf16 %v3089, %v3088
      %v3121 = vpack.c.bf16 %v2929, %v2928
      %v3122 = vpack.c.bf16 %v3091, %v3090
      %v3123 = vpack.c.bf16 %v2931, %v2930
      %v3124 = vpack.c.bf16 %v3093, %v3092
      %v3125 = vpack.c.bf16 %v2933, %v2932
      %v3126 = vpack.c.bf16 %v3095, %v3094
      %v3127 = vpack.c.bf16 %v2935, %v2934
      %v3128 = vpack.c.bf16 %v3097, %v3096
      %v3129 = vpack.c.bf16 %v2937, %v2936
      %v3130 = vpack.c.bf16 %v3099, %v3098
      %v3131 = vpack.c.bf16 %v2939, %v2938
      %v3132 = vpack.c.bf16 %v3101, %v3100
      %v3133 = vpack.c.bf16 %v2941, %v2940
      %v3134 = vpack.c.bf16 %v3103, %v3102
      %v3135 = vpack.c.bf16 %v2943, %v2942
      %v3136 = vpack.c.bf16 %v3105, %v3104
      %v3137 = vpack.c.bf16 %v2945, %v2944
      %v3138 = vpack.c.bf16 %v3107, %v3106
      %v3139 = vpack.c.bf16 %v2947, %v2946
      %v3140 = vpack.c.bf16 %v3109, %v3108
      %v3141 = vpack.c.bf16 %v2949, %v2948
      %v3142 = vpack.c.bf16 %v3111, %v3110
      %v3143 = vpack.c.bf16 %v2951, %v2950
      %v3144 = vpack.c.bf16 %v3113, %v3112
      %v3145 = vpack.c.bf16 %v2953, %v2952
      %v3146 = vpack.c.bf16 %v3115, %v3114
      %v3147 = vpack.c.bf16 %v2955, %v2954
      %s3148 = scalar_lea.vmem %s3, 64
      %v3149 = vld [vmem:[%s3148] sm:$0xff]
      %v3150 = vld [vmem:[%s3148 + $0x8] sm:$0xff]
      %v3151 = vld [vmem:[%s3148 + $0x10] sm:$0xff]
      %v3152 = vld [vmem:[%s3148 + $0x18] sm:$0xff]
      %v3153 = vld [vmem:[%s3148 + $0x20] sm:$0xff]
      %v3154 = vld [vmem:[%s3148 + $0x28] sm:$0xff]
      %v3155 = vld [vmem:[%s3148 + $0x30] sm:$0xff]
      %v3156 = vld [vmem:[%s3148 + $0x38] sm:$0xff]
      %v3165 = vunpack.c.l.b16 %v3149
      %v3166 = vunpack.c.h.b16 %v3149
      %v3167 = vunpack.c.l.b16 %v3150
      %v3168 = vunpack.c.h.b16 %v3150
      %v3169 = vunpack.c.l.b16 %v3151
      %v3170 = vunpack.c.h.b16 %v3151
      %v3171 = vunpack.c.l.b16 %v3152
      %v3172 = vunpack.c.h.b16 %v3152
      %v3173 = vunpack.c.l.b16 %v3153
      %v3174 = vunpack.c.h.b16 %v3153
      %v3175 = vunpack.c.l.b16 %v3154
      %v3176 = vunpack.c.h.b16 %v3154
      %v3177 = vunpack.c.l.b16 %v3155
      %v3178 = vunpack.c.h.b16 %v3155
      %v3179 = vunpack.c.l.b16 %v3156
      %v3180 = vunpack.c.h.b16 %v3156
      %v3181 = vpack.c.b16 %v3167, %v3165
      %v3182 = vpack.c.b16 %v3168, %v3166
      %v3183 = vpack.c.b16 %v3171, %v3169
      %v3184 = vpack.c.b16 %v3172, %v3170
      %v3185 = vpack.c.b16 %v3175, %v3173
      %v3186 = vpack.c.b16 %v3176, %v3174
      %v3187 = vpack.c.b16 %v3179, %v3177
      %v3188 = vpack.c.b16 %v3180, %v3178
      %v3194 = vsel %vm1618, %v3182, 0
      %v3197 = vsel %vm1618, %v3184, 0
      %v3200 = vsel %vm1618, %v3186, 0
      %v3203 = vsel %vm1618, %v3188, 0
      %v3206 = vsel %vm1618, %v3117, 0
      %v3209 = vsel %vm1618, %v3119, 0
      %v3212 = vsel %vm1618, %v3121, 0
      %v3215 = vsel %vm1618, %v3123, 0
      %v3218 = vsel %vm1618, %v3125, 0
      %v3221 = vsel %vm1618, %v3127, 0
      %v3224 = vsel %vm1618, %v3129, 0
      %v3227 = vsel %vm1618, %v3131, 0
      %v3230 = vsel %vm1618, %v3133, 0
      %v3233 = vsel %vm1618, %v3135, 0
      %v3236 = vsel %vm1618, %v3137, 0
      %v3239 = vsel %vm1618, %v3139, 0
      %v3242 = vsel %vm1618, %v3141, 0
      %v3245 = vsel %vm1618, %v3143, 0
      %v3248 = vsel %vm1618, %v3145, 0
      %v3251 = vsel %vm1618, %v3147, 0
      %3253 = vmatpush.bf16.xpose.msra.mxu0 %v3130
      %3254 = vmatpush.bf16.xpose.msra.mxu0 %v3128
      %3255 = vmatpush.bf16.xpose.msra.mxu0 %v3126
      %3256 = vmatpush.bf16.xpose.msra.mxu0 %v3124
      %3257 = vmatpush.bf16.xpose.msra.mxu0 %v3122
      %3258 = vmatpush.bf16.xpose.msra.mxu0 %v3120
      %3259 = vmatpush.bf16.xpose.msra.mxu0 %v3118
      %3260 = vmatpush.bf16.xpose.msra.mxu0 %v3116
      %3261 = vmatmul.bf16.gmra.mxu0 %v3181
      %v3262 = vpop.f32.mrf.mxu0
      %v3263 = vadd.f32 0.0, %v3262
      %v3264 = vpop.f32.mrf.mxu0
      %v3265 = vadd.f32 0.0, %v3264
      %3266 = vmatmul.bf16.gmra.mxu0 %v3183
      %v3267 = vpop.f32.mrf.mxu0
      %v3268 = vadd.f32 0.0, %v3267
      %v3269 = vpop.f32.mrf.mxu0
      %v3270 = vadd.f32 0.0, %v3269
      %3271 = vmatmul.bf16.gmra.mxu0 %v3185
      %v3272 = vpop.f32.mrf.mxu0
      %v3273 = vadd.f32 0.0, %v3272
      %v3274 = vpop.f32.mrf.mxu0
      %v3275 = vadd.f32 0.0, %v3274
      %3276 = vmatmul.bf16.gmra.mxu0 %v3187
      %v3277 = vpop.f32.mrf.mxu0
      %v3278 = vadd.f32 0.0, %v3277
      %v3279 = vpop.f32.mrf.mxu0
      %v3280 = vadd.f32 0.0, %v3279
      %3281 = vdwg.mxu0
      %3282 = vmatpush.bf16.xpose.msra.mxu0 %v3227
      %3283 = vmatpush.bf16.xpose.msra.mxu0 %v3224
      %3284 = vmatpush.bf16.xpose.msra.mxu0 %v3221
      %3285 = vmatpush.bf16.xpose.msra.mxu0 %v3218
      %3286 = vmatpush.bf16.xpose.msra.mxu0 %v3215
      %3287 = vmatpush.bf16.xpose.msra.mxu0 %v3212
      %3288 = vmatpush.bf16.xpose.msra.mxu0 %v3209
      %3289 = vmatpush.bf16.xpose.msra.mxu0 %v3206
      %3290 = vmatmul.bf16.gmra.mxu0 %v3194
      %v3291 = vpop.f32.mrf.mxu0
      %v3292 = vadd.f32 %v3263, %v3291
      %v3293 = vpop.f32.mrf.mxu0
      %v3294 = vadd.f32 %v3265, %v3293
      %3295 = vmatmul.bf16.gmra.mxu0 %v3197
      %v3296 = vpop.f32.mrf.mxu0
      %v3297 = vadd.f32 %v3268, %v3296
      %v3298 = vpop.f32.mrf.mxu0
      %v3299 = vadd.f32 %v3270, %v3298
      %3300 = vmatmul.bf16.gmra.mxu0 %v3200
      %v3301 = vpop.f32.mrf.mxu0
      %v3302 = vadd.f32 %v3273, %v3301
      %v3303 = vpop.f32.mrf.mxu0
      %v3304 = vadd.f32 %v3275, %v3303
      %3305 = vmatmul.bf16.gmra.mxu0 %v3203
      %v3306 = vpop.f32.mrf.mxu0
      %v3307 = vadd.f32 %v3278, %v3306
      %v3308 = vpop.f32.mrf.mxu0
      %v3309 = vadd.f32 %v3280, %v3308
      %3310 = vdwg.mxu0
      %3311 = vmatpush.bf16.xpose.msra.mxu0 %v3146
      %3312 = vmatpush.bf16.xpose.msra.mxu0 %v3144
      %3313 = vmatpush.bf16.xpose.msra.mxu0 %v3142
      %3314 = vmatpush.bf16.xpose.msra.mxu0 %v3140
      %3315 = vmatpush.bf16.xpose.msra.mxu0 %v3138
      %3316 = vmatpush.bf16.xpose.msra.mxu0 %v3136
      %3317 = vmatpush.bf16.xpose.msra.mxu0 %v3134
      %3318 = vmatpush.bf16.xpose.msra.mxu0 %v3132
      %3319 = vmatmul.bf16.gmra.mxu0 %v3181
      %v3320 = vpop.f32.mrf.mxu0
      %v3321 = vadd.f32 0.0, %v3320
      %v3322 = vpop.f32.mrf.mxu0
      %v3323 = vadd.f32 0.0, %v3322
      %3324 = vmatmul.bf16.gmra.mxu0 %v3183
      %v3325 = vpop.f32.mrf.mxu0
      %v3326 = vadd.f32 0.0, %v3325
      %v3327 = vpop.f32.mrf.mxu0
      %v3328 = vadd.f32 0.0, %v3327
      %3329 = vmatmul.bf16.gmra.mxu0 %v3185
      %v3330 = vpop.f32.mrf.mxu0
      %v3331 = vadd.f32 0.0, %v3330
      %v3332 = vpop.f32.mrf.mxu0
      %v3333 = vadd.f32 0.0, %v3332
      %3334 = vmatmul.bf16.gmra.mxu0 %v3187
      %v3335 = vpop.f32.mrf.mxu0
      %v3336 = vadd.f32 0.0, %v3335
      %v3337 = vpop.f32.mrf.mxu0
      %v3338 = vadd.f32 0.0, %v3337
      %3339 = vdwg.mxu0
      %3340 = vmatpush.bf16.xpose.msra.mxu0 %v3251
      %3341 = vmatpush.bf16.xpose.msra.mxu0 %v3248
      %3342 = vmatpush.bf16.xpose.msra.mxu0 %v3245
      %3343 = vmatpush.bf16.xpose.msra.mxu0 %v3242
      %3344 = vmatpush.bf16.xpose.msra.mxu0 %v3239
      %3345 = vmatpush.bf16.xpose.msra.mxu0 %v3236
      %3346 = vmatpush.bf16.xpose.msra.mxu0 %v3233
      %3347 = vmatpush.bf16.xpose.msra.mxu0 %v3230
      %3348 = vmatmul.bf16.gmra.mxu0 %v3194
      %v3349 = vpop.f32.mrf.mxu0
      %v3350 = vadd.f32 %v3321, %v3349
      %v3351 = vpop.f32.mrf.mxu0
      %v3352 = vadd.f32 %v3323, %v3351
      %3353 = vmatmul.bf16.gmra.mxu0 %v3197
      %v3354 = vpop.f32.mrf.mxu0
      %v3355 = vadd.f32 %v3326, %v3354
      %v3356 = vpop.f32.mrf.mxu0
      %v3357 = vadd.f32 %v3328, %v3356
      %3358 = vmatmul.bf16.gmra.mxu0 %v3200
      %v3359 = vpop.f32.mrf.mxu0
      %v3360 = vadd.f32 %v3331, %v3359
      %v3361 = vpop.f32.mrf.mxu0
      %v3362 = vadd.f32 %v3333, %v3361
      %3363 = vmatmul.bf16.gmra.mxu0 %v3203
      %v3364 = vpop.f32.mrf.mxu0
      %v3365 = vadd.f32 %v3336, %v3364
      %v3366 = vpop.f32.mrf.mxu0
      %v3367 = vadd.f32 %v3338, %v3366
      %3368 = vdwg.mxu0
      %v3369 = vadd.f32 %v2844, %v3292
      %v3370 = vadd.f32 %v2845, %v3350
      %v3371 = vadd.f32 %v2846, %v3294
      %v3372 = vadd.f32 %v2847, %v3352
      %v3373 = vadd.f32 %v2848, %v3297
      %v3374 = vadd.f32 %v2849, %v3355
      %v3375 = vadd.f32 %v2850, %v3299
      %v3376 = vadd.f32 %v2851, %v3357
      %v3377 = vadd.f32 %v2852, %v3302
      %v3378 = vadd.f32 %v2853, %v3360
      %v3379 = vadd.f32 %v2854, %v3304
      %v3380 = vadd.f32 %v2855, %v3362
      %v3381 = vadd.f32 %v2856, %v3307
      %v3382 = vadd.f32 %v2857, %v3365
      %v3383 = vadd.f32 %v2858, %v3309
      %v3384 = vadd.f32 %v2859, %v3367
      %s3385 = scalar_lea.vmem [#allocation3], 48
      %v3386 = vld [vmem:[%s3385] sm:$0xff]
      %v3387 = vld [vmem:[%s3385 + $0x8] sm:$0xff]
      %v3388 = vld [vmem:[%s3385 + $0x18] sm:$0xff]
      %v3389 = vld [vmem:[%s3385 + $0x20] sm:$0xff]
      %v3390 = vld [vmem:[%s3385 + $0x30] sm:$0xff]
      %v3391 = vld [vmem:[%s3385 + $0x38] sm:$0xff]
      %v3392 = vld [vmem:[%s3385 + $0x48] sm:$0xff]
      %v3393 = vld [vmem:[%s3385 + $0x50] sm:$0xff]
      %v3394 = vld [vmem:[%s3385 + $0x60] sm:$0xff]
      %v3395 = vld [vmem:[%s3385 + $0x68] sm:$0xff]
      %v3396 = vld [vmem:[%s3385 + $0x78] sm:$0xff]
      %v3397 = vld [vmem:[%s3385 + $0x80] sm:$0xff]
      %v3398 = vld [vmem:[%s3385 + $0x90] sm:$0xff]
      %v3399 = vld [vmem:[%s3385 + $0x98] sm:$0xff]
      %v3400 = vld [vmem:[%s3385 + $0xa8] sm:$0xff]
      %v3401 = vld [vmem:[%s3385 + $0xb0] sm:$0xff]
      %v3402 = vld [vmem:[%s3385 + $0xc0] sm:$0xff]
      %v3403 = vld [vmem:[%s3385 + $0xc8] sm:$0xff]
      %v3404 = vld [vmem:[%s3385 + $0xd8] sm:$0xff]
      %v3405 = vld [vmem:[%s3385 + $0xe0] sm:$0xff]
      %v3406 = vld [vmem:[%s3385 + $0xf0] sm:$0xff]
      %v3407 = vld [vmem:[%s3385 + $0xf8] sm:$0xff]
      %v3408 = vld [vmem:[%s3385 + $0x108] sm:$0xff]
      %v3409 = vld [vmem:[%s3385 + $0x110] sm:$0xff]
      %v3410 = vld [vmem:[%s3385 + $0x120] sm:$0xff]
      %v3411 = vld [vmem:[%s3385 + $0x128] sm:$0xff]
      %v3412 = vld [vmem:[%s3385 + $0x138] sm:$0xff]
      %v3413 = vld [vmem:[%s3385 + $0x140] sm:$0xff]
      %v3414 = vld [vmem:[%s3385 + $0x150] sm:$0xff]
      %v3415 = vld [vmem:[%s3385 + $0x158] sm:$0xff]
      %v3416 = vld [vmem:[%s3385 + $0x168] sm:$0xff]
      %v3417 = vld [vmem:[%s3385 + $0x170] sm:$0xff]
      %v3418 = vld [vmem:[%s3385 + $0x1] sm:$0xff]
      %v3419 = vld [vmem:[%s3385 + $0x9] sm:$0xff]
      %v3420 = vld [vmem:[%s3385 + $0x19] sm:$0xff]
      %v3421 = vld [vmem:[%s3385 + $0x21] sm:$0xff]
      %v3422 = vld [vmem:[%s3385 + $0x31] sm:$0xff]
      %v3423 = vld [vmem:[%s3385 + $0x39] sm:$0xff]
      %v3424 = vld [vmem:[%s3385 + $0x49] sm:$0xff]
      %v3425 = vld [vmem:[%s3385 + $0x51] sm:$0xff]
      %v3426 = vld [vmem:[%s3385 + $0x61] sm:$0xff]
      %v3427 = vld [vmem:[%s3385 + $0x69] sm:$0xff]
      %v3428 = vld [vmem:[%s3385 + $0x79] sm:$0xff]
      %v3429 = vld [vmem:[%s3385 + $0x81] sm:$0xff]
      %v3430 = vld [vmem:[%s3385 + $0x91] sm:$0xff]
      %v3431 = vld [vmem:[%s3385 + $0x99] sm:$0xff]
      %v3432 = vld [vmem:[%s3385 + $0xa9] sm:$0xff]
      %v3433 = vld [vmem:[%s3385 + $0xb1] sm:$0xff]
      %v3434 = vld [vmem:[%s3385 + $0xc1] sm:$0xff]
      %v3435 = vld [vmem:[%s3385 + $0xc9] sm:$0xff]
      %v3436 = vld [vmem:[%s3385 + $0xd9] sm:$0xff]
      %v3437 = vld [vmem:[%s3385 + $0xe1] sm:$0xff]
      %v3438 = vld [vmem:[%s3385 + $0xf1] sm:$0xff]
      %v3439 = vld [vmem:[%s3385 + $0xf9] sm:$0xff]
      %v3440 = vld [vmem:[%s3385 + $0x109] sm:$0xff]
      %v3441 = vld [vmem:[%s3385 + $0x111] sm:$0xff]
      %v3442 = vld [vmem:[%s3385 + $0x121] sm:$0xff]
      %v3443 = vld [vmem:[%s3385 + $0x129] sm:$0xff]
      %v3444 = vld [vmem:[%s3385 + $0x139] sm:$0xff]
      %v3445 = vld [vmem:[%s3385 + $0x141] sm:$0xff]
      %v3446 = vld [vmem:[%s3385 + $0x151] sm:$0xff]
      %v3447 = vld [vmem:[%s3385 + $0x159] sm:$0xff]
      %v3448 = vld [vmem:[%s3385 + $0x169] sm:$0xff]
      %v3449 = vld [vmem:[%s3385 + $0x171] sm:$0xff]
      %v3450 = vld [vmem:[%s3385 + $0x2] sm:$0xff]
      %v3451 = vld [vmem:[%s3385 + $0xa] sm:$0xff]
      %v3452 = vld [vmem:[%s3385 + $0x1a] sm:$0xff]
      %v3453 = vld [vmem:[%s3385 + $0x22] sm:$0xff]
      %v3454 = vld [vmem:[%s3385 + $0x32] sm:$0xff]
      %v3455 = vld [vmem:[%s3385 + $0x3a] sm:$0xff]
      %v3456 = vld [vmem:[%s3385 + $0x4a] sm:$0xff]
      %v3457 = vld [vmem:[%s3385 + $0x52] sm:$0xff]
      %v3458 = vld [vmem:[%s3385 + $0x62] sm:$0xff]
      %v3459 = vld [vmem:[%s3385 + $0x6a] sm:$0xff]
      %v3460 = vld [vmem:[%s3385 + $0x7a] sm:$0xff]
      %v3461 = vld [vmem:[%s3385 + $0x82] sm:$0xff]
      %v3462 = vld [vmem:[%s3385 + $0x92] sm:$0xff]
      %v3463 = vld [vmem:[%s3385 + $0x9a] sm:$0xff]
      %v3464 = vld [vmem:[%s3385 + $0xaa] sm:$0xff]
      %v3465 = vld [vmem:[%s3385 + $0xb2] sm:$0xff]
      %v3466 = vld [vmem:[%s3385 + $0xc2] sm:$0xff]
      %v3467 = vld [vmem:[%s3385 + $0xca] sm:$0xff]
      %v3468 = vld [vmem:[%s3385 + $0xda] sm:$0xff]
      %v3469 = vld [vmem:[%s3385 + $0xe2] sm:$0xff]
      %v3470 = vld [vmem:[%s3385 + $0xf2] sm:$0xff]
      %v3471 = vld [vmem:[%s3385 + $0xfa] sm:$0xff]
      %v3472 = vld [vmem:[%s3385 + $0x10a] sm:$0xff]
      %v3473 = vld [vmem:[%s3385 + $0x112] sm:$0xff]
      %v3474 = vld [vmem:[%s3385 + $0x122] sm:$0xff]
      %v3475 = vld [vmem:[%s3385 + $0x12a] sm:$0xff]
      %v3476 = vld [vmem:[%s3385 + $0x13a] sm:$0xff]
      %v3477 = vld [vmem:[%s3385 + $0x142] sm:$0xff]
      %v3478 = vld [vmem:[%s3385 + $0x152] sm:$0xff]
      %v3479 = vld [vmem:[%s3385 + $0x15a] sm:$0xff]
      %v3480 = vld [vmem:[%s3385 + $0x16a] sm:$0xff]
      %v3481 = vld [vmem:[%s3385 + $0x172] sm:$0xff]
      %3514 = vrot.lane.b32.xlu0 %v3418, 64
      %v3515 = vpop.permute.xlu0 %3514
      %3516 = vrot.lane.b32.xlu0 %v3419, 64
      %v3517 = vpop.permute.xlu0 %3516
      %3518 = vrot.lane.b32.xlu0 %v3420, 64
      %v3519 = vpop.permute.xlu0 %3518
      %3520 = vrot.lane.b32.xlu0 %v3421, 64
      %v3521 = vpop.permute.xlu0 %3520
      %3522 = vrot.lane.b32.xlu0 %v3422, 64
      %v3523 = vpop.permute.xlu0 %3522
      %3524 = vrot.lane.b32.xlu0 %v3423, 64
      %v3525 = vpop.permute.xlu0 %3524
      %3526 = vrot.lane.b32.xlu0 %v3424, 64
      %v3527 = vpop.permute.xlu0 %3526
      %3528 = vrot.lane.b32.xlu0 %v3425, 64
      %v3529 = vpop.permute.xlu0 %3528
      %3530 = vrot.lane.b32.xlu0 %v3426, 64
      %v3531 = vpop.permute.xlu0 %3530
      %3532 = vrot.lane.b32.xlu0 %v3427, 64
      %v3533 = vpop.permute.xlu0 %3532
      %3534 = vrot.lane.b32.xlu0 %v3428, 64
      %v3535 = vpop.permute.xlu0 %3534
      %3536 = vrot.lane.b32.xlu0 %v3429, 64
      %v3537 = vpop.permute.xlu0 %3536
      %3538 = vrot.lane.b32.xlu0 %v3430, 64
      %v3539 = vpop.permute.xlu0 %3538
      %3540 = vrot.lane.b32.xlu0 %v3431, 64
      %v3541 = vpop.permute.xlu0 %3540
      %3542 = vrot.lane.b32.xlu0 %v3432, 64
      %v3543 = vpop.permute.xlu0 %3542
      %3544 = vrot.lane.b32.xlu0 %v3433, 64
      %v3545 = vpop.permute.xlu0 %3544
      %3546 = vrot.lane.b32.xlu0 %v3434, 64
      %v3547 = vpop.permute.xlu0 %3546
      %3548 = vrot.lane.b32.xlu0 %v3435, 64
      %v3549 = vpop.permute.xlu0 %3548
      %3550 = vrot.lane.b32.xlu0 %v3436, 64
      %v3551 = vpop.permute.xlu0 %3550
      %3552 = vrot.lane.b32.xlu0 %v3437, 64
      %v3553 = vpop.permute.xlu0 %3552
      %3554 = vrot.lane.b32.xlu0 %v3438, 64
      %v3555 = vpop.permute.xlu0 %3554
      %3556 = vrot.lane.b32.xlu0 %v3439, 64
      %v3557 = vpop.permute.xlu0 %3556
      %3558 = vrot.lane.b32.xlu0 %v3440, 64
      %v3559 = vpop.permute.xlu0 %3558
      %3560 = vrot.lane.b32.xlu0 %v3441, 64
      %v3561 = vpop.permute.xlu0 %3560
      %3562 = vrot.lane.b32.xlu0 %v3442, 64
      %v3563 = vpop.permute.xlu0 %3562
      %3564 = vrot.lane.b32.xlu0 %v3443, 64
      %v3565 = vpop.permute.xlu0 %3564
      %3566 = vrot.lane.b32.xlu0 %v3444, 64
      %v3567 = vpop.permute.xlu0 %3566
      %3568 = vrot.lane.b32.xlu0 %v3445, 64
      %v3569 = vpop.permute.xlu0 %3568
      %3570 = vrot.lane.b32.xlu0 %v3446, 64
      %v3571 = vpop.permute.xlu0 %3570
      %3572 = vrot.lane.b32.xlu0 %v3447, 64
      %v3573 = vpop.permute.xlu0 %3572
      %3574 = vrot.lane.b32.xlu0 %v3448, 64
      %v3575 = vpop.permute.xlu0 %3574
      %3576 = vrot.lane.b32.xlu0 %v3449, 64
      %v3577 = vpop.permute.xlu0 %3576
      %v3610 = vsel %vm1618, %v3386, %v3515
      %v3611 = vsel %vm1618, %v3387, %v3517
      %v3612 = vsel %vm1618, %v3388, %v3519
      %v3613 = vsel %vm1618, %v3389, %v3521
      %v3614 = vsel %vm1618, %v3390, %v3523
      %v3615 = vsel %vm1618, %v3391, %v3525
      %v3616 = vsel %vm1618, %v3392, %v3527
      %v3617 = vsel %vm1618, %v3393, %v3529
      %v3618 = vsel %vm1618, %v3394, %v3531
      %v3619 = vsel %vm1618, %v3395, %v3533
      %v3620 = vsel %vm1618, %v3396, %v3535
      %v3621 = vsel %vm1618, %v3397, %v3537
      %v3622 = vsel %vm1618, %v3398, %v3539
      %v3623 = vsel %vm1618, %v3399, %v3541
      %v3624 = vsel %vm1618, %v3400, %v3543
      %v3625 = vsel %vm1618, %v3401, %v3545
      %v3626 = vsel %vm1618, %v3402, %v3547
      %v3627 = vsel %vm1618, %v3403, %v3549
      %v3628 = vsel %vm1618, %v3404, %v3551
      %v3629 = vsel %vm1618, %v3405, %v3553
      %v3630 = vsel %vm1618, %v3406, %v3555
      %v3631 = vsel %vm1618, %v3407, %v3557
      %v3632 = vsel %vm1618, %v3408, %v3559
      %v3633 = vsel %vm1618, %v3409, %v3561
      %v3634 = vsel %vm1618, %v3410, %v3563
      %v3635 = vsel %vm1618, %v3411, %v3565
      %v3636 = vsel %vm1618, %v3412, %v3567
      %v3637 = vsel %vm1618, %v3413, %v3569
      %v3638 = vsel %vm1618, %v3414, %v3571
      %v3639 = vsel %vm1618, %v3415, %v3573
      %v3640 = vsel %vm1618, %v3416, %v3575
      %v3641 = vsel %vm1618, %v3417, %v3577
      %v3642 = vpack.c.bf16 %v3611, %v3610
      %v3643 = vpack.c.bf16 %v3451, %v3450
      %v3644 = vpack.c.bf16 %v3613, %v3612
      %v3645 = vpack.c.bf16 %v3453, %v3452
      %v3646 = vpack.c.bf16 %v3615, %v3614
      %v3647 = vpack.c.bf16 %v3455, %v3454
      %v3648 = vpack.c.bf16 %v3617, %v3616
      %v3649 = vpack.c.bf16 %v3457, %v3456
      %v3650 = vpack.c.bf16 %v3619, %v3618
      %v3651 = vpack.c.bf16 %v3459, %v3458
      %v3652 = vpack.c.bf16 %v3621, %v3620
      %v3653 = vpack.c.bf16 %v3461, %v3460
      %v3654 = vpack.c.bf16 %v3623, %v3622
      %v3655 = vpack.c.bf16 %v3463, %v3462
      %v3656 = vpack.c.bf16 %v3625, %v3624
      %v3657 = vpack.c.bf16 %v3465, %v3464
      %v3658 = vpack.c.bf16 %v3627, %v3626
      %v3659 = vpack.c.bf16 %v3467, %v3466
      %v3660 = vpack.c.bf16 %v3629, %v3628
      %v3661 = vpack.c.bf16 %v3469, %v3468
      %v3662 = vpack.c.bf16 %v3631, %v3630
      %v3663 = vpack.c.bf16 %v3471, %v3470
      %v3664 = vpack.c.bf16 %v3633, %v3632
      %v3665 = vpack.c.bf16 %v3473, %v3472
      %v3666 = vpack.c.bf16 %v3635, %v3634
      %v3667 = vpack.c.bf16 %v3475, %v3474
      %v3668 = vpack.c.bf16 %v3637, %v3636
      %v3669 = vpack.c.bf16 %v3477, %v3476
      %v3670 = vpack.c.bf16 %v3639, %v3638
      %v3671 = vpack.c.bf16 %v3479, %v3478
      %v3672 = vpack.c.bf16 %v3641, %v3640
      %v3673 = vpack.c.bf16 %v3481, %v3480
      %s3674 = scalar_lea.vmem %s3, 128
      %v3675 = vld [vmem:[%s3674] sm:$0xff]
      %v3676 = vld [vmem:[%s3674 + $0x8] sm:$0xff]
      %v3677 = vld [vmem:[%s3674 + $0x10] sm:$0xff]
      %v3678 = vld [vmem:[%s3674 + $0x18] sm:$0xff]
      %v3679 = vld [vmem:[%s3674 + $0x20] sm:$0xff]
      %v3680 = vld [vmem:[%s3674 + $0x28] sm:$0xff]
      %v3681 = vld [vmem:[%s3674 + $0x30] sm:$0xff]
      %v3682 = vld [vmem:[%s3674 + $0x38] sm:$0xff]
      %v3691 = vunpack.c.l.b16 %v3675
      %v3692 = vunpack.c.h.b16 %v3675
      %v3693 = vunpack.c.l.b16 %v3676
      %v3694 = vunpack.c.h.b16 %v3676
      %v3695 = vunpack.c.l.b16 %v3677
      %v3696 = vunpack.c.h.b16 %v3677
      %v3697 = vunpack.c.l.b16 %v3678
      %v3698 = vunpack.c.h.b16 %v3678
      %v3699 = vunpack.c.l.b16 %v3679
      %v3700 = vunpack.c.h.b16 %v3679
      %v3701 = vunpack.c.l.b16 %v3680
      %v3702 = vunpack.c.h.b16 %v3680
      %v3703 = vunpack.c.l.b16 %v3681
      %v3704 = vunpack.c.h.b16 %v3681
      %v3705 = vunpack.c.l.b16 %v3682
      %v3706 = vunpack.c.h.b16 %v3682
      %v3707 = vpack.c.b16 %v3693, %v3691
      %v3708 = vpack.c.b16 %v3694, %v3692
      %v3709 = vpack.c.b16 %v3697, %v3695
      %v3710 = vpack.c.b16 %v3698, %v3696
      %v3711 = vpack.c.b16 %v3701, %v3699
      %v3712 = vpack.c.b16 %v3702, %v3700
      %v3713 = vpack.c.b16 %v3705, %v3703
      %v3714 = vpack.c.b16 %v3706, %v3704
      %v3720 = vsel %vm1618, %v3708, 0
      %v3723 = vsel %vm1618, %v3710, 0
      %v3726 = vsel %vm1618, %v3712, 0
      %v3729 = vsel %vm1618, %v3714, 0
      %v3732 = vsel %vm1618, %v3643, 0
      %v3735 = vsel %vm1618, %v3645, 0
      %v3738 = vsel %vm1618, %v3647, 0
      %v3741 = vsel %vm1618, %v3649, 0
      %v3744 = vsel %vm1618, %v3651, 0
      %v3747 = vsel %vm1618, %v3653, 0
      %v3750 = vsel %vm1618, %v3655, 0
      %v3753 = vsel %vm1618, %v3657, 0
      %v3756 = vsel %vm1618, %v3659, 0
      %v3759 = vsel %vm1618, %v3661, 0
      %v3762 = vsel %vm1618, %v3663, 0
      %v3765 = vsel %vm1618, %v3665, 0
      %v3768 = vsel %vm1618, %v3667, 0
      %v3771 = vsel %vm1618, %v3669, 0
      %v3774 = vsel %vm1618, %v3671, 0
      %v3777 = vsel %vm1618, %v3673, 0
      %3779 = vmatpush.bf16.xpose.msra.mxu0 %v3656
      %3780 = vmatpush.bf16.xpose.msra.mxu0 %v3654
      %3781 = vmatpush.bf16.xpose.msra.mxu0 %v3652
      %3782 = vmatpush.bf16.xpose.msra.mxu0 %v3650
      %3783 = vmatpush.bf16.xpose.msra.mxu0 %v3648
      %3784 = vmatpush.bf16.xpose.msra.mxu0 %v3646
      %3785 = vmatpush.bf16.xpose.msra.mxu0 %v3644
      %3786 = vmatpush.bf16.xpose.msra.mxu0 %v3642
      %3787 = vmatmul.bf16.gmra.mxu0 %v3707
      %v3788 = vpop.f32.mrf.mxu0
      %v3789 = vadd.f32 0.0, %v3788
      %v3790 = vpop.f32.mrf.mxu0
      %v3791 = vadd.f32 0.0, %v3790
      %3792 = vmatmul.bf16.gmra.mxu0 %v3709
      %v3793 = vpop.f32.mrf.mxu0
      %v3794 = vadd.f32 0.0, %v3793
      %v3795 = vpop.f32.mrf.mxu0
      %v3796 = vadd.f32 0.0, %v3795
      %3797 = vmatmul.bf16.gmra.mxu0 %v3711
      %v3798 = vpop.f32.mrf.mxu0
      %v3799 = vadd.f32 0.0, %v3798
      %v3800 = vpop.f32.mrf.mxu0
      %v3801 = vadd.f32 0.0, %v3800
      %3802 = vmatmul.bf16.gmra.mxu0 %v3713
      %v3803 = vpop.f32.mrf.mxu0
      %v3804 = vadd.f32 0.0, %v3803
      %v3805 = vpop.f32.mrf.mxu0
      %v3806 = vadd.f32 0.0, %v3805
      %3807 = vdwg.mxu0
      %3808 = vmatpush.bf16.xpose.msra.mxu0 %v3753
      %3809 = vmatpush.bf16.xpose.msra.mxu0 %v3750
      %3810 = vmatpush.bf16.xpose.msra.mxu0 %v3747
      %3811 = vmatpush.bf16.xpose.msra.mxu0 %v3744
      %3812 = vmatpush.bf16.xpose.msra.mxu0 %v3741
      %3813 = vmatpush.bf16.xpose.msra.mxu0 %v3738
      %3814 = vmatpush.bf16.xpose.msra.mxu0 %v3735
      %3815 = vmatpush.bf16.xpose.msra.mxu0 %v3732
      %3816 = vmatmul.bf16.gmra.mxu0 %v3720
      %v3817 = vpop.f32.mrf.mxu0
      %v3818 = vadd.f32 %v3789, %v3817
      %v3819 = vpop.f32.mrf.mxu0
      %v3820 = vadd.f32 %v3791, %v3819
      %3821 = vmatmul.bf16.gmra.mxu0 %v3723
      %v3822 = vpop.f32.mrf.mxu0
      %v3823 = vadd.f32 %v3794, %v3822
      %v3824 = vpop.f32.mrf.mxu0
      %v3825 = vadd.f32 %v3796, %v3824
      %3826 = vmatmul.bf16.gmra.mxu0 %v3726
      %v3827 = vpop.f32.mrf.mxu0
      %v3828 = vadd.f32 %v3799, %v3827
      %v3829 = vpop.f32.mrf.mxu0
      %v3830 = vadd.f32 %v3801, %v3829
      %3831 = vmatmul.bf16.gmra.mxu0 %v3729
      %v3832 = vpop.f32.mrf.mxu0
      %v3833 = vadd.f32 %v3804, %v3832
      %v3834 = vpop.f32.mrf.mxu0
      %v3835 = vadd.f32 %v3806, %v3834
      %3836 = vdwg.mxu0
      %3837 = vmatpush.bf16.xpose.msra.mxu0 %v3672
      %3838 = vmatpush.bf16.xpose.msra.mxu0 %v3670
      %3839 = vmatpush.bf16.xpose.msra.mxu0 %v3668
      %3840 = vmatpush.bf16.xpose.msra.mxu0 %v3666
      %3841 = vmatpush.bf16.xpose.msra.mxu0 %v3664
      %3842 = vmatpush.bf16.xpose.msra.mxu0 %v3662
      %3843 = vmatpush.bf16.xpose.msra.mxu0 %v3660
      %3844 = vmatpush.bf16.xpose.msra.mxu0 %v3658
      %3845 = vmatmul.bf16.gmra.mxu0 %v3707
      %v3846 = vpop.f32.mrf.mxu0
      %v3847 = vadd.f32 0.0, %v3846
      %v3848 = vpop.f32.mrf.mxu0
      %v3849 = vadd.f32 0.0, %v3848
      %3850 = vmatmul.bf16.gmra.mxu0 %v3709
      %v3851 = vpop.f32.mrf.mxu0
      %v3852 = vadd.f32 0.0, %v3851
      %v3853 = vpop.f32.mrf.mxu0
      %v3854 = vadd.f32 0.0, %v3853
      %3855 = vmatmul.bf16.gmra.mxu0 %v3711
      %v3856 = vpop.f32.mrf.mxu0
      %v3857 = vadd.f32 0.0, %v3856
      %v3858 = vpop.f32.mrf.mxu0
      %v3859 = vadd.f32 0.0, %v3858
      %3860 = vmatmul.bf16.gmra.mxu0 %v3713
      %v3861 = vpop.f32.mrf.mxu0
      %v3862 = vadd.f32 0.0, %v3861
      %v3863 = vpop.f32.mrf.mxu0
      %v3864 = vadd.f32 0.0, %v3863
      %3865 = vdwg.mxu0
      %3866 = vmatpush.bf16.xpose.msra.mxu0 %v3777
      %3867 = vmatpush.bf16.xpose.msra.mxu0 %v3774
      %3868 = vmatpush.bf16.xpose.msra.mxu0 %v3771
      %3869 = vmatpush.bf16.xpose.msra.mxu0 %v3768
      %3870 = vmatpush.bf16.xpose.msra.mxu0 %v3765
      %3871 = vmatpush.bf16.xpose.msra.mxu0 %v3762
      %3872 = vmatpush.bf16.xpose.msra.mxu0 %v3759
      %3873 = vmatpush.bf16.xpose.msra.mxu0 %v3756
      %3874 = vmatmul.bf16.gmra.mxu0 %v3720
      %v3875 = vpop.f32.mrf.mxu0
      %v3876 = vadd.f32 %v3847, %v3875
      %v3877 = vpop.f32.mrf.mxu0
      %v3878 = vadd.f32 %v3849, %v3877
      %3879 = vmatmul.bf16.gmra.mxu0 %v3723
      %v3880 = vpop.f32.mrf.mxu0
      %v3881 = vadd.f32 %v3852, %v3880
      %v3882 = vpop.f32.mrf.mxu0
      %v3883 = vadd.f32 %v3854, %v3882
      %3884 = vmatmul.bf16.gmra.mxu0 %v3726
      %v3885 = vpop.f32.mrf.mxu0
      %v3886 = vadd.f32 %v3857, %v3885
      %v3887 = vpop.f32.mrf.mxu0
      %v3888 = vadd.f32 %v3859, %v3887
      %3889 = vmatmul.bf16.gmra.mxu0 %v3729
      %v3890 = vpop.f32.mrf.mxu0
      %v3891 = vadd.f32 %v3862, %v3890
      %v3892 = vpop.f32.mrf.mxu0
      %v3893 = vadd.f32 %v3864, %v3892
      %3894 = vdwg.mxu0
      %v3895 = vadd.f32 %v3369, %v3818
      %v3896 = vadd.f32 %v3370, %v3876
      %v3897 = vadd.f32 %v3371, %v3820
      %v3898 = vadd.f32 %v3372, %v3878
      %v3899 = vadd.f32 %v3373, %v3823
      %v3900 = vadd.f32 %v3374, %v3881
      %v3901 = vadd.f32 %v3375, %v3825
      %v3902 = vadd.f32 %v3376, %v3883
      %v3903 = vadd.f32 %v3377, %v3828
      %v3904 = vadd.f32 %v3378, %v3886
      %v3905 = vadd.f32 %v3379, %v3830
      %v3906 = vadd.f32 %v3380, %v3888
      %v3907 = vadd.f32 %v3381, %v3833
      %v3908 = vadd.f32 %v3382, %v3891
      %v3909 = vadd.f32 %v3383, %v3835
      %v3910 = vadd.f32 %v3384, %v3893
      %vm3911 = vcmp.ge.f32.partialorder %v3895, 0.0
      %vm3912 = vcmp.ge.f32.partialorder %v3896, 0.0
      %vm3913 = vcmp.ge.f32.partialorder %v3897, 0.0
      %vm3914 = vcmp.ge.f32.partialorder %v3898, 0.0
      %vm3915 = vcmp.ge.f32.partialorder %v3899, 0.0
      %vm3916 = vcmp.ge.f32.partialorder %v3900, 0.0
      %vm3917 = vcmp.ge.f32.partialorder %v3901, 0.0
      %vm3918 = vcmp.ge.f32.partialorder %v3902, 0.0
      %vm3919 = vcmp.ge.f32.partialorder %v3903, 0.0
      %vm3920 = vcmp.ge.f32.partialorder %v3904, 0.0
      %vm3921 = vcmp.ge.f32.partialorder %v3905, 0.0
      %vm3922 = vcmp.ge.f32.partialorder %v3906, 0.0
      %vm3923 = vcmp.ge.f32.partialorder %v3907, 0.0
      %vm3924 = vcmp.ge.f32.partialorder %v3908, 0.0
      %vm3925 = vcmp.ge.f32.partialorder %v3909, 0.0
      %vm3926 = vcmp.ge.f32.partialorder %v3910, 0.0
      %v3927 = vmul.f32 %v3895, 0.01
      %v3928 = vmul.f32 %v3896, 0.01
      %v3929 = vmul.f32 %v3897, 0.01
      %v3930 = vmul.f32 %v3898, 0.01
      %v3931 = vmul.f32 %v3899, 0.01
      %v3932 = vmul.f32 %v3900, 0.01
      %v3933 = vmul.f32 %v3901, 0.01
      %v3934 = vmul.f32 %v3902, 0.01
      %v3935 = vmul.f32 %v3903, 0.01
      %v3936 = vmul.f32 %v3904, 0.01
      %v3937 = vmul.f32 %v3905, 0.01
      %v3938 = vmul.f32 %v3906, 0.01
      %v3939 = vmul.f32 %v3907, 0.01
      %v3940 = vmul.f32 %v3908, 0.01
      %v3941 = vmul.f32 %v3909, 0.01
      %v3942 = vmul.f32 %v3910, 0.01
      %v3943 = vsel %vm3911, %v3895, %v3927
      %v3944 = vsel %vm3912, %v3896, %v3928
      %v3945 = vsel %vm3913, %v3897, %v3929
      %v3946 = vsel %vm3914, %v3898, %v3930
      %v3947 = vsel %vm3915, %v3899, %v3931
      %v3948 = vsel %vm3916, %v3900, %v3932
      %v3949 = vsel %vm3917, %v3901, %v3933
      %v3950 = vsel %vm3918, %v3902, %v3934
      %v3951 = vsel %vm3919, %v3903, %v3935
      %v3952 = vsel %vm3920, %v3904, %v3936
      %v3953 = vsel %vm3921, %v3905, %v3937
      %v3954 = vsel %vm3922, %v3906, %v3938
      %v3955 = vsel %vm3923, %v3907, %v3939
      %v3956 = vsel %vm3924, %v3908, %v3940
      %v3957 = vsel %vm3925, %v3909, %v3941
      %v3958 = vsel %vm3926, %v3910, %v3942
      %3959 = vst [vmem:[%s224] sm:$0xff] %v3943
      %3960 = vst [vmem:[%s224 + $0x8] sm:$0xff] %v3944
      %3961 = vst [vmem:[%s224 + $0x10] sm:$0xff] %v3945
      %3962 = vst [vmem:[%s224 + $0x18] sm:$0xff] %v3946
      %3963 = vst [vmem:[%s224 + $0x20] sm:$0xff] %v3947
      %3964 = vst [vmem:[%s224 + $0x28] sm:$0xff] %v3948
      %3965 = vst [vmem:[%s224 + $0x30] sm:$0xff] %v3949
      %3966 = vst [vmem:[%s224 + $0x38] sm:$0xff] %v3950
      %3967 = vst [vmem:[%s224 + $0x40] sm:$0xff] %v3951
      %3968 = vst [vmem:[%s224 + $0x48] sm:$0xff] %v3952
      %3969 = vst [vmem:[%s224 + $0x50] sm:$0xff] %v3953
      %3970 = vst [vmem:[%s224 + $0x58] sm:$0xff] %v3954
      %3971 = vst [vmem:[%s224 + $0x60] sm:$0xff] %v3955
      %3972 = vst [vmem:[%s224 + $0x68] sm:$0xff] %v3956
      %3973 = vst [vmem:[%s224 + $0x70] sm:$0xff] %v3957
      %3974 = vst [vmem:[%s224 + $0x78] sm:$0xff] %v3958
      %p3975 = scmp.lt.s32.totalorder %s16, 1
      %s3976 = scalar_select %p3975, %s16, 1
      %s3977 = smul.addr %s3976, 16
      %s3978 = smul.addr %s3977, 8
      %s3979 = scalar_lea.vmem %s5, %s3978
      // Predicated region
      $region41: #{localnet_forward.1} parent=39 // pred_check
        %p3980 = pneg %p144
      $region42: #{localnet_forward.1} parent=39 // pred_check_branch
        %3982 = sbr.rel (%p3980) target = $region44
      $region43: #{localnet_forward.1} parent=39 // pred_region
        _
      $region44: #{localnet_forward.1} parent=39 // pred_fallthru
        _
    $region40: #{localnet_forward.1} parent=5 // pred_fallthru
      _
    %p3983 = scmp.le.s32.totalorder 2, %s11
    // Predicated region
    $region45: #{localnet_forward.1} parent=5 // pred_check
      %p3984 = pneg %p3983
    $region46: #{localnet_forward.1} parent=5 // pred_check_branch
      %3986 = sbr.rel (%p3984) target = $region48
    $region47: #{localnet_forward.1} parent=5 // pred_region
      %s3987 = ssub.s32 %s11, 2
      // Predicated region
      $region49: #{localnet_forward.1} parent=47 // pred_check
        %p3988 = pneg %p150
      $region50: #{localnet_forward.1} parent=47 // pred_check_branch
        %3990 = sbr.rel (%p3988) target = $region52
      $region51: #{localnet_forward.1} parent=47 // pred_region
        %p3991 = scmp.lt.s32.totalorder %s17, 1
        %s3992 = scalar_select %p3991, %s17, 1
        %s3993 = smul.addr %s3992, 16
        %s3994 = smul.addr %s3993, 8
        %s3995 = scalar_lea.vmem %s5, %s3994
      $region52: #{localnet_forward.1} parent=47 // pred_fallthru
        _
    $region48: #{localnet_forward.1} parent=5 // pred_fallthru
      _
  $region6: #{localnet_forward.1} parent=0 // loop_footer
    %s15 = sadd.s32 1, %s11
  $region7: #{localnet_forward.1} parent=0 // loop_footer_branch
    %10 = sbr.rel target = $region3
  $region8: #{localnet_forward.1} parent=0 // loop_exit
    _

</llo_original>
